<compile_context>
chip_gen: v5e
topology: v5e:2x2
jax: 0.10.0
libtpu: 0.0.40
codegen_flags: <defaults>
</compile_context>

<pallas_src>
import functools

import jax
import jax.numpy as jnp
from jax.experimental import pallas as pl
from jax.experimental.pallas import tpu as pltpu

NEG_SLOPE = 0.01   # F.leaky_relu default
LANE = 128


def _lrelu(v):
    return jnp.where(v > 0, v, NEG_SLOPE * v)


def _l2_normalize(x, eps=1e-12):
    # F.normalize(p=2): x / max(||x||, eps) == x * rsqrt(max(sum(x^2), eps^2))
    ss = jnp.sum(x * x, axis=-1, keepdims=True)
    return x * jax.lax.rsqrt(jnp.maximum(ss, eps * eps))


def _round_up(v, m):
    return (v + m - 1) // m * m


def _pad2(a, rows, cols):
    return jnp.pad(a, ((0, rows - a.shape[0]), (0, cols - a.shape[1])))


# ----------------------------- fully fused kernel ------------------------------------
def make_gnn_kernel(num_layers, dc1, dc2):
    """Builds the fused kernel. dc1 / dc2 = (padded) conv output widths of layer 1 / 2+."""

    def kernel(*refs):
        (feat_ref, adj_ref, dis_ref, id_ref, mlp_w_ref, mlp_b_ref,
         cl1_w_ref, c1_b_ref, l1_b_ref, g1_w_ref, g1_b_ref) = refs[:11]
        rest = refs[11:]
        if num_layers >= 2:
            (cl2_w_ref, c2_b_ref, l2_b_ref, g2_w_ref, g2_b_ref) = rest[:5]
            rest = rest[5:]
        if num_layers >= 3:
            (g3_w_ref, g3_b_ref) = rest[:2]
            rest = rest[2:]
        out_refs = rest                       # num_layers output refs

        # adjacency mask (int8 in HBM/VMEM, cast once; constant across layers)
        adj_f = adj_ref[...].astype(jnp.float32)          # [N, N], 0/1
        mask = adj_f > 0.5
        dis = dis_ref[...]                                # [1, N] = out-degree^-0.5
        id_emb = id_ref[...]                              # [N, Did]

        def gat_layer(x, w_cl, bc, bl, dc, wg, bg):
            # combined projection: one MXU matmul for conv weight AND linear_layer
            xp = jnp.dot(x, w_cl, preferred_element_type=jnp.float32)   # [N, dc+Did]
            xw = xp[:, :dc]                                              # conv path
            xl = xp[:, dc:]                                              # linear path

            # s[i, j] = <xw_i, lrelu(xw_j)>; contract last axes, no explicit transpose
            s = jax.lax.dot_general(xw, _lrelu(xw), (((1,), (1,)), ((), ())),
                                    preferred_element_type=jnp.float32)  # [N, N]
            t2 = s * jax.nn.sigmoid(dis * s)                              # gated scores

            # segment softmax over incoming edges of each destination row
            z = jnp.where(mask, t2, jnp.float32(-1e30))
            e = jnp.exp(z - jnp.max(z, axis=1, keepdims=True)) * adj_f
            denom = jnp.maximum(jnp.sum(e, axis=1, keepdims=True), 1e-16)
            attn = e * pl.reciprocal(denom, approx=False)                 # [N, N]

            aggr = jnp.dot(attn, xw, preferred_element_type=jnp.float32) + bc
            gat = _l2_normalize(aggr)

            # layer fuse: lrelu(g(lrelu(h)) + lrelu(l(x)) + id_embedding)
            h = _lrelu(gat)
            x_hat = _lrelu(xl + bl) + id_emb
            return _lrelu(jnp.dot(h, wg, preferred_element_type=jnp.float32)
                          + bg + x_hat)

        # prologue: x = F.normalize(tanh(MLP(features)))  (computed exactly once)
        x = _l2_normalize(jnp.tanh(
            jnp.dot(feat_ref[...], mlp_w_ref[...],
                    preferred_element_type=jnp.float32) + mlp_b_ref[...]))

        x1 = gat_layer(x, cl1_w_ref[...], c1_b_ref[...], l1_b_ref[...], dc1,
                       g1_w_ref[...], g1_b_ref[...])
        out_refs[0][...] = x1
        if num_layers >= 2:
            x2 = gat_layer(x1, cl2_w_ref[...], c2_b_ref[...], l2_b_ref[...], dc2,
                           g2_w_ref[...], g2_b_ref[...])
            out_refs[1][...] = x2
        if num_layers >= 3:
            # NB: the PyTorch reference intentionally reuses conv_embed_2 /
            # linear_layer2 here (only g_layer3 is new) -- not a bug.
            x3 = gat_layer(x2, cl2_w_ref[...], c2_b_ref[...], l2_b_ref[...], dc2,
                           g3_w_ref[...], g3_b_ref[...])
            out_refs[2][...] = x3

    return kernel


# ----------------------------- wrapper ------------------------------------------------
def _full(shape):
    nd = len(shape)
    return pl.BlockSpec(shape, lambda i, _nd=nd: (0,) * _nd)


def gnn_forward(pp, features_pad, adj_i8, dis, id_pad, *, num_layers):
    n_pad = features_pad.shape[0]
    d_id = id_pad.shape[1]
    dc1 = pp["cl1_w"].shape[1] - d_id      # padded latent width (conv-1 output)
    dc2 = d_id                             # conv-2 output width

    inputs = [features_pad, adj_i8, dis, id_pad, pp["mlp_w"], pp["mlp_b"],
              pp["cl1_w"], pp["c1_b"], pp["l1_b"], pp["g1_w"], pp["g1_b"]]
    if num_layers >= 2:
        inputs += [pp["cl2_w"], pp["c2_b"], pp["l2_b"], pp["g2_w"], pp["g2_b"]]
    if num_layers >= 3:
        inputs += [pp["g3_w"], pp["g3_b"]]

    out_shape = tuple(jax.ShapeDtypeStruct((n_pad, d_id), jnp.float32)
                      for _ in range(num_layers))
    out_specs = tuple(_full((n_pad, d_id)) for _ in range(num_layers))

    return pl.pallas_call(
        make_gnn_kernel(num_layers, dc1, dc2),
        grid=(1,),                               # single step: whole graph in VMEM
        in_specs=[_full(a.shape) for a in inputs],
        out_specs=out_specs,
        out_shape=out_shape,
        compiler_params=pltpu.CompilerParams(
            dimension_semantics=("arbitrary",),
        ),
    )(*inputs)


# ----------------------------- pure-JAX reference (for validation) -------------------
_HI = jax.lax.Precision.HIGHEST


def _ref_gat(x, w, b, adj):
    xw = jnp.dot(x, w, precision=_HI)
    s = jnp.dot(xw, jnp.where(xw > 0, xw, NEG_SLOPE * xw).T, precision=_HI)
    deg = jnp.sum(adj, axis=0, keepdims=True)
    dis = jnp.where(deg > 0, 1.0 / jnp.sqrt(jnp.maximum(deg, 1e-12)), 0.0)
    t2 = s * jax.nn.sigmoid(dis * s)
    mask = adj > 0
    z = jnp.where(mask, t2, -1e30)
    e = jnp.where(mask, jnp.exp(z - jnp.max(z, axis=1, keepdims=True)), 0.0)
    attn = e / jnp.maximum(jnp.sum(e, axis=1, keepdims=True), 1e-16)
    out = jnp.dot(attn, xw, precision=_HI) + b
    return out / jnp.maximum(jnp.sqrt(jnp.sum(out * out, axis=1, keepdims=True)), 1e-12)


def _ref_forward(params, features, id_embedding, adj, num_layers):
    def lrelu(v):
        return jnp.where(v > 0, v, NEG_SLOPE * v)

    x = jnp.tanh(jnp.dot(features, params["mlp_w"], precision=_HI) + params["mlp_b"])
    x = x / jnp.maximum(jnp.sqrt(jnp.sum(x * x, axis=1, keepdims=True)), 1e-12)

    def layer(xin, cw, cb, lw, lb, gw, gb):
        h = lrelu(_ref_gat(xin, cw, cb, adj))
        x_hat = lrelu(jnp.dot(xin, lw, precision=_HI) + lb) + id_embedding
        return lrelu(jnp.dot(h, gw, precision=_HI) + gb + x_hat)

    x_1 = layer(x, params["c1_w"], params["c1_b"], params["l1_w"], params["l1_b"],
                params["g1_w"], params["g1_b"])
    if num_layers == 1:
        return x_1
    x_2 = layer(x_1, params["c2_w"], params["c2_b"], params["l2_w"], params["l2_b"],
                params["g2_w"], params["g2_b"])
    if num_layers == 2:
        return jnp.concatenate((x_1, x_2), axis=1)
    x_3 = layer(x_2, params["c2_w"], params["c2_b"], params["l2_w"], params["l2_b"],
                params["g3_w"], params["g3_b"])
    return jnp.concatenate((x_1, x_2, x_3), axis=1)


# ----------------------------- parameter init / padding / fusion ---------------------
def _xavier(key, fan_in, fan_out):
    std = (2.0 / (fan_in + fan_out)) ** 0.5
    return std * jax.random.normal(key, (fan_in, fan_out), dtype=jnp.float32)


def init_params(key, dim_feat, dim_id, dim_latent, num_layers):
    keys = iter(jax.random.split(key, 32))
    p = {}
    p["mlp_w"] = _xavier(next(keys), dim_feat, dim_latent)
    p["mlp_b"] = 0.01 * jax.random.normal(next(keys), (1, dim_latent), jnp.float32)
    p["c1_w"] = _xavier(next(keys), dim_latent, dim_latent)
    p["c1_b"] = 0.01 * jax.random.normal(next(keys), (1, dim_latent), jnp.float32)
    p["l1_w"] = _xavier(next(keys), dim_latent, dim_id)
    p["l1_b"] = 0.01 * jax.random.normal(next(keys), (1, dim_id), jnp.float32)
    p["g1_w"] = _xavier(next(keys), dim_latent, dim_id)
    p["g1_b"] = 0.01 * jax.random.normal(next(keys), (1, dim_id), jnp.float32)
    if num_layers >= 2:
        p["c2_w"] = _xavier(next(keys), dim_id, dim_id)
        p["c2_b"] = 0.01 * jax.random.normal(next(keys), (1, dim_id), jnp.float32)
        p["l2_w"] = _xavier(next(keys), dim_id, dim_id)
        p["l2_b"] = 0.01 * jax.random.normal(next(keys), (1, dim_id), jnp.float32)
        p["g2_w"] = _xavier(next(keys), dim_id, dim_id)
        p["g2_b"] = 0.01 * jax.random.normal(next(keys), (1, dim_id), jnp.float32)
    if num_layers >= 3:
        p["g3_w"] = _xavier(next(keys), dim_id, dim_id)
        p["g3_b"] = 0.01 * jax.random.normal(next(keys), (1, dim_id), jnp.float32)
    return p


def pad_and_fuse_params(p, dim_feat, dim_latent, dim_id, num_layers):
    fp = _round_up(dim_feat, LANE)
    lp = _round_up(dim_latent, LANE)
    ip = _round_up(dim_id, LANE)
    q = {
        "mlp_w": _pad2(p["mlp_w"], fp, lp), "mlp_b": _pad2(p["mlp_b"], 1, lp),
        # fused [conv_weight | linear_weight] -> one MXU matmul with shared LHS
        "cl1_w": jnp.concatenate([_pad2(p["c1_w"], lp, lp),
                                  _pad2(p["l1_w"], lp, ip)], axis=1),
        "c1_b": _pad2(p["c1_b"], 1, lp), "l1_b": _pad2(p["l1_b"], 1, ip),
        "g1_w": _pad2(p["g1_w"], lp, ip), "g1_b": _pad2(p["g1_b"], 1, ip),
    }
    if num_layers >= 2:
        q["cl2_w"] = jnp.concatenate([_pad2(p["c2_w"], ip, ip),
                                      _pad2(p["l2_w"], ip, ip)], axis=1)
        q["c2_b"] = _pad2(p["c2_b"], 1, ip)
        q["l2_b"] = _pad2(p["l2_b"], 1, ip)
        q["g2_w"] = _pad2(p["g2_w"], ip, ip)
        q["g2_b"] = _pad2(p["g2_b"], 1, ip)
    if num_layers >= 3:
        q["g3_w"] = _pad2(p["g3_w"], ip, ip)
        q["g3_b"] = _pad2(p["g3_b"], 1, ip)
    return q


# ----------------------------- main ---------------------------------------------------
if __name__ == "__main__":
    N = 64          # number of graph nodes
    DIM_FEAT = 32
    DIM_LATENT = 16
    DIM_ID = 16
    NUM_LAYERS = 2

    N_PAD = _round_up(N, LANE)       # lane-dense adjacency / score rows

    root = jax.random.PRNGKey(0)
    k_feat, k_id, k_adj, k_par = jax.random.split(root, 4)

    features = jax.random.normal(k_feat, (N, DIM_FEAT), dtype=jnp.float32)
    id_embedding = jax.random.normal(k_id, (N, DIM_ID), dtype=jnp.float32)

    # random sparse directed graph as dense adjacency adj[dst, src], no self-loops
    # TODO(synk): dense adjacency cannot represent duplicate edges of an edge_index list.
    adj = (jax.random.uniform(k_adj, (N, N)) < 0.15).astype(jnp.float32)
    adj = adj * (1.0 - jnp.eye(N, dtype=jnp.float32))

    params = init_params(k_par, DIM_FEAT, DIM_ID, DIM_LATENT, NUM_LAYERS)

    # --- pad everything to lane-dense shapes (padded nodes have no edges) -----------
    F_PAD = _round_up(DIM_FEAT, LANE)
    ID_PAD = _round_up(DIM_ID, LANE)
    features_pad = _pad2(features, N_PAD, F_PAD)
    id_pad = _pad2(id_embedding, N_PAD, ID_PAD)
    adj_pad = _pad2(adj, N_PAD, N_PAD)
    adj_i8 = adj_pad.astype(jnp.int8)                      # mask only -> ship as int8

    # hoist constant out-degree^-1/2 out of the kernel (adj is layer-invariant)
    deg = jnp.sum(adj_pad, axis=0, keepdims=True)          # [1, N_PAD]
    dis = jnp.where(deg > 0, jax.lax.rsqrt(jnp.maximum(deg, 1e-12)), 0.0)

    pparams = pad_and_fuse_params(params, DIM_FEAT, DIM_LATENT, DIM_ID, NUM_LAYERS)

    fwd = jax.jit(functools.partial(gnn_forward, num_layers=NUM_LAYERS))
    outs = jax.block_until_ready(fwd(pparams, features_pad, adj_i8, dis, id_pad))
    out = jnp.concatenate([o[:N, :DIM_ID] for o in outs], axis=1)

    ref = jax.block_until_ready(
        _ref_forward(params, features, id_embedding, adj, NUM_LAYERS)
    )

    assert out.shape == (N, DIM_ID * NUM_LAYERS), out.shape
    assert bool(jnp.all(jnp.isfinite(out)))
    assert bool(jnp.allclose(out, ref, rtol=2e-3, atol=2e-3)), (
        float(jnp.max(jnp.abs(out - ref)))
    )
    print("KERNEL_OK")
</pallas_src>

<mosaic_0001>
module attributes {stable_mosaic.version = 11 : i64} {
  func.func @kernel(%arg0: i32, %arg1: memref<128x128xf32, #tpu.memory_space<vmem>>, %arg2: memref<128x128xi8, #tpu.memory_space<vmem>>, %arg3: memref<1x128xf32, #tpu.memory_space<vmem>>, %arg4: memref<128x128xf32, #tpu.memory_space<vmem>>, %arg5: memref<128x128xf32, #tpu.memory_space<vmem>>, %arg6: memref<1x128xf32, #tpu.memory_space<vmem>>, %arg7: memref<128x256xf32, #tpu.memory_space<vmem>>, %arg8: memref<1x128xf32, #tpu.memory_space<vmem>>, %arg9: memref<1x128xf32, #tpu.memory_space<vmem>>, %arg10: memref<128x128xf32, #tpu.memory_space<vmem>>, %arg11: memref<1x128xf32, #tpu.memory_space<vmem>>, %arg12: memref<128x256xf32, #tpu.memory_space<vmem>>, %arg13: memref<1x128xf32, #tpu.memory_space<vmem>>, %arg14: memref<1x128xf32, #tpu.memory_space<vmem>>, %arg15: memref<128x128xf32, #tpu.memory_space<vmem>>, %arg16: memref<1x128xf32, #tpu.memory_space<vmem>>, %arg17: memref<128x128xf32, #tpu.memory_space<vmem>>, %arg18: memref<128x128xf32, #tpu.memory_space<vmem>>) attributes {dimension_semantics = [#tpu.dimension_semantics<arbitrary>], iteration_bounds = array<i64: 1>, scalar_prefetch = 0 : i64, scratch_operands = 0 : i64, tpu.core_type = #tpu.core_type<tc>, window_params = [{pipeline_mode = #tpu.pipeline_mode<synchronous>, transform_indices = @transform_0, window_bounds = array<i64: 128, 128>}, {pipeline_mode = #tpu.pipeline_mode<synchronous>, transform_indices = @transform_1, window_bounds = array<i64: 128, 128>}, {pipeline_mode = #tpu.pipeline_mode<synchronous>, transform_indices = @transform_2, window_bounds = array<i64: 1, 128>}, {pipeline_mode = #tpu.pipeline_mode<synchronous>, transform_indices = @transform_3, window_bounds = array<i64: 128, 128>}, {pipeline_mode = #tpu.pipeline_mode<synchronous>, transform_indices = @transform_4, window_bounds = array<i64: 128, 128>}, {pipeline_mode = #tpu.pipeline_mode<synchronous>, transform_indices = @transform_5, window_bounds = array<i64: 1, 128>}, {pipeline_mode = #tpu.pipeline_mode<synchronous>, transform_indices = @transform_6, window_bounds = array<i64: 128, 256>}, {pipeline_mode = #tpu.pipeline_mode<synchronous>, transform_indices = @transform_7, window_bounds = array<i64: 1, 128>}, {pipeline_mode = #tpu.pipeline_mode<synchronous>, transform_indices = @transform_8, window_bounds = array<i64: 1, 128>}, {pipeline_mode = #tpu.pipeline_mode<synchronous>, transform_indices = @transform_9, window_bounds = array<i64: 128, 128>}, {pipeline_mode = #tpu.pipeline_mode<synchronous>, transform_indices = @transform_10, window_bounds = array<i64: 1, 128>}, {pipeline_mode = #tpu.pipeline_mode<synchronous>, transform_indices = @transform_11, window_bounds = array<i64: 128, 256>}, {pipeline_mode = #tpu.pipeline_mode<synchronous>, transform_indices = @transform_12, window_bounds = array<i64: 1, 128>}, {pipeline_mode = #tpu.pipeline_mode<synchronous>, transform_indices = @transform_13, window_bounds = array<i64: 1, 128>}, {pipeline_mode = #tpu.pipeline_mode<synchronous>, transform_indices = @transform_14, window_bounds = array<i64: 128, 128>}, {pipeline_mode = #tpu.pipeline_mode<synchronous>, transform_indices = @transform_15, window_bounds = array<i64: 1, 128>}, {pipeline_mode = #tpu.pipeline_mode<synchronous>, transform_indices = @transform_16, window_bounds = array<i64: 128, 128>}, {pipeline_mode = #tpu.pipeline_mode<synchronous>, transform_indices = @transform_17, window_bounds = array<i64: 128, 128>}]} {
    %c0 = arith.constant 0 : index
    %c0_0 = arith.constant 0 : index
    %0 = vector.load %arg2[%c0, %c0_0] : memref<128x128xi8, #tpu.memory_space<vmem>>, vector<128x128xi8>
    %1 = arith.sitofp %0 : vector<128x128xi8> to vector<128x128xf32>
    %cst = arith.constant 5.000000e-01 : f32
    %2 = vector.broadcast %cst : f32 to vector<128x128xf32>
    %3 = arith.cmpf ogt, %1, %2 : vector<128x128xf32>
    %c0_1 = arith.constant 0 : index
    %c0_2 = arith.constant 0 : index
    %4 = vector.load %arg3[%c0_1, %c0_2] : memref<1x128xf32, #tpu.memory_space<vmem>>, vector<1x128xf32>
    %c0_3 = arith.constant 0 : index
    %c0_4 = arith.constant 0 : index
    %5 = vector.load %arg4[%c0_3, %c0_4] : memref<128x128xf32, #tpu.memory_space<vmem>>, vector<128x128xf32>
    %c0_5 = arith.constant 0 : index
    %c0_6 = arith.constant 0 : index
    %6 = vector.load %arg1[%c0_5, %c0_6] : memref<128x128xf32, #tpu.memory_space<vmem>>, vector<128x128xf32>
    %c0_7 = arith.constant 0 : index
    %c0_8 = arith.constant 0 : index
    %7 = vector.load %arg5[%c0_7, %c0_8] : memref<128x128xf32, #tpu.memory_space<vmem>>, vector<128x128xf32>
    %cst_9 = arith.constant dense<0.000000e+00> : vector<128x128xf32>
    %8 = tpu.matmul %6, %7, %cst_9 {dimension_numbers = #tpu.dot_dimension_numbers<[1], [0], [0], [1], [0, 0, 1, 1], [], []>} : vector<128x128xf32>, vector<128x128xf32>, vector<128x128xf32> -> vector<128x128xf32>
    %c0_10 = arith.constant 0 : index
    %c0_11 = arith.constant 0 : index
    %9 = vector.load %arg6[%c0_10, %c0_11] : memref<1x128xf32, #tpu.memory_space<vmem>>, vector<1x128xf32>
    %10 = vector.broadcast %9 : vector<1x128xf32> to vector<128x128xf32>
    %11 = arith.addf %8, %10 : vector<128x128xf32>
    %12 = math.tanh %11 : vector<128x128xf32>
    %13 = arith.mulf %12, %12 : vector<128x128xf32>
    %cst_12 = arith.constant dense<0.000000e+00> : vector<128xf32>
    %14 = vector.multi_reduction <add>, %13, %cst_12 [1] : vector<128x128xf32> to vector<128xf32>
    %15 = vector.shape_cast %14 : vector<128xf32> to vector<128x1xf32>
    %cst_13 = arith.constant 1.000000e-24 : f32
    %16 = vector.broadcast %cst_13 : f32 to vector<128x1xf32>
    %17 = arith.maximumf %15, %16 : vector<128x1xf32>
    %18 = math.rsqrt %17 : vector<128x1xf32>
    %19 = vector.broadcast %18 : vector<128x1xf32> to vector<128x128xf32>
    %20 = arith.mulf %12, %19 : vector<128x128xf32>
    %c0_14 = arith.constant 0 : index
    %c0_15 = arith.constant 0 : index
    %21 = vector.load %arg7[%c0_14, %c0_15] : memref<128x256xf32, #tpu.memory_space<vmem>>, vector<128x256xf32>
    %c0_16 = arith.constant 0 : index
    %c0_17 = arith.constant 0 : index
    %22 = vector.load %arg8[%c0_16, %c0_17] : memref<1x128xf32, #tpu.memory_space<vmem>>, vector<1x128xf32>
    %c0_18 = arith.constant 0 : index
    %c0_19 = arith.constant 0 : index
    %23 = vector.load %arg9[%c0_18, %c0_19] : memref<1x128xf32, #tpu.memory_space<vmem>>, vector<1x128xf32>
    %c0_20 = arith.constant 0 : index
    %c0_21 = arith.constant 0 : index
    %24 = vector.load %arg10[%c0_20, %c0_21] : memref<128x128xf32, #tpu.memory_space<vmem>>, vector<128x128xf32>
    %c0_22 = arith.constant 0 : index
    %c0_23 = arith.constant 0 : index
    %25 = vector.load %arg11[%c0_22, %c0_23] : memref<1x128xf32, #tpu.memory_space<vmem>>, vector<1x128xf32>
    %cst_24 = arith.constant dense<0.000000e+00> : vector<128x256xf32>
    %26 = tpu.matmul %20, %21, %cst_24 {dimension_numbers = #tpu.dot_dimension_numbers<[1], [0], [0], [1], [0, 0, 1, 1], [], []>} : vector<128x128xf32>, vector<128x256xf32>, vector<128x256xf32> -> vector<128x256xf32>
    %27 = vector.extract_strided_slice %26 {offsets = [0, 0], sizes = [128, 128], strides = [1, 1]} : vector<128x256xf32> to vector<128x128xf32>
    %28 = vector.extract_strided_slice %26 {offsets = [0, 128], sizes = [128, 128], strides = [1, 1]} : vector<128x256xf32> to vector<128x128xf32>
    %cst_25 = arith.constant 0.000000e+00 : f32
    %29 = vector.broadcast %cst_25 : f32 to vector<128x128xf32>
    %30 = arith.cmpf ogt, %27, %29 : vector<128x128xf32>
    %cst_26 = arith.constant 0.00999999977 : f32
    %31 = vector.broadcast %cst_26 : f32 to vector<128x128xf32>
    %32 = arith.mulf %31, %27 : vector<128x128xf32>
    %33 = arith.select %30, %27, %32 : vector<128x128xi1>, vector<128x128xf32>
    %cst_27 = arith.constant dense<0.000000e+00> : vector<128x128xf32>
    %34 = tpu.matmul %27, %33, %cst_27 {dimension_numbers = #tpu.dot_dimension_numbers<[1], [1], [0], [0], [0, 0, 1, 0], [], []>} : vector<128x128xf32>, vector<128x128xf32>, vector<128x128xf32> -> vector<128x128xf32>
    %35 = vector.broadcast %4 : vector<1x128xf32> to vector<128x128xf32>
    %36 = arith.mulf %35, %34 : vector<128x128xf32>
    %37 = arith.negf %36 : vector<128x128xf32>
    %38 = math.exp %37 : vector<128x128xf32>
    %cst_28 = arith.constant 1.000000e+00 : f32
    %39 = vector.broadcast %cst_28 : f32 to vector<128x128xf32>
    %40 = arith.addf %39, %38 : vector<128x128xf32>
    %41 = arith.divf %39, %40 : vector<128x128xf32>
    %42 = arith.mulf %34, %41 : vector<128x128xf32>
    %cst_29 = arith.constant -1.000000e+30 : f32
    %43 = vector.broadcast %cst_29 : f32 to vector<128x128xf32>
    %44 = arith.select %3, %42, %43 : vector<128x128xi1>, vector<128x128xf32>
    %cst_30 = arith.constant dense<0xFF800000> : vector<128xf32>
    %45 = vector.multi_reduction <maximumf>, %44, %cst_30 [1] : vector<128x128xf32> to vector<128xf32>
    %46 = vector.shape_cast %45 : vector<128xf32> to vector<128x1xf32>
    %47 = vector.broadcast %46 : vector<128x1xf32> to vector<128x128xf32>
    %48 = arith.subf %44, %47 : vector<128x128xf32>
    %49 = math.exp %48 : vector<128x128xf32>
    %50 = arith.mulf %49, %1 : vector<128x128xf32>
    %cst_31 = arith.constant dense<0.000000e+00> : vector<128xf32>
    %51 = vector.multi_reduction <add>, %50, %cst_31 [1] : vector<128x128xf32> to vector<128xf32>
    %52 = vector.shape_cast %51 : vector<128xf32> to vector<128x1xf32>
    %cst_32 = arith.constant 1.000000e-16 : f32
    %53 = vector.broadcast %cst_32 : f32 to vector<128x1xf32>
    %54 = arith.maximumf %52, %53 : vector<128x1xf32>
    %55 = tpu.reciprocal %54 : vector<128x1xf32> -> vector<128x1xf32>
    %56 = vector.broadcast %55 : vector<128x1xf32> to vector<128x128xf32>
    %57 = arith.mulf %50, %56 : vector<128x128xf32>
    %cst_33 = arith.constant dense<0.000000e+00> : vector<128x128xf32>
    %58 = tpu.matmul %57, %27, %cst_33 {dimension_numbers = #tpu.dot_dimension_numbers<[1], [0], [0], [1], [0, 0, 1, 1], [], []>} : vector<128x128xf32>, vector<128x128xf32>, vector<128x128xf32> -> vector<128x128xf32>
    %59 = vector.broadcast %22 : vector<1x128xf32> to vector<128x128xf32>
    %60 = arith.addf %58, %59 : vector<128x128xf32>
    %61 = arith.mulf %60, %60 : vector<128x128xf32>
    %cst_34 = arith.constant dense<0.000000e+00> : vector<128xf32>
    %62 = vector.multi_reduction <add>, %61, %cst_34 [1] : vector<128x128xf32> to vector<128xf32>
    %63 = vector.shape_cast %62 : vector<128xf32> to vector<128x1xf32>
    %cst_35 = arith.constant 1.000000e-24 : f32
    %64 = vector.broadcast %cst_35 : f32 to vector<128x1xf32>
    %65 = arith.maximumf %63, %64 : vector<128x1xf32>
    %66 = math.rsqrt %65 : vector<128x1xf32>
    %67 = vector.broadcast %66 : vector<128x1xf32> to vector<128x128xf32>
    %68 = arith.mulf %60, %67 : vector<128x128xf32>
    %cst_36 = arith.constant 0.000000e+00 : f32
    %69 = vector.broadcast %cst_36 : f32 to vector<128x128xf32>
    %70 = arith.cmpf ogt, %68, %69 : vector<128x128xf32>
    %cst_37 = arith.constant 0.00999999977 : f32
    %71 = vector.broadcast %cst_37 : f32 to vector<128x128xf32>
    %72 = arith.mulf %71, %68 : vector<128x128xf32>
    %73 = arith.select %70, %68, %72 : vector<128x128xi1>, vector<128x128xf32>
    %74 = vector.broadcast %23 : vector<1x128xf32> to vector<128x128xf32>
    %75 = arith.addf %28, %74 : vector<128x128xf32>
    %cst_38 = arith.constant 0.000000e+00 : f32
    %76 = vector.broadcast %cst_38 : f32 to vector<128x128xf32>
    %77 = arith.cmpf ogt, %75, %76 : vector<128x128xf32>
    %cst_39 = arith.constant 0.00999999977 : f32
    %78 = vector.broadcast %cst_39 : f32 to vector<128x128xf32>
    %79 = arith.mulf %78, %75 : vector<128x128xf32>
    %80 = arith.select %77, %75, %79 : vector<128x128xi1>, vector<128x128xf32>
    %81 = arith.addf %80, %5 : vector<128x128xf32>
    %cst_40 = arith.constant dense<0.000000e+00> : vector<128x128xf32>
    %82 = tpu.matmul %73, %24, %cst_40 {dimension_numbers = #tpu.dot_dimension_numbers<[1], [0], [0], [1], [0, 0, 1, 1], [], []>} : vector<128x128xf32>, vector<128x128xf32>, vector<128x128xf32> -> vector<128x128xf32>
    %83 = vector.broadcast %25 : vector<1x128xf32> to vector<128x128xf32>
    %84 = arith.addf %82, %83 : vector<128x128xf32>
    %85 = arith.addf %84, %81 : vector<128x128xf32>
    %cst_41 = arith.constant 0.000000e+00 : f32
    %86 = vector.broadcast %cst_41 : f32 to vector<128x128xf32>
    %87 = arith.cmpf ogt, %85, %86 : vector<128x128xf32>
    %cst_42 = arith.constant 0.00999999977 : f32
    %88 = vector.broadcast %cst_42 : f32 to vector<128x128xf32>
    %89 = arith.mulf %88, %85 : vector<128x128xf32>
    %90 = arith.select %87, %85, %89 : vector<128x128xi1>, vector<128x128xf32>
    %c0_43 = arith.constant 0 : index
    %c0_44 = arith.constant 0 : index
    %91 = vector.load %arg17[%c0_43, %c0_44] : memref<128x128xf32, #tpu.memory_space<vmem>>, vector<128x128xf32>
    tpu.vector_store %arg17[%c0_43, %c0_44], %90 {strides = array<i32>} : memref<128x128xf32, #tpu.memory_space<vmem>>, vector<128x128xf32>,
    %c0_45 = arith.constant 0 : index
    %c0_46 = arith.constant 0 : index
    %92 = vector.load %arg12[%c0_45, %c0_46] : memref<128x256xf32, #tpu.memory_space<vmem>>, vector<128x256xf32>
    %c0_47 = arith.constant 0 : index
    %c0_48 = arith.constant 0 : index
    %93 = vector.load %arg13[%c0_47, %c0_48] : memref<1x128xf32, #tpu.memory_space<vmem>>, vector<1x128xf32>
    %c0_49 = arith.constant 0 : index
    %c0_50 = arith.constant 0 : index
    %94 = vector.load %arg14[%c0_49, %c0_50] : memref<1x128xf32, #tpu.memory_space<vmem>>, vector<1x128xf32>
    %c0_51 = arith.constant 0 : index
    %c0_52 = arith.constant 0 : index
    %95 = vector.load %arg15[%c0_51, %c0_52] : memref<128x128xf32, #tpu.memory_space<vmem>>, vector<128x128xf32>
    %c0_53 = arith.constant 0 : index
    %c0_54 = arith.constant 0 : index
    %96 = vector.load %arg16[%c0_53, %c0_54] : memref<1x128xf32, #tpu.memory_space<vmem>>, vector<1x128xf32>
    %cst_55 = arith.constant dense<0.000000e+00> : vector<128x256xf32>
    %97 = tpu.matmul %90, %92, %cst_55 {dimension_numbers = #tpu.dot_dimension_numbers<[1], [0], [0], [1], [0, 0, 1, 1], [], []>} : vector<128x128xf32>, vector<128x256xf32>, vector<128x256xf32> -> vector<128x256xf32>
    %98 = vector.extract_strided_slice %97 {offsets = [0, 0], sizes = [128, 128], strides = [1, 1]} : vector<128x256xf32> to vector<128x128xf32>
    %99 = vector.extract_strided_slice %97 {offsets = [0, 128], sizes = [128, 128], strides = [1, 1]} : vector<128x256xf32> to vector<128x128xf32>
    %cst_56 = arith.constant 0.000000e+00 : f32
    %100 = vector.broadcast %cst_56 : f32 to vector<128x128xf32>
    %101 = arith.cmpf ogt, %98, %100 : vector<128x128xf32>
    %cst_57 = arith.constant 0.00999999977 : f32
    %102 = vector.broadcast %cst_57 : f32 to vector<128x128xf32>
    %103 = arith.mulf %102, %98 : vector<128x128xf32>
    %104 = arith.select %101, %98, %103 : vector<128x128xi1>, vector<128x128xf32>
    %cst_58 = arith.constant dense<0.000000e+00> : vector<128x128xf32>
    %105 = tpu.matmul %98, %104, %cst_58 {dimension_numbers = #tpu.dot_dimension_numbers<[1], [1], [0], [0], [0, 0, 1, 0], [], []>} : vector<128x128xf32>, vector<128x128xf32>, vector<128x128xf32> -> vector<128x128xf32>
    %106 = vector.broadcast %4 : vector<1x128xf32> to vector<128x128xf32>
    %107 = arith.mulf %106, %105 : vector<128x128xf32>
    %108 = arith.negf %107 : vector<128x128xf32>
    %109 = math.exp %108 : vector<128x128xf32>
    %cst_59 = arith.constant 1.000000e+00 : f32
    %110 = vector.broadcast %cst_59 : f32 to vector<128x128xf32>
    %111 = arith.addf %110, %109 : vector<128x128xf32>
    %112 = arith.divf %110, %111 : vector<128x128xf32>
    %113 = arith.mulf %105, %112 : vector<128x128xf32>
    %cst_60 = arith.constant -1.000000e+30 : f32
    %114 = vector.broadcast %cst_60 : f32 to vector<128x128xf32>
    %115 = arith.select %3, %113, %114 : vector<128x128xi1>, vector<128x128xf32>
    %cst_61 = arith.constant dense<0xFF800000> : vector<128xf32>
    %116 = vector.multi_reduction <maximumf>, %115, %cst_61 [1] : vector<128x128xf32> to vector<128xf32>
    %117 = vector.shape_cast %116 : vector<128xf32> to vector<128x1xf32>
    %118 = vector.broadcast %117 : vector<128x1xf32> to vector<128x128xf32>
    %119 = arith.subf %115, %118 : vector<128x128xf32>
    %120 = math.exp %119 : vector<128x128xf32>
    %121 = arith.mulf %120, %1 : vector<128x128xf32>
    %cst_62 = arith.constant dense<0.000000e+00> : vector<128xf32>
    %122 = vector.multi_reduction <add>, %121, %cst_62 [1] : vector<128x128xf32> to vector<128xf32>
    %123 = vector.shape_cast %122 : vector<128xf32> to vector<128x1xf32>
    %cst_63 = arith.constant 1.000000e-16 : f32
    %124 = vector.broadcast %cst_63 : f32 to vector<128x1xf32>
    %125 = arith.maximumf %123, %124 : vector<128x1xf32>
    %126 = tpu.reciprocal %125 : vector<128x1xf32> -> vector<128x1xf32>
    %127 = vector.broadcast %126 : vector<128x1xf32> to vector<128x128xf32>
    %128 = arith.mulf %121, %127 : vector<128x128xf32>
    %cst_64 = arith.constant dense<0.000000e+00> : vector<128x128xf32>
    %129 = tpu.matmul %128, %98, %cst_64 {dimension_numbers = #tpu.dot_dimension_numbers<[1], [0], [0], [1], [0, 0, 1, 1], [], []>} : vector<128x128xf32>, vector<128x128xf32>, vector<128x128xf32> -> vector<128x128xf32>
    %130 = vector.broadcast %93 : vector<1x128xf32> to vector<128x128xf32>
    %131 = arith.addf %129, %130 : vector<128x128xf32>
    %132 = arith.mulf %131, %131 : vector<128x128xf32>
    %cst_65 = arith.constant dense<0.000000e+00> : vector<128xf32>
    %133 = vector.multi_reduction <add>, %132, %cst_65 [1] : vector<128x128xf32> to vector<128xf32>
    %134 = vector.shape_cast %133 : vector<128xf32> to vector<128x1xf32>
    %cst_66 = arith.constant 1.000000e-24 : f32
    %135 = vector.broadcast %cst_66 : f32 to vector<128x1xf32>
    %136 = arith.maximumf %134, %135 : vector<128x1xf32>
    %137 = math.rsqrt %136 : vector<128x1xf32>
    %138 = vector.broadcast %137 : vector<128x1xf32> to vector<128x128xf32>
    %139 = arith.mulf %131, %138 : vector<128x128xf32>
    %cst_67 = arith.constant 0.000000e+00 : f32
    %140 = vector.broadcast %cst_67 : f32 to vector<128x128xf32>
    %141 = arith.cmpf ogt, %139, %140 : vector<128x128xf32>
    %cst_68 = arith.constant 0.00999999977 : f32
    %142 = vector.broadcast %cst_68 : f32 to vector<128x128xf32>
    %143 = arith.mulf %142, %139 : vector<128x128xf32>
    %144 = arith.select %141, %139, %143 : vector<128x128xi1>, vector<128x128xf32>
    %145 = vector.broadcast %94 : vector<1x128xf32> to vector<128x128xf32>
    %146 = arith.addf %99, %145 : vector<128x128xf32>
    %cst_69 = arith.constant 0.000000e+00 : f32
    %147 = vector.broadcast %cst_69 : f32 to vector<128x128xf32>
    %148 = arith.cmpf ogt, %146, %147 : vector<128x128xf32>
    %cst_70 = arith.constant 0.00999999977 : f32
    %149 = vector.broadcast %cst_70 : f32 to vector<128x128xf32>
    %150 = arith.mulf %149, %146 : vector<128x128xf32>
    %151 = arith.select %148, %146, %150 : vector<128x128xi1>, vector<128x128xf32>
    %152 = arith.addf %151, %5 : vector<128x128xf32>
    %cst_71 = arith.constant dense<0.000000e+00> : vector<128x128xf32>
    %153 = tpu.matmul %144, %95, %cst_71 {dimension_numbers = #tpu.dot_dimension_numbers<[1], [0], [0], [1], [0, 0, 1, 1], [], []>} : vector<128x128xf32>, vector<128x128xf32>, vector<128x128xf32> -> vector<128x128xf32>
    %154 = vector.broadcast %96 : vector<1x128xf32> to vector<128x128xf32>
    %155 = arith.addf %153, %154 : vector<128x128xf32>
    %156 = arith.addf %155, %152 : vector<128x128xf32>
    %cst_72 = arith.constant 0.000000e+00 : f32
    %157 = vector.broadcast %cst_72 : f32 to vector<128x128xf32>
    %158 = arith.cmpf ogt, %156, %157 : vector<128x128xf32>
    %cst_73 = arith.constant 0.00999999977 : f32
    %159 = vector.broadcast %cst_73 : f32 to vector<128x128xf32>
    %160 = arith.mulf %159, %156 : vector<128x128xf32>
    %161 = arith.select %158, %156, %160 : vector<128x128xi1>, vector<128x128xf32>
    %c0_74 = arith.constant 0 : index
    %c0_75 = arith.constant 0 : index
    %162 = vector.load %arg18[%c0_74, %c0_75] : memref<128x128xf32, #tpu.memory_space<vmem>>, vector<128x128xf32>
    tpu.vector_store %arg18[%c0_74, %c0_75], %161 {strides = array<i32>} : memref<128x128xf32, #tpu.memory_space<vmem>>, vector<128x128xf32>,
    return
  }
  func.func @transform_0(%arg0: i32) -> (i32, i32) {
    %c0_i32 = arith.constant 0 : i32
    %c0_i32_0 = arith.constant 0 : i32
    %c0_i32_1 = arith.constant 0 : i32
    return %c0_i32, %c0_i32_0 : i32, i32
  }
  func.func @transform_1(%arg0: i32) -> (i32, i32) {
    %c0_i32 = arith.constant 0 : i32
    %c0_i32_0 = arith.constant 0 : i32
    %c0_i32_1 = arith.constant 0 : i32
    return %c0_i32, %c0_i32_0 : i32, i32
  }
  func.func @transform_2(%arg0: i32) -> (i32, i32) {
    %c0_i32 = arith.constant 0 : i32
    %c0_i32_0 = arith.constant 0 : i32
    %c0_i32_1 = arith.constant 0 : i32
    return %c0_i32, %c0_i32_0 : i32, i32
  }
  func.func @transform_3(%arg0: i32) -> (i32, i32) {
    %c0_i32 = arith.constant 0 : i32
    %c0_i32_0 = arith.constant 0 : i32
    %c0_i32_1 = arith.constant 0 : i32
    return %c0_i32, %c0_i32_0 : i32, i32
  }
  func.func @transform_4(%arg0: i32) -> (i32, i32) {
    %c0_i32 = arith.constant 0 : i32
    %c0_i32_0 = arith.constant 0 : i32
    %c0_i32_1 = arith.constant 0 : i32
    return %c0_i32, %c0_i32_0 : i32, i32
  }
  func.func @transform_5(%arg0: i32) -> (i32, i32) {
    %c0_i32 = arith.constant 0 : i32
    %c0_i32_0 = arith.constant 0 : i32
    %c0_i32_1 = arith.constant 0 : i32
    return %c0_i32, %c0_i32_0 : i32, i32
  }
  func.func @transform_6(%arg0: i32) -> (i32, i32) {
    %c0_i32 = arith.constant 0 : i32
    %c0_i32_0 = arith.constant 0 : i32
    %c0_i32_1 = arith.constant 0 : i32
    return %c0_i32, %c0_i32_0 : i32, i32
  }
  func.func @transform_7(%arg0: i32) -> (i32, i32) {
    %c0_i32 = arith.constant 0 : i32
    %c0_i32_0 = arith.constant 0 : i32
    %c0_i32_1 = arith.constant 0 : i32
    return %c0_i32, %c0_i32_0 : i32, i32
  }
  func.func @transform_8(%arg0: i32) -> (i32, i32) {
    %c0_i32 = arith.constant 0 : i32
    %c0_i32_0 = arith.constant 0 : i32
    %c0_i32_1 = arith.constant 0 : i32
    return %c0_i32, %c0_i32_0 : i32, i32
  }
  func.func @transform_9(%arg0: i32) -> (i32, i32) {
    %c0_i32 = arith.constant 0 : i32
    %c0_i32_0 = arith.constant 0 : i32
    %c0_i32_1 = arith.constant 0 : i32
    return %c0_i32, %c0_i32_0 : i32, i32
  }
  func.func @transform_10(%arg0: i32) -> (i32, i32) {
    %c0_i32 = arith.constant 0 : i32
    %c0_i32_0 = arith.constant 0 : i32
    %c0_i32_1 = arith.constant 0 : i32
    return %c0_i32, %c0_i32_0 : i32, i32
  }
  func.func @transform_11(%arg0: i32) -> (i32, i32) {
    %c0_i32 = arith.constant 0 : i32
    %c0_i32_0 = arith.constant 0 : i32
    %c0_i32_1 = arith.constant 0 : i32
    return %c0_i32, %c0_i32_0 : i32, i32
  }
  func.func @transform_12(%arg0: i32) -> (i32, i32) {
    %c0_i32 = arith.constant 0 : i32
    %c0_i32_0 = arith.constant 0 : i32
    %c0_i32_1 = arith.constant 0 : i32
    return %c0_i32, %c0_i32_0 : i32, i32
  }
  func.func @transform_13(%arg0: i32) -> (i32, i32) {
    %c0_i32 = arith.constant 0 : i32
    %c0_i32_0 = arith.constant 0 : i32
    %c0_i32_1 = arith.constant 0 : i32
    return %c0_i32, %c0_i32_0 : i32, i32
  }
  func.func @transform_14(%arg0: i32) -> (i32, i32) {
    %c0_i32 = arith.constant 0 : i32
    %c0_i32_0 = arith.constant 0 : i32
    %c0_i32_1 = arith.constant 0 : i32
    return %c0_i32, %c0_i32_0 : i32, i32
  }
  func.func @transform_15(%arg0: i32) -> (i32, i32) {
    %c0_i32 = arith.constant 0 : i32
    %c0_i32_0 = arith.constant 0 : i32
    %c0_i32_1 = arith.constant 0 : i32
    return %c0_i32, %c0_i32_0 : i32, i32
  }
  func.func @transform_16(%arg0: i32) -> (i32, i32) {
    %c0_i32 = arith.constant 0 : i32
    %c0_i32_0 = arith.constant 0 : i32
    %c0_i32_1 = arith.constant 0 : i32
    return %c0_i32, %c0_i32_0 : i32, i32
  }
  func.func @transform_17(%arg0: i32) -> (i32, i32) {
    %c0_i32 = arith.constant 0 : i32
    %c0_i32_0 = arith.constant 0 : i32
    %c0_i32_1 = arith.constant 0 : i32
    return %c0_i32, %c0_i32_0 : i32, i32
  }
}

</mosaic_0001>

<llo_original>
// kernel: gnn_forward.1
$region0: #{gnn_forward.1}
  #allocation0 [shape = 'u32[]', space=smem, size = 0x4, offset = 0x4, fixed_abs, tag = 'smem constant byte address 0x4 - core index']
  #allocation1 [shape = 'u32[72,128]{1,0:T(1,128)}', space=vmem, size = 0x9000, scoped, tag = 'internal scratch']
  %s0 = inlined_call_operand.hbm [shape: f32[128,128], index: 0, kind: input, shape index: {}]
  %s1 = inlined_call_operand.hbm [shape: s8[128,128], index: 1, kind: input, shape index: {}]
  %s2 = inlined_call_operand.vmem [shape: f32[1,128], index: 2, kind: input, shape index: {}]
  %s3 = inlined_call_operand.hbm [shape: f32[128,128], index: 3, kind: input, shape index: {}]
  %s4 = inlined_call_operand.hbm [shape: f32[128,128], index: 4, kind: input, shape index: {}]
  %s5 = inlined_call_operand.vmem [shape: f32[1,128], index: 5, kind: input, shape index: {}]
  %s6 = inlined_call_operand.hbm [shape: f32[128,256], index: 6, kind: input, shape index: {}]
  %s7 = inlined_call_operand.hbm [shape: f32[1,128], index: 7, kind: input, shape index: {}]
  %s8 = inlined_call_operand.vmem [shape: f32[1,128], index: 8, kind: input, shape index: {}]
  %s9 = inlined_call_operand.hbm [shape: f32[128,128], index: 9, kind: input, shape index: {}]
  %s10 = inlined_call_operand.hbm [shape: f32[1,128], index: 10, kind: input, shape index: {}]
  %s11 = inlined_call_operand.hbm [shape: f32[128,256], index: 11, kind: input, shape index: {}]
  %s12 = inlined_call_operand.hbm [shape: f32[1,128], index: 12, kind: input, shape index: {}]
  %s13 = inlined_call_operand.vmem [shape: f32[1,128], index: 13, kind: input, shape index: {}]
  %s14 = inlined_call_operand.hbm [shape: f32[128,128], index: 14, kind: input, shape index: {}]
  %s15 = inlined_call_operand.vmem [shape: f32[1,128], index: 15, kind: input, shape index: {}]
  %s16 = inlined_call_operand.hbm [shape: f32[128,128], index: 16, kind: output, shape index: {0}]
  %s17 = inlined_call_operand.hbm [shape: f32[128,128], index: 17, kind: output, shape index: {1}]
  %18 = xla_tuple %s16, %s17
  %s19 = sld [smem:[#allocation0]]
  $region126: #{gnn_forward.1} parent=0
    _
  %s21 = ssub.s32 1, %s19
  %s22 = scalar_select 0, %s21, %s19
  $region1: #{gnn_forward.1} parent=0
    #allocation2 [shape = 'u8[65536]{0}', space=vmem, size = 0x10000, scoped, tag = 'input window, operand 0, single buffered']
    #allocation3 [shape = 's32[1]{0}', space=sflag, size = 0x4, scoped, tag = 'scoped memory for gnn_forward.1']
    #allocation4 [shape = 's32[1]{0}', space=sflag, size = 0x4, scoped, tag = 'scoped memory for gnn_forward.1']
    #allocation5 [shape = 'u8[16384]{0}', space=vmem, size = 0x4000, scoped, tag = 'input window, operand 1, single buffered']
    #allocation6 [shape = 's32[1]{0}', space=sflag, size = 0x4, scoped, tag = 'scoped memory for gnn_forward.1']
    #allocation7 [shape = 'u8[65536]{0}', space=vmem, size = 0x10000, scoped, tag = 'input window, operand 3, single buffered']
    #allocation8 [shape = 'u8[65536]{0}', space=vmem, size = 0x10000, scoped, tag = 'input window, operand 4, single buffered']
    #allocation9 [shape = 's32[1]{0}', space=sflag, size = 0x4, scoped, tag = 'scoped memory for gnn_forward.1']
    #allocation10 [shape = 'u8[131072]{0}', space=vmem, size = 0x20000, scoped, tag = 'input window, operand 6, single buffered']
    #allocation11 [shape = 'u8[512]{0}', space=vmem, size = 0x400, scoped, tag = 'input window, operand 7, single buffered']
    #allocation12 [shape = 's32[1]{0}', space=sflag, size = 0x4, scoped, tag = 'scoped memory for gnn_forward.1']
    #allocation13 [shape = 'u8[65536]{0}', space=vmem, size = 0x10000, scoped, tag = 'input window, operand 9, single buffered']
    #allocation14 [shape = 'u8[512]{0}', space=vmem, size = 0x400, scoped, tag = 'input window, operand 10, single buffered']
    #allocation15 [shape = 's32[1]{0}', space=sflag, size = 0x4, scoped, tag = 'scoped memory for gnn_forward.1']
    #allocation16 [shape = 'u8[131072]{0}', space=vmem, size = 0x20000, scoped, tag = 'input window, operand 11, single buffered']
    #allocation17 [shape = 'u8[512]{0}', space=vmem, size = 0x400, scoped, tag = 'input window, operand 12, single buffered']
    #allocation18 [shape = 's32[1]{0}', space=sflag, size = 0x4, scoped, tag = 'scoped memory for gnn_forward.1']
    #allocation19 [shape = 'u8[65536]{0}', space=vmem, size = 0x10000, scoped, tag = 'input window, operand 14, single buffered']
    #allocation20 [shape = 'u8[65536]{0}', space=vmem, size = 0x10000, scoped, tag = 'output window, operand 0, single buffered']
    #allocation21 [shape = 'u8[65536]{0}', space=vmem, size = 0x10000, scoped, tag = 'output window, operand 1, single buffered']
    #allocation22 [shape = 's32[1]{0}', space=sflag, size = 0x4, scoped, tag = 'scoped memory for gnn_forward.1']
    %23 = vsyncpa [#allocation3], 0
    %24 = vsyncpa [#allocation6], 0
    %25 = vsyncpa [#allocation9], 0
    %26 = vsyncpa [#allocation12], 0
    %27 = vsyncpa [#allocation15], 0
    %28 = vsyncpa [#allocation18], 0
    %29 = vsyncpa [#allocation4], 0
    %30 = vsyncpa [#allocation22], 0
    // Predicated region
    $region2: #{gnn_forward.1} parent=1 // pred_check
      _
    $region3: #{gnn_forward.1} parent=1 // pred_check_branch
      %32 = sbr.rel (0) target = $region5
    $region4: #{gnn_forward.1} parent=1 // pred_region
      %34 = vsyncadd [#allocation3], 0
      %s35 = sshll.u32 %s0, 4
      %s36 = int_to_ptr.hbm [resolvable:$true] %s35
      %s37 = sshll.u32 [#allocation2], 4
      %s38 = int_to_ptr.vmem [resolvable:$true] %s37
      %43 = dma.hbm_to_vmem [thread:$0]  %s36, 2048, %s38, [#allocation3], 128, 128, 8
    $region5: #{gnn_forward.1} parent=1 // pred_fallthru
      _
    // Predicated region
    $region6: #{gnn_forward.1} parent=1 // pred_check
      _
    $region7: #{gnn_forward.1} parent=1 // pred_check_branch
      %45 = sbr.rel (0) target = $region9
    $region8: #{gnn_forward.1} parent=1 // pred_region
      %47 = vsyncadd [#allocation6], 0
      %s48 = sshll.u32 %s1, 4
      %s49 = int_to_ptr.hbm [resolvable:$true] %s48
      %s50 = sshll.u32 [#allocation5], 4
      %s51 = int_to_ptr.vmem [resolvable:$true] %s50
      %56 = dma.hbm_to_vmem [thread:$0]  %s49, 512, %s51, [#allocation6], 128, 128, 8
    $region9: #{gnn_forward.1} parent=1 // pred_fallthru
      _
    // Predicated region
    $region10: #{gnn_forward.1} parent=1 // pred_check
      _
    $region11: #{gnn_forward.1} parent=1 // pred_check_branch
      %58 = sbr.rel (0) target = $region13
    $region12: #{gnn_forward.1} parent=1 // pred_region
      _
    $region13: #{gnn_forward.1} parent=1 // pred_fallthru
      _
    // Predicated region
    $region14: #{gnn_forward.1} parent=1 // pred_check
      _
    $region15: #{gnn_forward.1} parent=1 // pred_check_branch
      %60 = sbr.rel (0) target = $region17
    $region16: #{gnn_forward.1} parent=1 // pred_region
      %62 = vsyncadd [#allocation6], 0
      %s63 = sshll.u32 %s3, 4
      %s64 = int_to_ptr.hbm [resolvable:$true] %s63
      %s65 = sshll.u32 [#allocation7], 4
      %s66 = int_to_ptr.vmem [resolvable:$true] %s65
      %71 = dma.hbm_to_vmem [thread:$0]  %s64, 2048, %s66, [#allocation6], 128, 128, 8
    $region17: #{gnn_forward.1} parent=1 // pred_fallthru
      _
    // Predicated region
    $region18: #{gnn_forward.1} parent=1 // pred_check
      _
    $region19: #{gnn_forward.1} parent=1 // pred_check_branch
      %73 = sbr.rel (0) target = $region21
    $region20: #{gnn_forward.1} parent=1 // pred_region
      %75 = vsyncadd [#allocation9], 0
      %s76 = sshll.u32 %s4, 4
      %s77 = int_to_ptr.hbm [resolvable:$true] %s76
      %s78 = sshll.u32 [#allocation8], 4
      %s79 = int_to_ptr.vmem [resolvable:$true] %s78
      %84 = dma.hbm_to_vmem [thread:$0]  %s77, 2048, %s79, [#allocation9], 128, 128, 8
    $region21: #{gnn_forward.1} parent=1 // pred_fallthru
      _
    // Predicated region
    $region22: #{gnn_forward.1} parent=1 // pred_check
      _
    $region23: #{gnn_forward.1} parent=1 // pred_check_branch
      %86 = sbr.rel (0) target = $region25
    $region24: #{gnn_forward.1} parent=1 // pred_region
      _
    $region25: #{gnn_forward.1} parent=1 // pred_fallthru
      _
    // Predicated region
    $region26: #{gnn_forward.1} parent=1 // pred_check
      _
    $region27: #{gnn_forward.1} parent=1 // pred_check_branch
      %88 = sbr.rel (0) target = $region29
    $region28: #{gnn_forward.1} parent=1 // pred_region
      %90 = vsyncadd [#allocation9], 0
      %s91 = sshll.u32 %s6, 4
      %s92 = int_to_ptr.hbm [resolvable:$true] %s91
      %s93 = sshll.u32 [#allocation10], 4
      %s94 = int_to_ptr.vmem [resolvable:$true] %s93
      %99 = dma.hbm_to_vmem [thread:$0]  %s92, 4096, %s94, [#allocation9], 256, 256, 16
    $region29: #{gnn_forward.1} parent=1 // pred_fallthru
      _
    // Predicated region
    $region30: #{gnn_forward.1} parent=1 // pred_check
      _
    $region31: #{gnn_forward.1} parent=1 // pred_check_branch
      %101 = sbr.rel (0) target = $region33
    $region32: #{gnn_forward.1} parent=1 // pred_region
      %103 = vsyncadd [#allocation12], 0
      %s105 = sshll.u32 %s7, 4
      %s106 = int_to_ptr.hbm [resolvable:$true] %s105
      %s107 = sshll.u32 [#allocation11], 4
      %s108 = int_to_ptr.vmem [resolvable:$true] %s107
      %110 = dma.hbm_to_vmem [thread:$0]  %s106, 16, %s108, [#allocation12]
    $region33: #{gnn_forward.1} parent=1 // pred_fallthru
      _
    // Predicated region
    $region34: #{gnn_forward.1} parent=1 // pred_check
      _
    $region35: #{gnn_forward.1} parent=1 // pred_check_branch
      %112 = sbr.rel (0) target = $region37
    $region36: #{gnn_forward.1} parent=1 // pred_region
      _
    $region37: #{gnn_forward.1} parent=1 // pred_fallthru
      _
    // Predicated region
    $region38: #{gnn_forward.1} parent=1 // pred_check
      _
    $region39: #{gnn_forward.1} parent=1 // pred_check_branch
      %114 = sbr.rel (0) target = $region41
    $region40: #{gnn_forward.1} parent=1 // pred_region
      %116 = vsyncadd [#allocation12], 0
      %s117 = sshll.u32 %s9, 4
      %s118 = int_to_ptr.hbm [resolvable:$true] %s117
      %s119 = sshll.u32 [#allocation13], 4
      %s120 = int_to_ptr.vmem [resolvable:$true] %s119
      %125 = dma.hbm_to_vmem [thread:$0]  %s118, 2048, %s120, [#allocation12], 128, 128, 8
    $region41: #{gnn_forward.1} parent=1 // pred_fallthru
      _
    // Predicated region
    $region42: #{gnn_forward.1} parent=1 // pred_check
      _
    $region43: #{gnn_forward.1} parent=1 // pred_check_branch
      %127 = sbr.rel (0) target = $region45
    $region44: #{gnn_forward.1} parent=1 // pred_region
      %129 = vsyncadd [#allocation15], 0
      %s131 = sshll.u32 %s10, 4
      %s132 = int_to_ptr.hbm [resolvable:$true] %s131
      %s133 = sshll.u32 [#allocation14], 4
      %s134 = int_to_ptr.vmem [resolvable:$true] %s133
      %136 = dma.hbm_to_vmem [thread:$0]  %s132, 16, %s134, [#allocation15]
    $region45: #{gnn_forward.1} parent=1 // pred_fallthru
      _
    // Predicated region
    $region46: #{gnn_forward.1} parent=1 // pred_check
      _
    $region47: #{gnn_forward.1} parent=1 // pred_check_branch
      %138 = sbr.rel (0) target = $region49
    $region48: #{gnn_forward.1} parent=1 // pred_region
      %140 = vsyncadd [#allocation15], 0
      %s141 = sshll.u32 %s11, 4
      %s142 = int_to_ptr.hbm [resolvable:$true] %s141
      %s143 = sshll.u32 [#allocation16], 4
      %s144 = int_to_ptr.vmem [resolvable:$true] %s143
      %149 = dma.hbm_to_vmem [thread:$0]  %s142, 4096, %s144, [#allocation15], 256, 256, 16
    $region49: #{gnn_forward.1} parent=1 // pred_fallthru
      _
    // Predicated region
    $region50: #{gnn_forward.1} parent=1 // pred_check
      _
    $region51: #{gnn_forward.1} parent=1 // pred_check_branch
      %151 = sbr.rel (0) target = $region53
    $region52: #{gnn_forward.1} parent=1 // pred_region
      %153 = vsyncadd [#allocation18], 0
      %s155 = sshll.u32 %s12, 4
      %s156 = int_to_ptr.hbm [resolvable:$true] %s155
      %s157 = sshll.u32 [#allocation17], 4
      %s158 = int_to_ptr.vmem [resolvable:$true] %s157
      %160 = dma.hbm_to_vmem [thread:$0]  %s156, 16, %s158, [#allocation18]
    $region53: #{gnn_forward.1} parent=1 // pred_fallthru
      _
    // Predicated region
    $region54: #{gnn_forward.1} parent=1 // pred_check
      _
    $region55: #{gnn_forward.1} parent=1 // pred_check_branch
      %162 = sbr.rel (0) target = $region57
    $region56: #{gnn_forward.1} parent=1 // pred_region
      _
    $region57: #{gnn_forward.1} parent=1 // pred_fallthru
      _
    // Predicated region
    $region58: #{gnn_forward.1} parent=1 // pred_check
      _
    $region59: #{gnn_forward.1} parent=1 // pred_check_branch
      %164 = sbr.rel (0) target = $region61
    $region60: #{gnn_forward.1} parent=1 // pred_region
      %166 = vsyncadd [#allocation18], 0
      %s167 = sshll.u32 %s14, 4
      %s168 = int_to_ptr.hbm [resolvable:$true] %s167
      %s169 = sshll.u32 [#allocation19], 4
      %s170 = int_to_ptr.vmem [resolvable:$true] %s169
      %175 = dma.hbm_to_vmem [thread:$0]  %s168, 2048, %s170, [#allocation18], 128, 128, 8
    $region61: #{gnn_forward.1} parent=1 // pred_fallthru
      _
    // Predicated region
    $region62: #{gnn_forward.1} parent=1 // pred_check
      _
    $region63: #{gnn_forward.1} parent=1 // pred_check_branch
      %177 = sbr.rel (0) target = $region65
    $region64: #{gnn_forward.1} parent=1 // pred_region
      _
    $region65: #{gnn_forward.1} parent=1 // pred_fallthru
      _
    // Predicated region
    $region66: #{gnn_forward.1} parent=1 // pred_check
      _
    $region67: #{gnn_forward.1} parent=1 // pred_check_branch
      %179 = sbr.rel (0) target = $region69
    $region68: #{gnn_forward.1} parent=1 // pred_region
      %181 = dma.done [#allocation3], 2048
    $region69: #{gnn_forward.1} parent=1 // pred_fallthru
      _
    // Predicated region
    $region70: #{gnn_forward.1} parent=1 // pred_check
      _
    $region71: #{gnn_forward.1} parent=1 // pred_check_branch
      %183 = sbr.rel (0) target = $region73
    $region72: #{gnn_forward.1} parent=1 // pred_region
      %185 = dma.done [#allocation6], 512
    $region73: #{gnn_forward.1} parent=1 // pred_fallthru
      _
    // Predicated region
    $region74: #{gnn_forward.1} parent=1 // pred_check
      _
    $region75: #{gnn_forward.1} parent=1 // pred_check_branch
      %187 = sbr.rel (0) target = $region77
    $region76: #{gnn_forward.1} parent=1 // pred_region
      %189 = dma.done [#allocation6], 2048
    $region77: #{gnn_forward.1} parent=1 // pred_fallthru
      _
    // Predicated region
    $region78: #{gnn_forward.1} parent=1 // pred_check
      _
    $region79: #{gnn_forward.1} parent=1 // pred_check_branch
      %191 = sbr.rel (0) target = $region81
    $region80: #{gnn_forward.1} parent=1 // pred_region
      %193 = dma.done [#allocation9], 2048
    $region81: #{gnn_forward.1} parent=1 // pred_fallthru
      _
    // Predicated region
    $region82: #{gnn_forward.1} parent=1 // pred_check
      _
    $region83: #{gnn_forward.1} parent=1 // pred_check_branch
      %195 = sbr.rel (0) target = $region85
    $region84: #{gnn_forward.1} parent=1 // pred_region
      %197 = dma.done [#allocation9], 4096
    $region85: #{gnn_forward.1} parent=1 // pred_fallthru
      _
    // Predicated region
    $region86: #{gnn_forward.1} parent=1 // pred_check
      _
    $region87: #{gnn_forward.1} parent=1 // pred_check_branch
      %199 = sbr.rel (0) target = $region89
    $region88: #{gnn_forward.1} parent=1 // pred_region
      %201 = dma.done [#allocation12], 16
    $region89: #{gnn_forward.1} parent=1 // pred_fallthru
      _
    // Predicated region
    $region90: #{gnn_forward.1} parent=1 // pred_check
      _
    $region91: #{gnn_forward.1} parent=1 // pred_check_branch
      %203 = sbr.rel (0) target = $region93
    $region92: #{gnn_forward.1} parent=1 // pred_region
      %205 = dma.done [#allocation12], 2048
    $region93: #{gnn_forward.1} parent=1 // pred_fallthru
      _
    // Predicated region
    $region94: #{gnn_forward.1} parent=1 // pred_check
      _
    $region95: #{gnn_forward.1} parent=1 // pred_check_branch
      %207 = sbr.rel (0) target = $region97
    $region96: #{gnn_forward.1} parent=1 // pred_region
      %209 = dma.done [#allocation15], 16
    $region97: #{gnn_forward.1} parent=1 // pred_fallthru
      _
    // Predicated region
    $region98: #{gnn_forward.1} parent=1 // pred_check
      _
    $region99: #{gnn_forward.1} parent=1 // pred_check_branch
      %211 = sbr.rel (0) target = $region101
    $region100: #{gnn_forward.1} parent=1 // pred_region
      %213 = dma.done [#allocation15], 4096
    $region101: #{gnn_forward.1} parent=1 // pred_fallthru
      _
    // Predicated region
    $region102: #{gnn_forward.1} parent=1 // pred_check
      _
    $region103: #{gnn_forward.1} parent=1 // pred_check_branch
      %215 = sbr.rel (0) target = $region105
    $region104: #{gnn_forward.1} parent=1 // pred_region
      %217 = dma.done [#allocation18], 16
    $region105: #{gnn_forward.1} parent=1 // pred_fallthru
      _
    // Predicated region
    $region106: #{gnn_forward.1} parent=1 // pred_check
      _
    $region107: #{gnn_forward.1} parent=1 // pred_check_branch
      %219 = sbr.rel (0) target = $region109
    $region108: #{gnn_forward.1} parent=1 // pred_region
      %221 = dma.done [#allocation18], 2048
    $region109: #{gnn_forward.1} parent=1 // pred_fallthru
      _
    %v222 = vld [vmem:[#allocation5] sm:$0xff]
    %v223 = vld [vmem:[#allocation5 + $0x8] sm:$0xff]
    %v224 = vld [vmem:[#allocation5 + $0x10] sm:$0xff]
    %v225 = vld [vmem:[#allocation5 + $0x18] sm:$0xff]
    %v226 = vunpack.c.0.s8 %v222
    %v227 = vunpack.c.1.s8 %v222
    %v228 = vunpack.c.2.s8 %v222
    %v229 = vunpack.c.3.s8 %v222
    %v230 = vunpack.c.0.s8 %v223
    %v231 = vunpack.c.1.s8 %v223
    %v232 = vunpack.c.2.s8 %v223
    %v233 = vunpack.c.3.s8 %v223
    %v234 = vunpack.c.0.s8 %v224
    %v235 = vunpack.c.1.s8 %v224
    %v236 = vunpack.c.2.s8 %v224
    %v237 = vunpack.c.3.s8 %v224
    %v238 = vunpack.c.0.s8 %v225
    %v239 = vunpack.c.1.s8 %v225
    %v240 = vunpack.c.2.s8 %v225
    %v241 = vunpack.c.3.s8 %v225
    %v242 = vcvt.s32.f32 %v226
    %v243 = vcvt.s32.f32 %v227
    %v244 = vcvt.s32.f32 %v228
    %v245 = vcvt.s32.f32 %v229
    %v246 = vcvt.s32.f32 %v230
    %v247 = vcvt.s32.f32 %v231
    %v248 = vcvt.s32.f32 %v232
    %v249 = vcvt.s32.f32 %v233
    %v250 = vcvt.s32.f32 %v234
    %v251 = vcvt.s32.f32 %v235
    %v252 = vcvt.s32.f32 %v236
    %v253 = vcvt.s32.f32 %v237
    %v254 = vcvt.s32.f32 %v238
    %v255 = vcvt.s32.f32 %v239
    %v256 = vcvt.s32.f32 %v240
    %v257 = vcvt.s32.f32 %v241
    %vm258 = vcmp.gt.f32.partialorder %v242, 0.5
    %vm259 = vcmp.gt.f32.partialorder %v243, 0.5
    %vm260 = vcmp.gt.f32.partialorder %v244, 0.5
    %vm261 = vcmp.gt.f32.partialorder %v245, 0.5
    %vm262 = vcmp.gt.f32.partialorder %v246, 0.5
    %vm263 = vcmp.gt.f32.partialorder %v247, 0.5
    %vm264 = vcmp.gt.f32.partialorder %v248, 0.5
    %vm265 = vcmp.gt.f32.partialorder %v249, 0.5
    %vm266 = vcmp.gt.f32.partialorder %v250, 0.5
    %vm267 = vcmp.gt.f32.partialorder %v251, 0.5
    %vm268 = vcmp.gt.f32.partialorder %v252, 0.5
    %vm269 = vcmp.gt.f32.partialorder %v253, 0.5
    %vm270 = vcmp.gt.f32.partialorder %v254, 0.5
    %vm271 = vcmp.gt.f32.partialorder %v255, 0.5
    %vm272 = vcmp.gt.f32.partialorder %v256, 0.5
    %vm273 = vcmp.gt.f32.partialorder %v257, 0.5
    %v274 = vld [vmem:[%s2] sm:$0x1]
    %v275 = vld [vmem:[#allocation7] sm:$0xff]
    %v276 = vld [vmem:[#allocation7 + $0x8] sm:$0xff]
    %v277 = vld [vmem:[#allocation7 + $0x10] sm:$0xff]
    %v278 = vld [vmem:[#allocation7 + $0x18] sm:$0xff]
    %v279 = vld [vmem:[#allocation7 + $0x20] sm:$0xff]
    %v280 = vld [vmem:[#allocation7 + $0x28] sm:$0xff]
    %v281 = vld [vmem:[#allocation7 + $0x30] sm:$0xff]
    %v282 = vld [vmem:[#allocation7 + $0x38] sm:$0xff]
    %v283 = vld [vmem:[#allocation7 + $0x40] sm:$0xff]
    %v284 = vld [vmem:[#allocation7 + $0x48] sm:$0xff]
    %v285 = vld [vmem:[#allocation7 + $0x50] sm:$0xff]
    %v286 = vld [vmem:[#allocation7 + $0x58] sm:$0xff]
    %v287 = vld [vmem:[#allocation7 + $0x60] sm:$0xff]
    %v288 = vld [vmem:[#allocation7 + $0x68] sm:$0xff]
    %v289 = vld [vmem:[#allocation7 + $0x70] sm:$0xff]
    %v290 = vld [vmem:[#allocation7 + $0x78] sm:$0xff]
    %v291 = vld [vmem:[#allocation2] sm:$0xff]
    %v292 = vld [vmem:[#allocation2 + $0x8] sm:$0xff]
    %v293 = vld [vmem:[#allocation2 + $0x10] sm:$0xff]
    %v294 = vld [vmem:[#allocation2 + $0x18] sm:$0xff]
    %v295 = vld [vmem:[#allocation2 + $0x20] sm:$0xff]
    %v296 = vld [vmem:[#allocation2 + $0x28] sm:$0xff]
    %v297 = vld [vmem:[#allocation2 + $0x30] sm:$0xff]
    %v298 = vld [vmem:[#allocation2 + $0x38] sm:$0xff]
    %v299 = vld [vmem:[#allocation2 + $0x40] sm:$0xff]
    %v300 = vld [vmem:[#allocation2 + $0x48] sm:$0xff]
    %v301 = vld [vmem:[#allocation2 + $0x50] sm:$0xff]
    %v302 = vld [vmem:[#allocation2 + $0x58] sm:$0xff]
    %v303 = vld [vmem:[#allocation2 + $0x60] sm:$0xff]
    %v304 = vld [vmem:[#allocation2 + $0x68] sm:$0xff]
    %v305 = vld [vmem:[#allocation2 + $0x70] sm:$0xff]
    %v306 = vld [vmem:[#allocation2 + $0x78] sm:$0xff]
    %v307 = vld [vmem:[#allocation8] sm:$0xff]
    %v308 = vld [vmem:[#allocation8 + $0x8] sm:$0xff]
    %v309 = vld [vmem:[#allocation8 + $0x10] sm:$0xff]
    %v310 = vld [vmem:[#allocation8 + $0x18] sm:$0xff]
    %v311 = vld [vmem:[#allocation8 + $0x20] sm:$0xff]
    %v312 = vld [vmem:[#allocation8 + $0x28] sm:$0xff]
    %v313 = vld [vmem:[#allocation8 + $0x30] sm:$0xff]
    %v314 = vld [vmem:[#allocation8 + $0x38] sm:$0xff]
    %v315 = vld [vmem:[#allocation8 + $0x40] sm:$0xff]
    %v316 = vld [vmem:[#allocation8 + $0x48] sm:$0xff]
    %v317 = vld [vmem:[#allocation8 + $0x50] sm:$0xff]
    %v318 = vld [vmem:[#allocation8 + $0x58] sm:$0xff]
    %v319 = vld [vmem:[#allocation8 + $0x60] sm:$0xff]
    %v320 = vld [vmem:[#allocation8 + $0x68] sm:$0xff]
    %v321 = vld [vmem:[#allocation8 + $0x70] sm:$0xff]
    %v322 = vld [vmem:[#allocation8 + $0x78] sm:$0xff]
    %v323 = vld [vmem:[%s5] sm:$0x1]
    %v325 = vperm.slane %v323, 0
    %327 = vmatpush.msra.mxu0 %v322
    %328 = vmatpush.msra.mxu0 %v321
    %329 = vmatpush.msra.mxu0 %v320
    %330 = vmatpush.msra.mxu0 %v319
    %331 = vmatpush.msra.mxu0 %v318
    %332 = vmatpush.msra.mxu0 %v317
    %333 = vmatpush.msra.mxu0 %v316
    %334 = vmatpush.msra.mxu0 %v315
    %335 = vmatpush.msra.mxu0 %v314
    %336 = vmatpush.msra.mxu0 %v313
    %337 = vmatpush.msra.mxu0 %v312
    %338 = vmatpush.msra.mxu0 %v311
    %339 = vmatpush.msra.mxu0 %v310
    %340 = vmatpush.msra.mxu0 %v309
    %341 = vmatpush.msra.mxu0 %v308
    %342 = vmatpush.msra.mxu0 %v307
    %343 = vmatmul.f32.gmra.mxu0 %v291
    %v344 = vpop.f32.mrf.mxu0
    %v345 = vadd.f32 %v325, %v344
    %346 = vmatmul.f32.gmra.mxu0 %v292
    %v347 = vpop.f32.mrf.mxu0
    %v348 = vadd.f32 %v325, %v347
    %349 = vmatmul.f32.gmra.mxu0 %v293
    %v350 = vpop.f32.mrf.mxu0
    %v351 = vadd.f32 %v325, %v350
    %352 = vmatmul.f32.gmra.mxu0 %v294
    %v353 = vpop.f32.mrf.mxu0
    %v354 = vadd.f32 %v325, %v353
    %355 = vmatmul.f32.gmra.mxu0 %v295
    %v356 = vpop.f32.mrf.mxu0
    %v357 = vadd.f32 %v325, %v356
    %358 = vmatmul.f32.gmra.mxu0 %v296
    %v359 = vpop.f32.mrf.mxu0
    %v360 = vadd.f32 %v325, %v359
    %361 = vmatmul.f32.gmra.mxu0 %v297
    %v362 = vpop.f32.mrf.mxu0
    %v363 = vadd.f32 %v325, %v362
    %364 = vmatmul.f32.gmra.mxu0 %v298
    %v365 = vpop.f32.mrf.mxu0
    %v366 = vadd.f32 %v325, %v365
    %367 = vmatmul.f32.gmra.mxu0 %v299
    %v368 = vpop.f32.mrf.mxu0
    %v369 = vadd.f32 %v325, %v368
    %370 = vmatmul.f32.gmra.mxu0 %v300
    %v371 = vpop.f32.mrf.mxu0
    %v372 = vadd.f32 %v325, %v371
    %373 = vmatmul.f32.gmra.mxu0 %v301
    %v374 = vpop.f32.mrf.mxu0
    %v375 = vadd.f32 %v325, %v374
    %376 = vmatmul.f32.gmra.mxu0 %v302
    %v377 = vpop.f32.mrf.mxu0
    %v378 = vadd.f32 %v325, %v377
    %379 = vmatmul.f32.gmra.mxu0 %v303
    %v380 = vpop.f32.mrf.mxu0
    %v381 = vadd.f32 %v325, %v380
    %382 = vmatmul.f32.gmra.mxu0 %v304
    %v383 = vpop.f32.mrf.mxu0
    %v384 = vadd.f32 %v325, %v383
    %385 = vmatmul.f32.gmra.mxu0 %v305
    %v386 = vpop.f32.mrf.mxu0
    %v387 = vadd.f32 %v325, %v386
    %388 = vmatmul.f32.gmra.mxu0 %v306
    %v389 = vpop.f32.mrf.mxu0
    %v390 = vadd.f32 %v325, %v389
    %391 = vdwg.mxu0
    %v392 = vtanh.pop %v345
    %v393 = vtanh.pop %v348
    %v394 = vtanh.pop %v351
    %v395 = vtanh.pop %v354
    %v396 = vtanh.pop %v357
    %v397 = vtanh.pop %v360
    %v398 = vtanh.pop %v363
    %v399 = vtanh.pop %v366
    %v400 = vtanh.pop %v369
    %v401 = vtanh.pop %v372
    %v402 = vtanh.pop %v375
    %v403 = vtanh.pop %v378
    %v404 = vtanh.pop %v381
    %v405 = vtanh.pop %v384
    %v406 = vtanh.pop %v387
    %v407 = vtanh.pop %v390
    %v408 = vmul.f32 %v392, %v392
    %v409 = vmul.f32 %v393, %v393
    %v410 = vmul.f32 %v394, %v394
    %v411 = vmul.f32 %v395, %v395
    %v412 = vmul.f32 %v396, %v396
    %v413 = vmul.f32 %v397, %v397
    %v414 = vmul.f32 %v398, %v398
    %v415 = vmul.f32 %v399, %v399
    %v416 = vmul.f32 %v400, %v400
    %v417 = vmul.f32 %v401, %v401
    %v418 = vmul.f32 %v402, %v402
    %v419 = vmul.f32 %v403, %v403
    %v420 = vmul.f32 %v404, %v404
    %v421 = vmul.f32 %v405, %v405
    %v422 = vmul.f32 %v406, %v406
    %v423 = vmul.f32 %v407, %v407
    %424 = vadd.xlane.f32.xlu0 %v408
    %v425 = vpop.xlane.xlu0 %424
    %426 = vadd.xlane.f32.xlu0 %v409
    %v427 = vpop.xlane.xlu0 %426
    %428 = vadd.xlane.f32.xlu0 %v410
    %v429 = vpop.xlane.xlu0 %428
    %430 = vadd.xlane.f32.xlu0 %v411
    %v431 = vpop.xlane.xlu0 %430
    %432 = vadd.xlane.f32.xlu0 %v412
    %v433 = vpop.xlane.xlu0 %432
    %434 = vadd.xlane.f32.xlu0 %v413
    %v435 = vpop.xlane.xlu0 %434
    %436 = vadd.xlane.f32.xlu0 %v414
    %v437 = vpop.xlane.xlu0 %436
    %438 = vadd.xlane.f32.xlu0 %v415
    %v439 = vpop.xlane.xlu0 %438
    %440 = vadd.xlane.f32.xlu0 %v416
    %v441 = vpop.xlane.xlu0 %440
    %442 = vadd.xlane.f32.xlu0 %v417
    %v443 = vpop.xlane.xlu0 %442
    %444 = vadd.xlane.f32.xlu0 %v418
    %v445 = vpop.xlane.xlu0 %444
    %446 = vadd.xlane.f32.xlu0 %v419
    %v447 = vpop.xlane.xlu0 %446
    %448 = vadd.xlane.f32.xlu0 %v420
    %v449 = vpop.xlane.xlu0 %448
    %450 = vadd.xlane.f32.xlu0 %v421
    %v451 = vpop.xlane.xlu0 %450
    %452 = vadd.xlane.f32.xlu0 %v422
    %v453 = vpop.xlane.xlu0 %452
    %454 = vadd.xlane.f32.xlu0 %v423
    %v455 = vpop.xlane.xlu0 %454
    %v456 = vmax.f32 %v425, 1e-24
    %v457 = vmax.f32 %v427, 1e-24
    %v458 = vmax.f32 %v429, 1e-24
    %v459 = vmax.f32 %v431, 1e-24
    %v460 = vmax.f32 %v433, 1e-24
    %v461 = vmax.f32 %v435, 1e-24
    %v462 = vmax.f32 %v437, 1e-24
    %v463 = vmax.f32 %v439, 1e-24
    %v464 = vmax.f32 %v441, 1e-24
    %v465 = vmax.f32 %v443, 1e-24
    %v466 = vmax.f32 %v445, 1e-24
    %v467 = vmax.f32 %v447, 1e-24
    %v468 = vmax.f32 %v449, 1e-24
    %v469 = vmax.f32 %v451, 1e-24
    %v470 = vmax.f32 %v453, 1e-24
    %v471 = vmax.f32 %v455, 1e-24
    %v472 = vrsqrt.pop %v456
    %v473 = vmul.f32 %v472, %v456
    %v474 = vmul.f32 %v473, %v472
    %v475 = vmul.f32 0.5, %v474
    %v476 = vsub.f32 1.5, %v475
    %v477 = vmul.f32 %v472, %v476
    %vm478 = vweird.f32 %v456
    %vm479 = vweird.f32 %v472
    %vm480 = vmor %vm478, %vm479
    %v481 = vsel %vm480, %v472, %v477
    %v482 = vrsqrt.pop %v457
    %v483 = vmul.f32 %v482, %v457
    %v484 = vmul.f32 %v483, %v482
    %v485 = vmul.f32 0.5, %v484
    %v486 = vsub.f32 1.5, %v485
    %v487 = vmul.f32 %v482, %v486
    %vm488 = vweird.f32 %v457
    %vm489 = vweird.f32 %v482
    %vm490 = vmor %vm488, %vm489
    %v491 = vsel %vm490, %v482, %v487
    %v492 = vrsqrt.pop %v458
    %v493 = vmul.f32 %v492, %v458
    %v494 = vmul.f32 %v493, %v492
    %v495 = vmul.f32 0.5, %v494
    %v496 = vsub.f32 1.5, %v495
    %v497 = vmul.f32 %v492, %v496
    %vm498 = vweird.f32 %v458
    %vm499 = vweird.f32 %v492
    %vm500 = vmor %vm498, %vm499
    %v501 = vsel %vm500, %v492, %v497
    %v502 = vrsqrt.pop %v459
    %v503 = vmul.f32 %v502, %v459
    %v504 = vmul.f32 %v503, %v502
    %v505 = vmul.f32 0.5, %v504
    %v506 = vsub.f32 1.5, %v505
    %v507 = vmul.f32 %v502, %v506
    %vm508 = vweird.f32 %v459
    %vm509 = vweird.f32 %v502
    %vm510 = vmor %vm508, %vm509
    %v511 = vsel %vm510, %v502, %v507
    %v512 = vrsqrt.pop %v460
    %v513 = vmul.f32 %v512, %v460
    %v514 = vmul.f32 %v513, %v512
    %v515 = vmul.f32 0.5, %v514
    %v516 = vsub.f32 1.5, %v515
    %v517 = vmul.f32 %v512, %v516
    %vm518 = vweird.f32 %v460
    %vm519 = vweird.f32 %v512
    %vm520 = vmor %vm518, %vm519
    %v521 = vsel %vm520, %v512, %v517
    %v522 = vrsqrt.pop %v461
    %v523 = vmul.f32 %v522, %v461
    %v524 = vmul.f32 %v523, %v522
    %v525 = vmul.f32 0.5, %v524
    %v526 = vsub.f32 1.5, %v525
    %v527 = vmul.f32 %v522, %v526
    %vm528 = vweird.f32 %v461
    %vm529 = vweird.f32 %v522
    %vm530 = vmor %vm528, %vm529
    %v531 = vsel %vm530, %v522, %v527
    %v532 = vrsqrt.pop %v462
    %v533 = vmul.f32 %v532, %v462
    %v534 = vmul.f32 %v533, %v532
    %v535 = vmul.f32 0.5, %v534
    %v536 = vsub.f32 1.5, %v535
    %v537 = vmul.f32 %v532, %v536
    %vm538 = vweird.f32 %v462
    %vm539 = vweird.f32 %v532
    %vm540 = vmor %vm538, %vm539
    %v541 = vsel %vm540, %v532, %v537
    %v542 = vrsqrt.pop %v463
    %v543 = vmul.f32 %v542, %v463
    %v544 = vmul.f32 %v543, %v542
    %v545 = vmul.f32 0.5, %v544
    %v546 = vsub.f32 1.5, %v545
    %v547 = vmul.f32 %v542, %v546
    %vm548 = vweird.f32 %v463
    %vm549 = vweird.f32 %v542
    %vm550 = vmor %vm548, %vm549
    %v551 = vsel %vm550, %v542, %v547
    %v552 = vrsqrt.pop %v464
    %v553 = vmul.f32 %v552, %v464
    %v554 = vmul.f32 %v553, %v552
    %v555 = vmul.f32 0.5, %v554
    %v556 = vsub.f32 1.5, %v555
    %v557 = vmul.f32 %v552, %v556
    %vm558 = vweird.f32 %v464
    %vm559 = vweird.f32 %v552
    %vm560 = vmor %vm558, %vm559
    %v561 = vsel %vm560, %v552, %v557
    %v562 = vrsqrt.pop %v465
    %v563 = vmul.f32 %v562, %v465
    %v564 = vmul.f32 %v563, %v562
    %v565 = vmul.f32 0.5, %v564
    %v566 = vsub.f32 1.5, %v565
    %v567 = vmul.f32 %v562, %v566
    %vm568 = vweird.f32 %v465
    %vm569 = vweird.f32 %v562
    %vm570 = vmor %vm568, %vm569
    %v571 = vsel %vm570, %v562, %v567
    %v572 = vrsqrt.pop %v466
    %v573 = vmul.f32 %v572, %v466
    %v574 = vmul.f32 %v573, %v572
    %v575 = vmul.f32 0.5, %v574
    %v576 = vsub.f32 1.5, %v575
    %v577 = vmul.f32 %v572, %v576
    %vm578 = vweird.f32 %v466
    %vm579 = vweird.f32 %v572
    %vm580 = vmor %vm578, %vm579
    %v581 = vsel %vm580, %v572, %v577
    %v582 = vrsqrt.pop %v467
    %v583 = vmul.f32 %v582, %v467
    %v584 = vmul.f32 %v583, %v582
    %v585 = vmul.f32 0.5, %v584
    %v586 = vsub.f32 1.5, %v585
    %v587 = vmul.f32 %v582, %v586
    %vm588 = vweird.f32 %v467
    %vm589 = vweird.f32 %v582
    %vm590 = vmor %vm588, %vm589
    %v591 = vsel %vm590, %v582, %v587
    %v592 = vrsqrt.pop %v468
    %v593 = vmul.f32 %v592, %v468
    %v594 = vmul.f32 %v593, %v592
    %v595 = vmul.f32 0.5, %v594
    %v596 = vsub.f32 1.5, %v595
    %v597 = vmul.f32 %v592, %v596
    %vm598 = vweird.f32 %v468
    %vm599 = vweird.f32 %v592
    %vm600 = vmor %vm598, %vm599
    %v601 = vsel %vm600, %v592, %v597
    %v602 = vrsqrt.pop %v469
    %v603 = vmul.f32 %v602, %v469
    %v604 = vmul.f32 %v603, %v602
    %v605 = vmul.f32 0.5, %v604
    %v606 = vsub.f32 1.5, %v605
    %v607 = vmul.f32 %v602, %v606
    %vm608 = vweird.f32 %v469
    %vm609 = vweird.f32 %v602
    %vm610 = vmor %vm608, %vm609
    %v611 = vsel %vm610, %v602, %v607
    %v612 = vrsqrt.pop %v470
    %v613 = vmul.f32 %v612, %v470
    %v614 = vmul.f32 %v613, %v612
    %v615 = vmul.f32 0.5, %v614
    %v616 = vsub.f32 1.5, %v615
    %v617 = vmul.f32 %v612, %v616
    %vm618 = vweird.f32 %v470
    %vm619 = vweird.f32 %v612
    %vm620 = vmor %vm618, %vm619
    %v621 = vsel %vm620, %v612, %v617
    %v622 = vrsqrt.pop %v471
    %v623 = vmul.f32 %v622, %v471
    %v624 = vmul.f32 %v623, %v622
    %v625 = vmul.f32 0.5, %v624
    %v626 = vsub.f32 1.5, %v625
    %v627 = vmul.f32 %v622, %v626
    %vm628 = vweird.f32 %v471
    %vm629 = vweird.f32 %v622
    %vm630 = vmor %vm628, %vm629
    %v631 = vsel %vm630, %v622, %v627
    %v632 = vmul.f32 %v392, %v481
    %v633 = vmul.f32 %v393, %v491
    %v634 = vmul.f32 %v394, %v501
    %v635 = vmul.f32 %v395, %v511
    %v636 = vmul.f32 %v396, %v521
    %v637 = vmul.f32 %v397, %v531
    %v638 = vmul.f32 %v398, %v541
    %v639 = vmul.f32 %v399, %v551
    %v640 = vmul.f32 %v400, %v561
    %v641 = vmul.f32 %v401, %v571
    %v642 = vmul.f32 %v402, %v581
    %v643 = vmul.f32 %v403, %v591
    %v644 = vmul.f32 %v404, %v601
    %v645 = vmul.f32 %v405, %v611
    %v646 = vmul.f32 %v406, %v621
    %v647 = vmul.f32 %v407, %v631
    %v648 = vld [vmem:[#allocation10] sm:$0xff]
    %v649 = vld [vmem:[#allocation10 + $0x8] sm:$0xff]
    %v650 = vld [vmem:[#allocation10 + $0x10] sm:$0xff]
    %v651 = vld [vmem:[#allocation10 + $0x18] sm:$0xff]
    %v652 = vld [vmem:[#allocation10 + $0x20] sm:$0xff]
    %v653 = vld [vmem:[#allocation10 + $0x28] sm:$0xff]
    %v654 = vld [vmem:[#allocation10 + $0x30] sm:$0xff]
    %v655 = vld [vmem:[#allocation10 + $0x38] sm:$0xff]
    %v656 = vld [vmem:[#allocation10 + $0x40] sm:$0xff]
    %v657 = vld [vmem:[#allocation10 + $0x48] sm:$0xff]
    %v658 = vld [vmem:[#allocation10 + $0x50] sm:$0xff]
    %v659 = vld [vmem:[#allocation10 + $0x58] sm:$0xff]
    %v660 = vld [vmem:[#allocation10 + $0x60] sm:$0xff]
    %v661 = vld [vmem:[#allocation10 + $0x68] sm:$0xff]
    %v662 = vld [vmem:[#allocation10 + $0x70] sm:$0xff]
    %v663 = vld [vmem:[#allocation10 + $0x78] sm:$0xff]
    %v664 = vld [vmem:[#allocation10 + $0x80] sm:$0xff]
    %v665 = vld [vmem:[#allocation10 + $0x88] sm:$0xff]
    %v666 = vld [vmem:[#allocation10 + $0x90] sm:$0xff]
    %v667 = vld [vmem:[#allocation10 + $0x98] sm:$0xff]
    %v668 = vld [vmem:[#allocation10 + $0xa0] sm:$0xff]
    %v669 = vld [vmem:[#allocation10 + $0xa8] sm:$0xff]
    %v670 = vld [vmem:[#allocation10 + $0xb0] sm:$0xff]
    %v671 = vld [vmem:[#allocation10 + $0xb8] sm:$0xff]
    %v672 = vld [vmem:[#allocation10 + $0xc0] sm:$0xff]
    %v673 = vld [vmem:[#allocation10 + $0xc8] sm:$0xff]
    %v674 = vld [vmem:[#allocation10 + $0xd0] sm:$0xff]
    %v675 = vld [vmem:[#allocation10 + $0xd8] sm:$0xff]
    %v676 = vld [vmem:[#allocation10 + $0xe0] sm:$0xff]
    %v677 = vld [vmem:[#allocation10 + $0xe8] sm:$0xff]
    %v678 = vld [vmem:[#allocation10 + $0xf0] sm:$0xff]
    %v679 = vld [vmem:[#allocation10 + $0xf8] sm:$0xff]
    %v680 = vld [vmem:[#allocation11] sm:$0x1]
    %v681 = vld [vmem:[%s8] sm:$0x1]
    %v682 = vld [vmem:[#allocation13] sm:$0xff]
    %v683 = vld [vmem:[#allocation13 + $0x8] sm:$0xff]
    %v684 = vld [vmem:[#allocation13 + $0x10] sm:$0xff]
    %v685 = vld [vmem:[#allocation13 + $0x18] sm:$0xff]
    %v686 = vld [vmem:[#allocation13 + $0x20] sm:$0xff]
    %v687 = vld [vmem:[#allocation13 + $0x28] sm:$0xff]
    %v688 = vld [vmem:[#allocation13 + $0x30] sm:$0xff]
    %v689 = vld [vmem:[#allocation13 + $0x38] sm:$0xff]
    %v690 = vld [vmem:[#allocation13 + $0x40] sm:$0xff]
    %v691 = vld [vmem:[#allocation13 + $0x48] sm:$0xff]
    %v692 = vld [vmem:[#allocation13 + $0x50] sm:$0xff]
    %v693 = vld [vmem:[#allocation13 + $0x58] sm:$0xff]
    %v694 = vld [vmem:[#allocation13 + $0x60] sm:$0xff]
    %v695 = vld [vmem:[#allocation13 + $0x68] sm:$0xff]
    %v696 = vld [vmem:[#allocation13 + $0x70] sm:$0xff]
    %v697 = vld [vmem:[#allocation13 + $0x78] sm:$0xff]
    %v698 = vld [vmem:[#allocation14] sm:$0x1]
    %699 = vmatpush.msra.mxu0 %v678
    %700 = vmatpush.msra.mxu0 %v676
    %701 = vmatpush.msra.mxu0 %v674
    %702 = vmatpush.msra.mxu0 %v672
    %703 = vmatpush.msra.mxu0 %v670
    %704 = vmatpush.msra.mxu0 %v668
    %705 = vmatpush.msra.mxu0 %v666
    %706 = vmatpush.msra.mxu0 %v664
    %707 = vmatpush.msra.mxu0 %v662
    %708 = vmatpush.msra.mxu0 %v660
    %709 = vmatpush.msra.mxu0 %v658
    %710 = vmatpush.msra.mxu0 %v656
    %711 = vmatpush.msra.mxu0 %v654
    %712 = vmatpush.msra.mxu0 %v652
    %713 = vmatpush.msra.mxu0 %v650
    %714 = vmatpush.msra.mxu0 %v648
    %715 = vmatmul.f32.gmra.mxu0 %v632
    %v716 = vpop.f32.mrf.mxu0
    %v717 = vadd.f32 0.0, %v716
    %718 = vmatmul.f32.gmra.mxu0 %v633
    %v719 = vpop.f32.mrf.mxu0
    %v720 = vadd.f32 0.0, %v719
    %721 = vmatmul.f32.gmra.mxu0 %v634
    %v722 = vpop.f32.mrf.mxu0
    %v723 = vadd.f32 0.0, %v722
    %724 = vmatmul.f32.gmra.mxu0 %v635
    %v725 = vpop.f32.mrf.mxu0
    %v726 = vadd.f32 0.0, %v725
    %727 = vmatmul.f32.gmra.mxu0 %v636
    %v728 = vpop.f32.mrf.mxu0
    %v729 = vadd.f32 0.0, %v728
    %730 = vmatmul.f32.gmra.mxu0 %v637
    %v731 = vpop.f32.mrf.mxu0
    %v732 = vadd.f32 0.0, %v731
    %733 = vmatmul.f32.gmra.mxu0 %v638
    %v734 = vpop.f32.mrf.mxu0
    %v735 = vadd.f32 0.0, %v734
    %736 = vmatmul.f32.gmra.mxu0 %v639
    %v737 = vpop.f32.mrf.mxu0
    %v738 = vadd.f32 0.0, %v737
    %739 = vmatmul.f32.gmra.mxu0 %v640
    %v740 = vpop.f32.mrf.mxu0
    %v741 = vadd.f32 0.0, %v740
    %742 = vmatmul.f32.gmra.mxu0 %v641
    %v743 = vpop.f32.mrf.mxu0
    %v744 = vadd.f32 0.0, %v743
    %745 = vmatmul.f32.gmra.mxu0 %v642
    %v746 = vpop.f32.mrf.mxu0
    %v747 = vadd.f32 0.0, %v746
    %748 = vmatmul.f32.gmra.mxu0 %v643
    %v749 = vpop.f32.mrf.mxu0
    %v750 = vadd.f32 0.0, %v749
    %751 = vmatmul.f32.gmra.mxu0 %v644
    %v752 = vpop.f32.mrf.mxu0
    %v753 = vadd.f32 0.0, %v752
    %754 = vmatmul.f32.gmra.mxu0 %v645
    %v755 = vpop.f32.mrf.mxu0
    %v756 = vadd.f32 0.0, %v755
    %757 = vmatmul.f32.gmra.mxu0 %v646
    %v758 = vpop.f32.mrf.mxu0
    %v759 = vadd.f32 0.0, %v758
    %760 = vmatmul.f32.gmra.mxu0 %v647
    %v761 = vpop.f32.mrf.mxu0
    %v762 = vadd.f32 0.0, %v761
    %763 = vdwg.mxu0
    %764 = vmatpush.msra.mxu0 %v679
    %765 = vmatpush.msra.mxu0 %v677
    %766 = vmatpush.msra.mxu0 %v675
    %767 = vmatpush.msra.mxu0 %v673
    %768 = vmatpush.msra.mxu0 %v671
    %769 = vmatpush.msra.mxu0 %v669
    %770 = vmatpush.msra.mxu0 %v667
    %771 = vmatpush.msra.mxu0 %v665
    %772 = vmatpush.msra.mxu0 %v663
    %773 = vmatpush.msra.mxu0 %v661
    %774 = vmatpush.msra.mxu0 %v659
    %775 = vmatpush.msra.mxu0 %v657
    %776 = vmatpush.msra.mxu0 %v655
    %777 = vmatpush.msra.mxu0 %v653
    %778 = vmatpush.msra.mxu0 %v651
    %779 = vmatpush.msra.mxu0 %v649
    %780 = vmatmul.f32.gmra.mxu0 %v632
    %v781 = vpop.f32.mrf.mxu0
    %v782 = vadd.f32 0.0, %v781
    %783 = vmatmul.f32.gmra.mxu0 %v633
    %v784 = vpop.f32.mrf.mxu0
    %v785 = vadd.f32 0.0, %v784
    %786 = vmatmul.f32.gmra.mxu0 %v634
    %v787 = vpop.f32.mrf.mxu0
    %v788 = vadd.f32 0.0, %v787
    %789 = vmatmul.f32.gmra.mxu0 %v635
    %v790 = vpop.f32.mrf.mxu0
    %v791 = vadd.f32 0.0, %v790
    %792 = vmatmul.f32.gmra.mxu0 %v636
    %v793 = vpop.f32.mrf.mxu0
    %v794 = vadd.f32 0.0, %v793
    %795 = vmatmul.f32.gmra.mxu0 %v637
    %v796 = vpop.f32.mrf.mxu0
    %v797 = vadd.f32 0.0, %v796
    %798 = vmatmul.f32.gmra.mxu0 %v638
    %v799 = vpop.f32.mrf.mxu0
    %v800 = vadd.f32 0.0, %v799
    %801 = vmatmul.f32.gmra.mxu0 %v639
    %v802 = vpop.f32.mrf.mxu0
    %v803 = vadd.f32 0.0, %v802
    %804 = vmatmul.f32.gmra.mxu0 %v640
    %v805 = vpop.f32.mrf.mxu0
    %v806 = vadd.f32 0.0, %v805
    %807 = vmatmul.f32.gmra.mxu0 %v641
    %v808 = vpop.f32.mrf.mxu0
    %v809 = vadd.f32 0.0, %v808
    %810 = vmatmul.f32.gmra.mxu0 %v642
    %v811 = vpop.f32.mrf.mxu0
    %v812 = vadd.f32 0.0, %v811
    %813 = vmatmul.f32.gmra.mxu0 %v643
    %v814 = vpop.f32.mrf.mxu0
    %v815 = vadd.f32 0.0, %v814
    %816 = vmatmul.f32.gmra.mxu0 %v644
    %v817 = vpop.f32.mrf.mxu0
    %v818 = vadd.f32 0.0, %v817
    %819 = vmatmul.f32.gmra.mxu0 %v645
    %v820 = vpop.f32.mrf.mxu0
    %v821 = vadd.f32 0.0, %v820
    %822 = vmatmul.f32.gmra.mxu0 %v646
    %v823 = vpop.f32.mrf.mxu0
    %v824 = vadd.f32 0.0, %v823
    %825 = vmatmul.f32.gmra.mxu0 %v647
    %v826 = vpop.f32.mrf.mxu0
    %v827 = vadd.f32 0.0, %v826
    %828 = vdwg.mxu0
    %vm829 = vcmp.gt.f32.partialorder %v717, 0.0
    %vm830 = vcmp.gt.f32.partialorder %v720, 0.0
    %vm831 = vcmp.gt.f32.partialorder %v723, 0.0
    %vm832 = vcmp.gt.f32.partialorder %v726, 0.0
    %vm833 = vcmp.gt.f32.partialorder %v729, 0.0
    %vm834 = vcmp.gt.f32.partialorder %v732, 0.0
    %vm835 = vcmp.gt.f32.partialorder %v735, 0.0
    %vm836 = vcmp.gt.f32.partialorder %v738, 0.0
    %vm837 = vcmp.gt.f32.partialorder %v741, 0.0
    %vm838 = vcmp.gt.f32.partialorder %v744, 0.0
    %vm839 = vcmp.gt.f32.partialorder %v747, 0.0
    %vm840 = vcmp.gt.f32.partialorder %v750, 0.0
    %vm841 = vcmp.gt.f32.partialorder %v753, 0.0
    %vm842 = vcmp.gt.f32.partialorder %v756, 0.0
    %vm843 = vcmp.gt.f32.partialorder %v759, 0.0
    %vm844 = vcmp.gt.f32.partialorder %v762, 0.0
    %v845 = vmul.f32 %v717, 0.01
    %v846 = vmul.f32 %v720, 0.01
    %v847 = vmul.f32 %v723, 0.01
    %v848 = vmul.f32 %v726, 0.01
    %v849 = vmul.f32 %v729, 0.01
    %v850 = vmul.f32 %v732, 0.01
    %v851 = vmul.f32 %v735, 0.01
    %v852 = vmul.f32 %v738, 0.01
    %v853 = vmul.f32 %v741, 0.01
    %v854 = vmul.f32 %v744, 0.01
    %v855 = vmul.f32 %v747, 0.01
    %v856 = vmul.f32 %v750, 0.01
    %v857 = vmul.f32 %v753, 0.01
    %v858 = vmul.f32 %v756, 0.01
    %v859 = vmul.f32 %v759, 0.01
    %v860 = vmul.f32 %v762, 0.01
    %v861 = vsel %vm829, %v717, %v845
    %v862 = vsel %vm830, %v720, %v846
    %v863 = vsel %vm831, %v723, %v847
    %v864 = vsel %vm832, %v726, %v848
    %v865 = vsel %vm833, %v729, %v849
    %v866 = vsel %vm834, %v732, %v850
    %v867 = vsel %vm835, %v735, %v851
    %v868 = vsel %vm836, %v738, %v852
    %v869 = vsel %vm837, %v741, %v853
    %v870 = vsel %vm838, %v744, %v854
    %v871 = vsel %vm839, %v747, %v855
    %v872 = vsel %vm840, %v750, %v856
    %v873 = vsel %vm841, %v753, %v857
    %v874 = vsel %vm842, %v756, %v858
    %v875 = vsel %vm843, %v759, %v859
    %v876 = vsel %vm844, %v762, %v860
    %877 = vmatpush.xpose.msra.mxu0 %v876
    %878 = vmatpush.xpose.msra.mxu0 %v875
    %879 = vmatpush.xpose.msra.mxu0 %v874
    %880 = vmatpush.xpose.msra.mxu0 %v873
    %881 = vmatpush.xpose.msra.mxu0 %v872
    %882 = vmatpush.xpose.msra.mxu0 %v871
    %883 = vmatpush.xpose.msra.mxu0 %v870
    %884 = vmatpush.xpose.msra.mxu0 %v869
    %885 = vmatpush.xpose.msra.mxu0 %v868
    %886 = vmatpush.xpose.msra.mxu0 %v867
    %887 = vmatpush.xpose.msra.mxu0 %v866
    %888 = vmatpush.xpose.msra.mxu0 %v865
    %889 = vmatpush.xpose.msra.mxu0 %v864
    %890 = vmatpush.xpose.msra.mxu0 %v863
    %891 = vmatpush.xpose.msra.mxu0 %v862
    %892 = vmatpush.xpose.msra.mxu0 %v861
    %893 = vmatmul.f32.gmra.mxu0 %v717
    %v894 = vpop.f32.mrf.mxu0
    %v895 = vadd.f32 0.0, %v894
    %896 = vmatmul.f32.gmra.mxu0 %v720
    %v897 = vpop.f32.mrf.mxu0
    %v898 = vadd.f32 0.0, %v897
    %899 = vmatmul.f32.gmra.mxu0 %v723
    %v900 = vpop.f32.mrf.mxu0
    %v901 = vadd.f32 0.0, %v900
    %902 = vmatmul.f32.gmra.mxu0 %v726
    %v903 = vpop.f32.mrf.mxu0
    %v904 = vadd.f32 0.0, %v903
    %905 = vmatmul.f32.gmra.mxu0 %v729
    %v906 = vpop.f32.mrf.mxu0
    %v907 = vadd.f32 0.0, %v906
    %908 = vmatmul.f32.gmra.mxu0 %v732
    %v909 = vpop.f32.mrf.mxu0
    %v910 = vadd.f32 0.0, %v909
    %911 = vmatmul.f32.gmra.mxu0 %v735
    %v912 = vpop.f32.mrf.mxu0
    %v913 = vadd.f32 0.0, %v912
    %914 = vmatmul.f32.gmra.mxu0 %v738
    %v915 = vpop.f32.mrf.mxu0
    %v916 = vadd.f32 0.0, %v915
    %917 = vmatmul.f32.gmra.mxu0 %v741
    %v918 = vpop.f32.mrf.mxu0
    %v919 = vadd.f32 0.0, %v918
    %920 = vmatmul.f32.gmra.mxu0 %v744
    %v921 = vpop.f32.mrf.mxu0
    %v922 = vadd.f32 0.0, %v921
    %923 = vmatmul.f32.gmra.mxu0 %v747
    %v924 = vpop.f32.mrf.mxu0
    %v925 = vadd.f32 0.0, %v924
    %926 = vmatmul.f32.gmra.mxu0 %v750
    %v927 = vpop.f32.mrf.mxu0
    %v928 = vadd.f32 0.0, %v927
    %929 = vmatmul.f32.gmra.mxu0 %v753
    %v930 = vpop.f32.mrf.mxu0
    %v931 = vadd.f32 0.0, %v930
    %932 = vmatmul.f32.gmra.mxu0 %v756
    %v933 = vpop.f32.mrf.mxu0
    %v934 = vadd.f32 0.0, %v933
    %935 = vmatmul.f32.gmra.mxu0 %v759
    %v936 = vpop.f32.mrf.mxu0
    %v937 = vadd.f32 0.0, %v936
    %938 = vmatmul.f32.gmra.mxu0 %v762
    %v939 = vpop.f32.mrf.mxu0
    %v940 = vadd.f32 0.0, %v939
    %941 = vdwg.mxu0
    %v943 = vperm.slane %v274, 0
    %v945 = vmul.f32 %v943, %v895
    %v946 = vmul.f32 %v943, %v898
    %v947 = vmul.f32 %v943, %v901
    %v948 = vmul.f32 %v943, %v904
    %v949 = vmul.f32 %v943, %v907
    %v950 = vmul.f32 %v943, %v910
    %v951 = vmul.f32 %v943, %v913
    %v952 = vmul.f32 %v943, %v916
    %v953 = vmul.f32 %v943, %v919
    %v954 = vmul.f32 %v943, %v922
    %v955 = vmul.f32 %v943, %v925
    %v956 = vmul.f32 %v943, %v928
    %v957 = vmul.f32 %v943, %v931
    %v958 = vmul.f32 %v943, %v934
    %v959 = vmul.f32 %v943, %v937
    %v960 = vmul.f32 %v943, %v940
    %v961 = vxor.u32 %v945, 2147483648
    %v962 = vxor.u32 %v946, 2147483648
    %v963 = vxor.u32 %v947, 2147483648
    %v964 = vxor.u32 %v948, 2147483648
    %v965 = vxor.u32 %v949, 2147483648
    %v966 = vxor.u32 %v950, 2147483648
    %v967 = vxor.u32 %v951, 2147483648
    %v968 = vxor.u32 %v952, 2147483648
    %v969 = vxor.u32 %v953, 2147483648
    %v970 = vxor.u32 %v954, 2147483648
    %v971 = vxor.u32 %v955, 2147483648
    %v972 = vxor.u32 %v956, 2147483648
    %v973 = vxor.u32 %v957, 2147483648
    %v974 = vxor.u32 %v958, 2147483648
    %v975 = vxor.u32 %v959, 2147483648
    %v976 = vxor.u32 %v960, 2147483648
    %v977 = vmul.f32 %v961, 1.442695
    %v978 = vpow.pop %v977
    %v979 = vmul.f32 %v962, 1.442695
    %v980 = vpow.pop %v979
    %v981 = vmul.f32 %v963, 1.442695
    %v982 = vpow.pop %v981
    %v983 = vmul.f32 %v964, 1.442695
    %v984 = vpow.pop %v983
    %v985 = vmul.f32 %v965, 1.442695
    %v986 = vpow.pop %v985
    %v987 = vmul.f32 %v966, 1.442695
    %v988 = vpow.pop %v987
    %v989 = vmul.f32 %v967, 1.442695
    %v990 = vpow.pop %v989
    %v991 = vmul.f32 %v968, 1.442695
    %v992 = vpow.pop %v991
    %v993 = vmul.f32 %v969, 1.442695
    %v994 = vpow.pop %v993
    %v995 = vmul.f32 %v970, 1.442695
    %v996 = vpow.pop %v995
    %v997 = vmul.f32 %v971, 1.442695
    %v998 = vpow.pop %v997
    %v999 = vmul.f32 %v972, 1.442695
    %v1000 = vpow.pop %v999
    %v1001 = vmul.f32 %v973, 1.442695
    %v1002 = vpow.pop %v1001
    %v1003 = vmul.f32 %v974, 1.442695
    %v1004 = vpow.pop %v1003
    %v1005 = vmul.f32 %v975, 1.442695
    %v1006 = vpow.pop %v1005
    %v1007 = vmul.f32 %v976, 1.442695
    %v1008 = vpow.pop %v1007
    %v1009 = vadd.f32 %v978, 1.0
    %v1010 = vadd.f32 %v980, 1.0
    %v1011 = vadd.f32 %v982, 1.0
    %v1012 = vadd.f32 %v984, 1.0
    %v1013 = vadd.f32 %v986, 1.0
    %v1014 = vadd.f32 %v988, 1.0
    %v1015 = vadd.f32 %v990, 1.0
    %v1016 = vadd.f32 %v992, 1.0
    %v1017 = vadd.f32 %v994, 1.0
    %v1018 = vadd.f32 %v996, 1.0
    %v1019 = vadd.f32 %v998, 1.0
    %v1020 = vadd.f32 %v1000, 1.0
    %v1021 = vadd.f32 %v1002, 1.0
    %v1022 = vadd.f32 %v1004, 1.0
    %v1023 = vadd.f32 %v1006, 1.0
    %v1024 = vadd.f32 %v1008, 1.0
    %v1025 = vrcp.pop %v1009
    %v1026 = vmul.f32 %v1009, %v1025
    %v1027 = vsub.f32 1.0, %v1026
    %v1028 = vmul.f32 %v1025, %v1027
    %v1029 = vadd.f32 %v1025, %v1028
    %vm1030 = vweird.f32 %v1009
    %vm1031 = vweird.f32 %v1025
    %vm1032 = vmor %vm1030, %vm1031
    %v1033 = vsel %vm1032, %v1025, %v1029
    %v1034 = vand.u32 2147483647, %v1009
    %vm1035 = vcmp.eq.f32.partialorder %v1034, 8.507059e+37
    %v1036 = vand.u32 %v1009, 2147483648
    %v1037 = vor.u32 1.1754944e-38, %v1036
    %v1038 = vsel %vm1035, %v1037, %v1033
    %v1039 = vmul.f32 1.0, %v1038
    %v1040 = vrcp.pop %v1010
    %v1041 = vmul.f32 %v1010, %v1040
    %v1042 = vsub.f32 1.0, %v1041
    %v1043 = vmul.f32 %v1040, %v1042
    %v1044 = vadd.f32 %v1040, %v1043
    %vm1045 = vweird.f32 %v1010
    %vm1046 = vweird.f32 %v1040
    %vm1047 = vmor %vm1045, %vm1046
    %v1048 = vsel %vm1047, %v1040, %v1044
    %v1049 = vand.u32 2147483647, %v1010
    %vm1050 = vcmp.eq.f32.partialorder %v1049, 8.507059e+37
    %v1051 = vand.u32 %v1010, 2147483648
    %v1052 = vor.u32 1.1754944e-38, %v1051
    %v1053 = vsel %vm1050, %v1052, %v1048
    %v1054 = vmul.f32 1.0, %v1053
    %v1055 = vrcp.pop %v1011
    %v1056 = vmul.f32 %v1011, %v1055
    %v1057 = vsub.f32 1.0, %v1056
    %v1058 = vmul.f32 %v1055, %v1057
    %v1059 = vadd.f32 %v1055, %v1058
    %vm1060 = vweird.f32 %v1011
    %vm1061 = vweird.f32 %v1055
    %vm1062 = vmor %vm1060, %vm1061
    %v1063 = vsel %vm1062, %v1055, %v1059
    %v1064 = vand.u32 2147483647, %v1011
    %vm1065 = vcmp.eq.f32.partialorder %v1064, 8.507059e+37
    %v1066 = vand.u32 %v1011, 2147483648
    %v1067 = vor.u32 1.1754944e-38, %v1066
    %v1068 = vsel %vm1065, %v1067, %v1063
    %v1069 = vmul.f32 1.0, %v1068
    %v1070 = vrcp.pop %v1012
    %v1071 = vmul.f32 %v1012, %v1070
    %v1072 = vsub.f32 1.0, %v1071
    %v1073 = vmul.f32 %v1070, %v1072
    %v1074 = vadd.f32 %v1070, %v1073
    %vm1075 = vweird.f32 %v1012
    %vm1076 = vweird.f32 %v1070
    %vm1077 = vmor %vm1075, %vm1076
    %v1078 = vsel %vm1077, %v1070, %v1074
    %v1079 = vand.u32 2147483647, %v1012
    %vm1080 = vcmp.eq.f32.partialorder %v1079, 8.507059e+37
    %v1081 = vand.u32 %v1012, 2147483648
    %v1082 = vor.u32 1.1754944e-38, %v1081
    %v1083 = vsel %vm1080, %v1082, %v1078
    %v1084 = vmul.f32 1.0, %v1083
    %v1085 = vrcp.pop %v1013
    %v1086 = vmul.f32 %v1013, %v1085
    %v1087 = vsub.f32 1.0, %v1086
    %v1088 = vmul.f32 %v1085, %v1087
    %v1089 = vadd.f32 %v1085, %v1088
    %vm1090 = vweird.f32 %v1013
    %vm1091 = vweird.f32 %v1085
    %vm1092 = vmor %vm1090, %vm1091
    %v1093 = vsel %vm1092, %v1085, %v1089
    %v1094 = vand.u32 2147483647, %v1013
    %vm1095 = vcmp.eq.f32.partialorder %v1094, 8.507059e+37
    %v1096 = vand.u32 %v1013, 2147483648
    %v1097 = vor.u32 1.1754944e-38, %v1096
    %v1098 = vsel %vm1095, %v1097, %v1093
    %v1099 = vmul.f32 1.0, %v1098
    %v1100 = vrcp.pop %v1014
    %v1101 = vmul.f32 %v1014, %v1100
    %v1102 = vsub.f32 1.0, %v1101
    %v1103 = vmul.f32 %v1100, %v1102
    %v1104 = vadd.f32 %v1100, %v1103
    %vm1105 = vweird.f32 %v1014
    %vm1106 = vweird.f32 %v1100
    %vm1107 = vmor %vm1105, %vm1106
    %v1108 = vsel %vm1107, %v1100, %v1104
    %v1109 = vand.u32 2147483647, %v1014
    %vm1110 = vcmp.eq.f32.partialorder %v1109, 8.507059e+37
    %v1111 = vand.u32 %v1014, 2147483648
    %v1112 = vor.u32 1.1754944e-38, %v1111
    %v1113 = vsel %vm1110, %v1112, %v1108
    %v1114 = vmul.f32 1.0, %v1113
    %v1115 = vrcp.pop %v1015
    %v1116 = vmul.f32 %v1015, %v1115
    %v1117 = vsub.f32 1.0, %v1116
    %v1118 = vmul.f32 %v1115, %v1117
    %v1119 = vadd.f32 %v1115, %v1118
    %vm1120 = vweird.f32 %v1015
    %vm1121 = vweird.f32 %v1115
    %vm1122 = vmor %vm1120, %vm1121
    %v1123 = vsel %vm1122, %v1115, %v1119
    %v1124 = vand.u32 2147483647, %v1015
    %vm1125 = vcmp.eq.f32.partialorder %v1124, 8.507059e+37
    %v1126 = vand.u32 %v1015, 2147483648
    %v1127 = vor.u32 1.1754944e-38, %v1126
    %v1128 = vsel %vm1125, %v1127, %v1123
    %v1129 = vmul.f32 1.0, %v1128
    %v1130 = vrcp.pop %v1016
    %v1131 = vmul.f32 %v1016, %v1130
    %v1132 = vsub.f32 1.0, %v1131
    %v1133 = vmul.f32 %v1130, %v1132
    %v1134 = vadd.f32 %v1130, %v1133
    %vm1135 = vweird.f32 %v1016
    %vm1136 = vweird.f32 %v1130
    %vm1137 = vmor %vm1135, %vm1136
    %v1138 = vsel %vm1137, %v1130, %v1134
    %v1139 = vand.u32 2147483647, %v1016
    %vm1140 = vcmp.eq.f32.partialorder %v1139, 8.507059e+37
    %v1141 = vand.u32 %v1016, 2147483648
    %v1142 = vor.u32 1.1754944e-38, %v1141
    %v1143 = vsel %vm1140, %v1142, %v1138
    %v1144 = vmul.f32 1.0, %v1143
    %v1145 = vrcp.pop %v1017
    %v1146 = vmul.f32 %v1017, %v1145
    %v1147 = vsub.f32 1.0, %v1146
    %v1148 = vmul.f32 %v1145, %v1147
    %v1149 = vadd.f32 %v1145, %v1148
    %vm1150 = vweird.f32 %v1017
    %vm1151 = vweird.f32 %v1145
    %vm1152 = vmor %vm1150, %vm1151
    %v1153 = vsel %vm1152, %v1145, %v1149
    %v1154 = vand.u32 2147483647, %v1017
    %vm1155 = vcmp.eq.f32.partialorder %v1154, 8.507059e+37
    %v1156 = vand.u32 %v1017, 2147483648
    %v1157 = vor.u32 1.1754944e-38, %v1156
    %v1158 = vsel %vm1155, %v1157, %v1153
    %v1159 = vmul.f32 1.0, %v1158
    %v1160 = vrcp.pop %v1018
    %v1161 = vmul.f32 %v1018, %v1160
    %v1162 = vsub.f32 1.0, %v1161
    %v1163 = vmul.f32 %v1160, %v1162
    %v1164 = vadd.f32 %v1160, %v1163
    %vm1165 = vweird.f32 %v1018
    %vm1166 = vweird.f32 %v1160
    %vm1167 = vmor %vm1165, %vm1166
    %v1168 = vsel %vm1167, %v1160, %v1164
    %v1169 = vand.u32 2147483647, %v1018
    %vm1170 = vcmp.eq.f32.partialorder %v1169, 8.507059e+37
    %v1171 = vand.u32 %v1018, 2147483648
    %v1172 = vor.u32 1.1754944e-38, %v1171
    %v1173 = vsel %vm1170, %v1172, %v1168
    %v1174 = vmul.f32 1.0, %v1173
    %v1175 = vrcp.pop %v1019
    %v1176 = vmul.f32 %v1019, %v1175
    %v1177 = vsub.f32 1.0, %v1176
    %v1178 = vmul.f32 %v1175, %v1177
    %v1179 = vadd.f32 %v1175, %v1178
    %vm1180 = vweird.f32 %v1019
    %vm1181 = vweird.f32 %v1175
    %vm1182 = vmor %vm1180, %vm1181
    %v1183 = vsel %vm1182, %v1175, %v1179
    %v1184 = vand.u32 2147483647, %v1019
    %vm1185 = vcmp.eq.f32.partialorder %v1184, 8.507059e+37
    %v1186 = vand.u32 %v1019, 2147483648
    %v1187 = vor.u32 1.1754944e-38, %v1186
    %v1188 = vsel %vm1185, %v1187, %v1183
    %v1189 = vmul.f32 1.0, %v1188
    %v1190 = vrcp.pop %v1020
    %v1191 = vmul.f32 %v1020, %v1190
    %v1192 = vsub.f32 1.0, %v1191
    %v1193 = vmul.f32 %v1190, %v1192
    %v1194 = vadd.f32 %v1190, %v1193
    %vm1195 = vweird.f32 %v1020
    %vm1196 = vweird.f32 %v1190
    %vm1197 = vmor %vm1195, %vm1196
    %v1198 = vsel %vm1197, %v1190, %v1194
    %v1199 = vand.u32 2147483647, %v1020
    %vm1200 = vcmp.eq.f32.partialorder %v1199, 8.507059e+37
    %v1201 = vand.u32 %v1020, 2147483648
    %v1202 = vor.u32 1.1754944e-38, %v1201
    %v1203 = vsel %vm1200, %v1202, %v1198
    %v1204 = vmul.f32 1.0, %v1203
    %v1205 = vrcp.pop %v1021
    %v1206 = vmul.f32 %v1021, %v1205
    %v1207 = vsub.f32 1.0, %v1206
    %v1208 = vmul.f32 %v1205, %v1207
    %v1209 = vadd.f32 %v1205, %v1208
    %vm1210 = vweird.f32 %v1021
    %vm1211 = vweird.f32 %v1205
    %vm1212 = vmor %vm1210, %vm1211
    %v1213 = vsel %vm1212, %v1205, %v1209
    %v1214 = vand.u32 2147483647, %v1021
    %vm1215 = vcmp.eq.f32.partialorder %v1214, 8.507059e+37
    %v1216 = vand.u32 %v1021, 2147483648
    %v1217 = vor.u32 1.1754944e-38, %v1216
    %v1218 = vsel %vm1215, %v1217, %v1213
    %v1219 = vmul.f32 1.0, %v1218
    %v1220 = vrcp.pop %v1022
    %v1221 = vmul.f32 %v1022, %v1220
    %v1222 = vsub.f32 1.0, %v1221
    %v1223 = vmul.f32 %v1220, %v1222
    %v1224 = vadd.f32 %v1220, %v1223
    %vm1225 = vweird.f32 %v1022
    %vm1226 = vweird.f32 %v1220
    %vm1227 = vmor %vm1225, %vm1226
    %v1228 = vsel %vm1227, %v1220, %v1224
    %v1229 = vand.u32 2147483647, %v1022
    %vm1230 = vcmp.eq.f32.partialorder %v1229, 8.507059e+37
    %v1231 = vand.u32 %v1022, 2147483648
    %v1232 = vor.u32 1.1754944e-38, %v1231
    %v1233 = vsel %vm1230, %v1232, %v1228
    %v1234 = vmul.f32 1.0, %v1233
    %v1235 = vrcp.pop %v1023
    %v1236 = vmul.f32 %v1023, %v1235
    %v1237 = vsub.f32 1.0, %v1236
    %v1238 = vmul.f32 %v1235, %v1237
    %v1239 = vadd.f32 %v1235, %v1238
    %vm1240 = vweird.f32 %v1023
    %vm1241 = vweird.f32 %v1235
    %vm1242 = vmor %vm1240, %vm1241
    %v1243 = vsel %vm1242, %v1235, %v1239
    %v1244 = vand.u32 2147483647, %v1023
    %vm1245 = vcmp.eq.f32.partialorder %v1244, 8.507059e+37
    %v1246 = vand.u32 %v1023, 2147483648
    %v1247 = vor.u32 1.1754944e-38, %v1246
    %v1248 = vsel %vm1245, %v1247, %v1243
    %v1249 = vmul.f32 1.0, %v1248
    %v1250 = vrcp.pop %v1024
    %v1251 = vmul.f32 %v1024, %v1250
    %v1252 = vsub.f32 1.0, %v1251
    %v1253 = vmul.f32 %v1250, %v1252
    %v1254 = vadd.f32 %v1250, %v1253
    %vm1255 = vweird.f32 %v1024
    %vm1256 = vweird.f32 %v1250
    %vm1257 = vmor %vm1255, %vm1256
    %v1258 = vsel %vm1257, %v1250, %v1254
    %v1259 = vand.u32 2147483647, %v1024
    %vm1260 = vcmp.eq.f32.partialorder %v1259, 8.507059e+37
    %v1261 = vand.u32 %v1024, 2147483648
    %v1262 = vor.u32 1.1754944e-38, %v1261
    %v1263 = vsel %vm1260, %v1262, %v1258
    %v1264 = vmul.f32 1.0, %v1263
    %v1265 = vmul.f32 %v895, %v1039
    %v1266 = vmul.f32 %v898, %v1054
    %v1267 = vmul.f32 %v901, %v1069
    %v1268 = vmul.f32 %v904, %v1084
    %v1269 = vmul.f32 %v907, %v1099
    %v1270 = vmul.f32 %v910, %v1114
    %v1271 = vmul.f32 %v913, %v1129
    %v1272 = vmul.f32 %v916, %v1144
    %v1273 = vmul.f32 %v919, %v1159
    %v1274 = vmul.f32 %v922, %v1174
    %v1275 = vmul.f32 %v925, %v1189
    %v1276 = vmul.f32 %v928, %v1204
    %v1277 = vmul.f32 %v931, %v1219
    %v1278 = vmul.f32 %v934, %v1234
    %v1279 = vmul.f32 %v937, %v1249
    %v1280 = vmul.f32 %v940, %v1264
    %v1281 = vsel %vm258, %v1265, -1e+30
    %v1282 = vsel %vm259, %v1266, -1e+30
    %v1283 = vsel %vm260, %v1267, -1e+30
    %v1284 = vsel %vm261, %v1268, -1e+30
    %v1285 = vsel %vm262, %v1269, -1e+30
    %v1286 = vsel %vm263, %v1270, -1e+30
    %v1287 = vsel %vm264, %v1271, -1e+30
    %v1288 = vsel %vm265, %v1272, -1e+30
    %v1289 = vsel %vm266, %v1273, -1e+30
    %v1290 = vsel %vm267, %v1274, -1e+30
    %v1291 = vsel %vm268, %v1275, -1e+30
    %v1292 = vsel %vm269, %v1276, -1e+30
    %v1293 = vsel %vm270, %v1277, -1e+30
    %v1294 = vsel %vm271, %v1278, -1e+30
    %v1295 = vsel %vm272, %v1279, -1e+30
    %v1296 = vsel %vm273, %v1280, -1e+30
    %1297 = vmax.xlane.f32.xlu0 %v1281
    %v1298 = vpop.xlane.xlu0 %1297
    %1299 = vmax.xlane.f32.xlu0 %v1282
    %v1300 = vpop.xlane.xlu0 %1299
    %1301 = vmax.xlane.f32.xlu0 %v1283
    %v1302 = vpop.xlane.xlu0 %1301
    %1303 = vmax.xlane.f32.xlu0 %v1284
    %v1304 = vpop.xlane.xlu0 %1303
    %1305 = vmax.xlane.f32.xlu0 %v1285
    %v1306 = vpop.xlane.xlu0 %1305
    %1307 = vmax.xlane.f32.xlu0 %v1286
    %v1308 = vpop.xlane.xlu0 %1307
    %1309 = vmax.xlane.f32.xlu0 %v1287
    %v1310 = vpop.xlane.xlu0 %1309
    %1311 = vmax.xlane.f32.xlu0 %v1288
    %v1312 = vpop.xlane.xlu0 %1311
    %1313 = vmax.xlane.f32.xlu0 %v1289
    %v1314 = vpop.xlane.xlu0 %1313
    %1315 = vmax.xlane.f32.xlu0 %v1290
    %v1316 = vpop.xlane.xlu0 %1315
    %1317 = vmax.xlane.f32.xlu0 %v1291
    %v1318 = vpop.xlane.xlu0 %1317
    %1319 = vmax.xlane.f32.xlu0 %v1292
    %v1320 = vpop.xlane.xlu0 %1319
    %1321 = vmax.xlane.f32.xlu0 %v1293
    %v1322 = vpop.xlane.xlu0 %1321
    %1323 = vmax.xlane.f32.xlu0 %v1294
    %v1324 = vpop.xlane.xlu0 %1323
    %1325 = vmax.xlane.f32.xlu0 %v1295
    %v1326 = vpop.xlane.xlu0 %1325
    %1327 = vmax.xlane.f32.xlu0 %v1296
    %v1328 = vpop.xlane.xlu0 %1327
    %v1329 = vsub.f32 %v1281, %v1298
    %v1330 = vsub.f32 %v1282, %v1300
    %v1331 = vsub.f32 %v1283, %v1302
    %v1332 = vsub.f32 %v1284, %v1304
    %v1333 = vsub.f32 %v1285, %v1306
    %v1334 = vsub.f32 %v1286, %v1308
    %v1335 = vsub.f32 %v1287, %v1310
    %v1336 = vsub.f32 %v1288, %v1312
    %v1337 = vsub.f32 %v1289, %v1314
    %v1338 = vsub.f32 %v1290, %v1316
    %v1339 = vsub.f32 %v1291, %v1318
    %v1340 = vsub.f32 %v1292, %v1320
    %v1341 = vsub.f32 %v1293, %v1322
    %v1342 = vsub.f32 %v1294, %v1324
    %v1343 = vsub.f32 %v1295, %v1326
    %v1344 = vsub.f32 %v1296, %v1328
    %v1345 = vmul.f32 %v1329, 1.442695
    %v1346 = vpow.pop %v1345
    %v1347 = vmul.f32 %v1330, 1.442695
    %v1348 = vpow.pop %v1347
    %v1349 = vmul.f32 %v1331, 1.442695
    %v1350 = vpow.pop %v1349
    %v1351 = vmul.f32 %v1332, 1.442695
    %v1352 = vpow.pop %v1351
    %v1353 = vmul.f32 %v1333, 1.442695
    %v1354 = vpow.pop %v1353
    %v1355 = vmul.f32 %v1334, 1.442695
    %v1356 = vpow.pop %v1355
    %v1357 = vmul.f32 %v1335, 1.442695
    %v1358 = vpow.pop %v1357
    %v1359 = vmul.f32 %v1336, 1.442695
    %v1360 = vpow.pop %v1359
    %v1361 = vmul.f32 %v1337, 1.442695
    %v1362 = vpow.pop %v1361
    %v1363 = vmul.f32 %v1338, 1.442695
    %v1364 = vpow.pop %v1363
    %v1365 = vmul.f32 %v1339, 1.442695
    %v1366 = vpow.pop %v1365
    %v1367 = vmul.f32 %v1340, 1.442695
    %v1368 = vpow.pop %v1367
    %v1369 = vmul.f32 %v1341, 1.442695
    %v1370 = vpow.pop %v1369
    %v1371 = vmul.f32 %v1342, 1.442695
    %v1372 = vpow.pop %v1371
    %v1373 = vmul.f32 %v1343, 1.442695
    %v1374 = vpow.pop %v1373
    %v1375 = vmul.f32 %v1344, 1.442695
    %v1376 = vpow.pop %v1375
    %v1377 = vmul.f32 %v1346, %v242
    %v1378 = vmul.f32 %v1348, %v243
    %v1379 = vmul.f32 %v1350, %v244
    %v1380 = vmul.f32 %v1352, %v245
    %v1381 = vmul.f32 %v1354, %v246
    %v1382 = vmul.f32 %v1356, %v247
    %v1383 = vmul.f32 %v1358, %v248
    %v1384 = vmul.f32 %v1360, %v249
    %v1385 = vmul.f32 %v1362, %v250
    %v1386 = vmul.f32 %v1364, %v251
    %v1387 = vmul.f32 %v1366, %v252
    %v1388 = vmul.f32 %v1368, %v253
    %v1389 = vmul.f32 %v1370, %v254
    %v1390 = vmul.f32 %v1372, %v255
    %v1391 = vmul.f32 %v1374, %v256
    %v1392 = vmul.f32 %v1376, %v257
    %1393 = vadd.xlane.f32.xlu0 %v1377
    %v1394 = vpop.xlane.xlu0 %1393
    %1395 = vadd.xlane.f32.xlu0 %v1378
    %v1396 = vpop.xlane.xlu0 %1395
    %1397 = vadd.xlane.f32.xlu0 %v1379
    %v1398 = vpop.xlane.xlu0 %1397
    %1399 = vadd.xlane.f32.xlu0 %v1380
    %v1400 = vpop.xlane.xlu0 %1399
    %1401 = vadd.xlane.f32.xlu0 %v1381
    %v1402 = vpop.xlane.xlu0 %1401
    %1403 = vadd.xlane.f32.xlu0 %v1382
    %v1404 = vpop.xlane.xlu0 %1403
    %1405 = vadd.xlane.f32.xlu0 %v1383
    %v1406 = vpop.xlane.xlu0 %1405
    %1407 = vadd.xlane.f32.xlu0 %v1384
    %v1408 = vpop.xlane.xlu0 %1407
    %1409 = vadd.xlane.f32.xlu0 %v1385
    %v1410 = vpop.xlane.xlu0 %1409
    %1411 = vadd.xlane.f32.xlu0 %v1386
    %v1412 = vpop.xlane.xlu0 %1411
    %1413 = vadd.xlane.f32.xlu0 %v1387
    %v1414 = vpop.xlane.xlu0 %1413
    %1415 = vadd.xlane.f32.xlu0 %v1388
    %v1416 = vpop.xlane.xlu0 %1415
    %1417 = vadd.xlane.f32.xlu0 %v1389
    %v1418 = vpop.xlane.xlu0 %1417
    %1419 = vadd.xlane.f32.xlu0 %v1390
    %v1420 = vpop.xlane.xlu0 %1419
    %1421 = vadd.xlane.f32.xlu0 %v1391
    %v1422 = vpop.xlane.xlu0 %1421
    %1423 = vadd.xlane.f32.xlu0 %v1392
    %v1424 = vpop.xlane.xlu0 %1423
    %v1425 = vmax.f32 %v1394, 1e-16
    %v1426 = vmax.f32 %v1396, 1e-16
    %v1427 = vmax.f32 %v1398, 1e-16
    %v1428 = vmax.f32 %v1400, 1e-16
    %v1429 = vmax.f32 %v1402, 1e-16
    %v1430 = vmax.f32 %v1404, 1e-16
    %v1431 = vmax.f32 %v1406, 1e-16
    %v1432 = vmax.f32 %v1408, 1e-16
    %v1433 = vmax.f32 %v1410, 1e-16
    %v1434 = vmax.f32 %v1412, 1e-16
    %v1435 = vmax.f32 %v1414, 1e-16
    %v1436 = vmax.f32 %v1416, 1e-16
    %v1437 = vmax.f32 %v1418, 1e-16
    %v1438 = vmax.f32 %v1420, 1e-16
    %v1439 = vmax.f32 %v1422, 1e-16
    %v1440 = vmax.f32 %v1424, 1e-16
    %v1441 = vrcp.pop %v1425
    %v1442 = vmul.f32 %v1425, %v1441
    %v1443 = vsub.f32 1.0, %v1442
    %v1444 = vmul.f32 %v1441, %v1443
    %v1445 = vadd.f32 %v1441, %v1444
    %vm1446 = vweird.f32 %v1425
    %vm1447 = vweird.f32 %v1441
    %vm1448 = vmor %vm1446, %vm1447
    %v1449 = vsel %vm1448, %v1441, %v1445
    %v1450 = vand.u32 2147483647, %v1425
    %vm1451 = vcmp.eq.f32.partialorder %v1450, 8.507059e+37
    %v1452 = vand.u32 %v1425, 2147483648
    %v1453 = vor.u32 1.1754944e-38, %v1452
    %v1454 = vsel %vm1451, %v1453, %v1449
    %v1455 = vrcp.pop %v1426
    %v1456 = vmul.f32 %v1426, %v1455
    %v1457 = vsub.f32 1.0, %v1456
    %v1458 = vmul.f32 %v1455, %v1457
    %v1459 = vadd.f32 %v1455, %v1458
    %vm1460 = vweird.f32 %v1426
    %vm1461 = vweird.f32 %v1455
    %vm1462 = vmor %vm1460, %vm1461
    %v1463 = vsel %vm1462, %v1455, %v1459
    %v1464 = vand.u32 2147483647, %v1426
    %vm1465 = vcmp.eq.f32.partialorder %v1464, 8.507059e+37
    %v1466 = vand.u32 %v1426, 2147483648
    %v1467 = vor.u32 1.1754944e-38, %v1466
    %v1468 = vsel %vm1465, %v1467, %v1463
    %v1469 = vrcp.pop %v1427
    %v1470 = vmul.f32 %v1427, %v1469
    %v1471 = vsub.f32 1.0, %v1470
    %v1472 = vmul.f32 %v1469, %v1471
    %v1473 = vadd.f32 %v1469, %v1472
    %vm1474 = vweird.f32 %v1427
    %vm1475 = vweird.f32 %v1469
    %vm1476 = vmor %vm1474, %vm1475
    %v1477 = vsel %vm1476, %v1469, %v1473
    %v1478 = vand.u32 2147483647, %v1427
    %vm1479 = vcmp.eq.f32.partialorder %v1478, 8.507059e+37
    %v1480 = vand.u32 %v1427, 2147483648
    %v1481 = vor.u32 1.1754944e-38, %v1480
    %v1482 = vsel %vm1479, %v1481, %v1477
    %v1483 = vrcp.pop %v1428
    %v1484 = vmul.f32 %v1428, %v1483
    %v1485 = vsub.f32 1.0, %v1484
    %v1486 = vmul.f32 %v1483, %v1485
    %v1487 = vadd.f32 %v1483, %v1486
    %vm1488 = vweird.f32 %v1428
    %vm1489 = vweird.f32 %v1483
    %vm1490 = vmor %vm1488, %vm1489
    %v1491 = vsel %vm1490, %v1483, %v1487
    %v1492 = vand.u32 2147483647, %v1428
    %vm1493 = vcmp.eq.f32.partialorder %v1492, 8.507059e+37
    %v1494 = vand.u32 %v1428, 2147483648
    %v1495 = vor.u32 1.1754944e-38, %v1494
    %v1496 = vsel %vm1493, %v1495, %v1491
    %v1497 = vrcp.pop %v1429
    %v1498 = vmul.f32 %v1429, %v1497
    %v1499 = vsub.f32 1.0, %v1498
    %v1500 = vmul.f32 %v1497, %v1499
    %v1501 = vadd.f32 %v1497, %v1500
    %vm1502 = vweird.f32 %v1429
    %vm1503 = vweird.f32 %v1497
    %vm1504 = vmor %vm1502, %vm1503
    %v1505 = vsel %vm1504, %v1497, %v1501
    %v1506 = vand.u32 2147483647, %v1429
    %vm1507 = vcmp.eq.f32.partialorder %v1506, 8.507059e+37
    %v1508 = vand.u32 %v1429, 2147483648
    %v1509 = vor.u32 1.1754944e-38, %v1508
    %v1510 = vsel %vm1507, %v1509, %v1505
    %v1511 = vrcp.pop %v1430
    %v1512 = vmul.f32 %v1430, %v1511
    %v1513 = vsub.f32 1.0, %v1512
    %v1514 = vmul.f32 %v1511, %v1513
    %v1515 = vadd.f32 %v1511, %v1514
    %vm1516 = vweird.f32 %v1430
    %vm1517 = vweird.f32 %v1511
    %vm1518 = vmor %vm1516, %vm1517
    %v1519 = vsel %vm1518, %v1511, %v1515
    %v1520 = vand.u32 2147483647, %v1430
    %vm1521 = vcmp.eq.f32.partialorder %v1520, 8.507059e+37
    %v1522 = vand.u32 %v1430, 2147483648
    %v1523 = vor.u32 1.1754944e-38, %v1522
    %v1524 = vsel %vm1521, %v1523, %v1519
    %v1525 = vrcp.pop %v1431
    %v1526 = vmul.f32 %v1431, %v1525
    %v1527 = vsub.f32 1.0, %v1526
    %v1528 = vmul.f32 %v1525, %v1527
    %v1529 = vadd.f32 %v1525, %v1528
    %vm1530 = vweird.f32 %v1431
    %vm1531 = vweird.f32 %v1525
    %vm1532 = vmor %vm1530, %vm1531
    %v1533 = vsel %vm1532, %v1525, %v1529
    %v1534 = vand.u32 2147483647, %v1431
    %vm1535 = vcmp.eq.f32.partialorder %v1534, 8.507059e+37
    %v1536 = vand.u32 %v1431, 2147483648
    %v1537 = vor.u32 1.1754944e-38, %v1536
    %v1538 = vsel %vm1535, %v1537, %v1533
    %v1539 = vrcp.pop %v1432
    %v1540 = vmul.f32 %v1432, %v1539
    %v1541 = vsub.f32 1.0, %v1540
    %v1542 = vmul.f32 %v1539, %v1541
    %v1543 = vadd.f32 %v1539, %v1542
    %vm1544 = vweird.f32 %v1432
    %vm1545 = vweird.f32 %v1539
    %vm1546 = vmor %vm1544, %vm1545
    %v1547 = vsel %vm1546, %v1539, %v1543
    %v1548 = vand.u32 2147483647, %v1432
    %vm1549 = vcmp.eq.f32.partialorder %v1548, 8.507059e+37
    %v1550 = vand.u32 %v1432, 2147483648
    %v1551 = vor.u32 1.1754944e-38, %v1550
    %v1552 = vsel %vm1549, %v1551, %v1547
    %v1553 = vrcp.pop %v1433
    %v1554 = vmul.f32 %v1433, %v1553
    %v1555 = vsub.f32 1.0, %v1554
    %v1556 = vmul.f32 %v1553, %v1555
    %v1557 = vadd.f32 %v1553, %v1556
    %vm1558 = vweird.f32 %v1433
    %vm1559 = vweird.f32 %v1553
    %vm1560 = vmor %vm1558, %vm1559
    %v1561 = vsel %vm1560, %v1553, %v1557
    %v1562 = vand.u32 2147483647, %v1433
    %vm1563 = vcmp.eq.f32.partialorder %v1562, 8.507059e+37
    %v1564 = vand.u32 %v1433, 2147483648
    %v1565 = vor.u32 1.1754944e-38, %v1564
    %v1566 = vsel %vm1563, %v1565, %v1561
    %v1567 = vrcp.pop %v1434
    %v1568 = vmul.f32 %v1434, %v1567
    %v1569 = vsub.f32 1.0, %v1568
    %v1570 = vmul.f32 %v1567, %v1569
    %v1571 = vadd.f32 %v1567, %v1570
    %vm1572 = vweird.f32 %v1434
    %vm1573 = vweird.f32 %v1567
    %vm1574 = vmor %vm1572, %vm1573
    %v1575 = vsel %vm1574, %v1567, %v1571
    %v1576 = vand.u32 2147483647, %v1434
    %vm1577 = vcmp.eq.f32.partialorder %v1576, 8.507059e+37
    %v1578 = vand.u32 %v1434, 2147483648
    %v1579 = vor.u32 1.1754944e-38, %v1578
    %v1580 = vsel %vm1577, %v1579, %v1575
    %v1581 = vrcp.pop %v1435
    %v1582 = vmul.f32 %v1435, %v1581
    %v1583 = vsub.f32 1.0, %v1582
    %v1584 = vmul.f32 %v1581, %v1583
    %v1585 = vadd.f32 %v1581, %v1584
    %vm1586 = vweird.f32 %v1435
    %vm1587 = vweird.f32 %v1581
    %vm1588 = vmor %vm1586, %vm1587
    %v1589 = vsel %vm1588, %v1581, %v1585
    %v1590 = vand.u32 2147483647, %v1435
    %vm1591 = vcmp.eq.f32.partialorder %v1590, 8.507059e+37
    %v1592 = vand.u32 %v1435, 2147483648
    %v1593 = vor.u32 1.1754944e-38, %v1592
    %v1594 = vsel %vm1591, %v1593, %v1589
    %v1595 = vrcp.pop %v1436
    %v1596 = vmul.f32 %v1436, %v1595
    %v1597 = vsub.f32 1.0, %v1596
    %v1598 = vmul.f32 %v1595, %v1597
    %v1599 = vadd.f32 %v1595, %v1598
    %vm1600 = vweird.f32 %v1436
    %vm1601 = vweird.f32 %v1595
    %vm1602 = vmor %vm1600, %vm1601
    %v1603 = vsel %vm1602, %v1595, %v1599
    %v1604 = vand.u32 2147483647, %v1436
    %vm1605 = vcmp.eq.f32.partialorder %v1604, 8.507059e+37
    %v1606 = vand.u32 %v1436, 2147483648
    %v1607 = vor.u32 1.1754944e-38, %v1606
    %v1608 = vsel %vm1605, %v1607, %v1603
    %v1609 = vrcp.pop %v1437
    %v1610 = vmul.f32 %v1437, %v1609
    %v1611 = vsub.f32 1.0, %v1610
    %v1612 = vmul.f32 %v1609, %v1611
    %v1613 = vadd.f32 %v1609, %v1612
    %vm1614 = vweird.f32 %v1437
    %vm1615 = vweird.f32 %v1609
    %vm1616 = vmor %vm1614, %vm1615
    %v1617 = vsel %vm1616, %v1609, %v1613
    %v1618 = vand.u32 2147483647, %v1437
    %vm1619 = vcmp.eq.f32.partialorder %v1618, 8.507059e+37
    %v1620 = vand.u32 %v1437, 2147483648
    %v1621 = vor.u32 1.1754944e-38, %v1620
    %v1622 = vsel %vm1619, %v1621, %v1617
    %v1623 = vrcp.pop %v1438
    %v1624 = vmul.f32 %v1438, %v1623
    %v1625 = vsub.f32 1.0, %v1624
    %v1626 = vmul.f32 %v1623, %v1625
    %v1627 = vadd.f32 %v1623, %v1626
    %vm1628 = vweird.f32 %v1438
    %vm1629 = vweird.f32 %v1623
    %vm1630 = vmor %vm1628, %vm1629
    %v1631 = vsel %vm1630, %v1623, %v1627
    %v1632 = vand.u32 2147483647, %v1438
    %vm1633 = vcmp.eq.f32.partialorder %v1632, 8.507059e+37
    %v1634 = vand.u32 %v1438, 2147483648
    %v1635 = vor.u32 1.1754944e-38, %v1634
    %v1636 = vsel %vm1633, %v1635, %v1631
    %v1637 = vrcp.pop %v1439
    %v1638 = vmul.f32 %v1439, %v1637
    %v1639 = vsub.f32 1.0, %v1638
    %v1640 = vmul.f32 %v1637, %v1639
    %v1641 = vadd.f32 %v1637, %v1640
    %vm1642 = vweird.f32 %v1439
    %vm1643 = vweird.f32 %v1637
    %vm1644 = vmor %vm1642, %vm1643
    %v1645 = vsel %vm1644, %v1637, %v1641
    %v1646 = vand.u32 2147483647, %v1439
    %vm1647 = vcmp.eq.f32.partialorder %v1646, 8.507059e+37
    %v1648 = vand.u32 %v1439, 2147483648
    %v1649 = vor.u32 1.1754944e-38, %v1648
    %v1650 = vsel %vm1647, %v1649, %v1645
    %v1651 = vrcp.pop %v1440
    %v1652 = vmul.f32 %v1440, %v1651
    %v1653 = vsub.f32 1.0, %v1652
    %v1654 = vmul.f32 %v1651, %v1653
    %v1655 = vadd.f32 %v1651, %v1654
    %vm1656 = vweird.f32 %v1440
    %vm1657 = vweird.f32 %v1651
    %vm1658 = vmor %vm1656, %vm1657
    %v1659 = vsel %vm1658, %v1651, %v1655
    %v1660 = vand.u32 2147483647, %v1440
    %vm1661 = vcmp.eq.f32.partialorder %v1660, 8.507059e+37
    %v1662 = vand.u32 %v1440, 2147483648
    %v1663 = vor.u32 1.1754944e-38, %v1662
    %v1664 = vsel %vm1661, %v1663, %v1659
    %v1665 = vmul.f32 %v1377, %v1454
    %v1666 = vmul.f32 %v1378, %v1468
    %v1667 = vmul.f32 %v1379, %v1482
    %v1668 = vmul.f32 %v1380, %v1496
    %v1669 = vmul.f32 %v1381, %v1510
    %v1670 = vmul.f32 %v1382, %v1524
    %v1671 = vmul.f32 %v1383, %v1538
    %v1672 = vmul.f32 %v1384, %v1552
    %v1673 = vmul.f32 %v1385, %v1566
    %v1674 = vmul.f32 %v1386, %v1580
    %v1675 = vmul.f32 %v1387, %v1594
    %v1676 = vmul.f32 %v1388, %v1608
    %v1677 = vmul.f32 %v1389, %v1622
    %v1678 = vmul.f32 %v1390, %v1636
    %v1679 = vmul.f32 %v1391, %v1650
    %v1680 = vmul.f32 %v1392, %v1664
    %v1682 = vperm.slane %v680, 0
    %1684 = vmatpush.msra.mxu0 %v762
    %1685 = vmatpush.msra.mxu0 %v759
    %1686 = vmatpush.msra.mxu0 %v756
    %1687 = vmatpush.msra.mxu0 %v753
    %1688 = vmatpush.msra.mxu0 %v750
    %1689 = vmatpush.msra.mxu0 %v747
    %1690 = vmatpush.msra.mxu0 %v744
    %1691 = vmatpush.msra.mxu0 %v741
    %1692 = vmatpush.msra.mxu0 %v738
    %1693 = vmatpush.msra.mxu0 %v735
    %1694 = vmatpush.msra.mxu0 %v732
    %1695 = vmatpush.msra.mxu0 %v729
    %1696 = vmatpush.msra.mxu0 %v726
    %1697 = vmatpush.msra.mxu0 %v723
    %1698 = vmatpush.msra.mxu0 %v720
    %1699 = vmatpush.msra.mxu0 %v717
    %1700 = vmatmul.f32.gmra.mxu0 %v1665
    %v1701 = vpop.f32.mrf.mxu0
    %v1702 = vadd.f32 %v1682, %v1701
    %1703 = vmatmul.f32.gmra.mxu0 %v1666
    %v1704 = vpop.f32.mrf.mxu0
    %v1705 = vadd.f32 %v1682, %v1704
    %1706 = vmatmul.f32.gmra.mxu0 %v1667
    %v1707 = vpop.f32.mrf.mxu0
    %v1708 = vadd.f32 %v1682, %v1707
    %1709 = vmatmul.f32.gmra.mxu0 %v1668
    %v1710 = vpop.f32.mrf.mxu0
    %v1711 = vadd.f32 %v1682, %v1710
    %1712 = vmatmul.f32.gmra.mxu0 %v1669
    %v1713 = vpop.f32.mrf.mxu0
    %v1714 = vadd.f32 %v1682, %v1713
    %1715 = vmatmul.f32.gmra.mxu0 %v1670
    %v1716 = vpop.f32.mrf.mxu0
    %v1717 = vadd.f32 %v1682, %v1716
    %1718 = vmatmul.f32.gmra.mxu0 %v1671
    %v1719 = vpop.f32.mrf.mxu0
    %v1720 = vadd.f32 %v1682, %v1719
    %1721 = vmatmul.f32.gmra.mxu0 %v1672
    %v1722 = vpop.f32.mrf.mxu0
    %v1723 = vadd.f32 %v1682, %v1722
    %1724 = vmatmul.f32.gmra.mxu0 %v1673
    %v1725 = vpop.f32.mrf.mxu0
    %v1726 = vadd.f32 %v1682, %v1725
    %1727 = vmatmul.f32.gmra.mxu0 %v1674
    %v1728 = vpop.f32.mrf.mxu0
    %v1729 = vadd.f32 %v1682, %v1728
    %1730 = vmatmul.f32.gmra.mxu0 %v1675
    %v1731 = vpop.f32.mrf.mxu0
    %v1732 = vadd.f32 %v1682, %v1731
    %1733 = vmatmul.f32.gmra.mxu0 %v1676
    %v1734 = vpop.f32.mrf.mxu0
    %v1735 = vadd.f32 %v1682, %v1734
    %1736 = vmatmul.f32.gmra.mxu0 %v1677
    %v1737 = vpop.f32.mrf.mxu0
    %v1738 = vadd.f32 %v1682, %v1737
    %1739 = vmatmul.f32.gmra.mxu0 %v1678
    %v1740 = vpop.f32.mrf.mxu0
    %v1741 = vadd.f32 %v1682, %v1740
    %1742 = vmatmul.f32.gmra.mxu0 %v1679
    %v1743 = vpop.f32.mrf.mxu0
    %v1744 = vadd.f32 %v1682, %v1743
    %1745 = vmatmul.f32.gmra.mxu0 %v1680
    %v1746 = vpop.f32.mrf.mxu0
    %v1747 = vadd.f32 %v1682, %v1746
    %1748 = vdwg.mxu0
    %v1749 = vmul.f32 %v1702, %v1702
    %v1750 = vmul.f32 %v1705, %v1705
    %v1751 = vmul.f32 %v1708, %v1708
    %v1752 = vmul.f32 %v1711, %v1711
    %v1753 = vmul.f32 %v1714, %v1714
    %v1754 = vmul.f32 %v1717, %v1717
    %v1755 = vmul.f32 %v1720, %v1720
    %v1756 = vmul.f32 %v1723, %v1723
    %v1757 = vmul.f32 %v1726, %v1726
    %v1758 = vmul.f32 %v1729, %v1729
    %v1759 = vmul.f32 %v1732, %v1732
    %v1760 = vmul.f32 %v1735, %v1735
    %v1761 = vmul.f32 %v1738, %v1738
    %v1762 = vmul.f32 %v1741, %v1741
    %v1763 = vmul.f32 %v1744, %v1744
    %v1764 = vmul.f32 %v1747, %v1747
    %1765 = vadd.xlane.f32.xlu0 %v1749
    %v1766 = vpop.xlane.xlu0 %1765
    %1767 = vadd.xlane.f32.xlu0 %v1750
    %v1768 = vpop.xlane.xlu0 %1767
    %1769 = vadd.xlane.f32.xlu0 %v1751
    %v1770 = vpop.xlane.xlu0 %1769
    %1771 = vadd.xlane.f32.xlu0 %v1752
    %v1772 = vpop.xlane.xlu0 %1771
    %1773 = vadd.xlane.f32.xlu0 %v1753
    %v1774 = vpop.xlane.xlu0 %1773
    %1775 = vadd.xlane.f32.xlu0 %v1754
    %v1776 = vpop.xlane.xlu0 %1775
    %1777 = vadd.xlane.f32.xlu0 %v1755
    %v1778 = vpop.xlane.xlu0 %1777
    %1779 = vadd.xlane.f32.xlu0 %v1756
    %v1780 = vpop.xlane.xlu0 %1779
    %1781 = vadd.xlane.f32.xlu0 %v1757
    %v1782 = vpop.xlane.xlu0 %1781
    %1783 = vadd.xlane.f32.xlu0 %v1758
    %v1784 = vpop.xlane.xlu0 %1783
    %1785 = vadd.xlane.f32.xlu0 %v1759
    %v1786 = vpop.xlane.xlu0 %1785
    %1787 = vadd.xlane.f32.xlu0 %v1760
    %v1788 = vpop.xlane.xlu0 %1787
    %1789 = vadd.xlane.f32.xlu0 %v1761
    %v1790 = vpop.xlane.xlu0 %1789
    %1791 = vadd.xlane.f32.xlu0 %v1762
    %v1792 = vpop.xlane.xlu0 %1791
    %1793 = vadd.xlane.f32.xlu0 %v1763
    %v1794 = vpop.xlane.xlu0 %1793
    %1795 = vadd.xlane.f32.xlu0 %v1764
    %v1796 = vpop.xlane.xlu0 %1795
    %v1797 = vmax.f32 %v1766, 1e-24
    %v1798 = vmax.f32 %v1768, 1e-24
    %v1799 = vmax.f32 %v1770, 1e-24
    %v1800 = vmax.f32 %v1772, 1e-24
    %v1801 = vmax.f32 %v1774, 1e-24
    %v1802 = vmax.f32 %v1776, 1e-24
    %v1803 = vmax.f32 %v1778, 1e-24
    %v1804 = vmax.f32 %v1780, 1e-24
    %v1805 = vmax.f32 %v1782, 1e-24
    %v1806 = vmax.f32 %v1784, 1e-24
    %v1807 = vmax.f32 %v1786, 1e-24
    %v1808 = vmax.f32 %v1788, 1e-24
    %v1809 = vmax.f32 %v1790, 1e-24
    %v1810 = vmax.f32 %v1792, 1e-24
    %v1811 = vmax.f32 %v1794, 1e-24
    %v1812 = vmax.f32 %v1796, 1e-24
    %v1813 = vrsqrt.pop %v1797
    %v1814 = vmul.f32 %v1813, %v1797
    %v1815 = vmul.f32 %v1814, %v1813
    %v1816 = vmul.f32 0.5, %v1815
    %v1817 = vsub.f32 1.5, %v1816
    %v1818 = vmul.f32 %v1813, %v1817
    %vm1819 = vweird.f32 %v1797
    %vm1820 = vweird.f32 %v1813
    %vm1821 = vmor %vm1819, %vm1820
    %v1822 = vsel %vm1821, %v1813, %v1818
    %v1823 = vrsqrt.pop %v1798
    %v1824 = vmul.f32 %v1823, %v1798
    %v1825 = vmul.f32 %v1824, %v1823
    %v1826 = vmul.f32 0.5, %v1825
    %v1827 = vsub.f32 1.5, %v1826
    %v1828 = vmul.f32 %v1823, %v1827
    %vm1829 = vweird.f32 %v1798
    %vm1830 = vweird.f32 %v1823
    %vm1831 = vmor %vm1829, %vm1830
    %v1832 = vsel %vm1831, %v1823, %v1828
    %v1833 = vrsqrt.pop %v1799
    %v1834 = vmul.f32 %v1833, %v1799
    %v1835 = vmul.f32 %v1834, %v1833
    %v1836 = vmul.f32 0.5, %v1835
    %v1837 = vsub.f32 1.5, %v1836
    %v1838 = vmul.f32 %v1833, %v1837
    %vm1839 = vweird.f32 %v1799
    %vm1840 = vweird.f32 %v1833
    %vm1841 = vmor %vm1839, %vm1840
    %v1842 = vsel %vm1841, %v1833, %v1838
    %v1843 = vrsqrt.pop %v1800
    %v1844 = vmul.f32 %v1843, %v1800
    %v1845 = vmul.f32 %v1844, %v1843
    %v1846 = vmul.f32 0.5, %v1845
    %v1847 = vsub.f32 1.5, %v1846
    %v1848 = vmul.f32 %v1843, %v1847
    %vm1849 = vweird.f32 %v1800
    %vm1850 = vweird.f32 %v1843
    %vm1851 = vmor %vm1849, %vm1850
    %v1852 = vsel %vm1851, %v1843, %v1848
    %v1853 = vrsqrt.pop %v1801
    %v1854 = vmul.f32 %v1853, %v1801
    %v1855 = vmul.f32 %v1854, %v1853
    %v1856 = vmul.f32 0.5, %v1855
    %v1857 = vsub.f32 1.5, %v1856
    %v1858 = vmul.f32 %v1853, %v1857
    %vm1859 = vweird.f32 %v1801
    %vm1860 = vweird.f32 %v1853
    %vm1861 = vmor %vm1859, %vm1860
    %v1862 = vsel %vm1861, %v1853, %v1858
    %v1863 = vrsqrt.pop %v1802
    %v1864 = vmul.f32 %v1863, %v1802
    %v1865 = vmul.f32 %v1864, %v1863
    %v1866 = vmul.f32 0.5, %v1865
    %v1867 = vsub.f32 1.5, %v1866
    %v1868 = vmul.f32 %v1863, %v1867
    %vm1869 = vweird.f32 %v1802
    %vm1870 = vweird.f32 %v1863
    %vm1871 = vmor %vm1869, %vm1870
    %v1872 = vsel %vm1871, %v1863, %v1868
    %v1873 = vrsqrt.pop %v1803
    %v1874 = vmul.f32 %v1873, %v1803
    %v1875 = vmul.f32 %v1874, %v1873
    %v1876 = vmul.f32 0.5, %v1875
    %v1877 = vsub.f32 1.5, %v1876
    %v1878 = vmul.f32 %v1873, %v1877
    %vm1879 = vweird.f32 %v1803
    %vm1880 = vweird.f32 %v1873
    %vm1881 = vmor %vm1879, %vm1880
    %v1882 = vsel %vm1881, %v1873, %v1878
    %v1883 = vrsqrt.pop %v1804
    %v1884 = vmul.f32 %v1883, %v1804
    %v1885 = vmul.f32 %v1884, %v1883
    %v1886 = vmul.f32 0.5, %v1885
    %v1887 = vsub.f32 1.5, %v1886
    %v1888 = vmul.f32 %v1883, %v1887
    %vm1889 = vweird.f32 %v1804
    %vm1890 = vweird.f32 %v1883
    %vm1891 = vmor %vm1889, %vm1890
    %v1892 = vsel %vm1891, %v1883, %v1888
    %v1893 = vrsqrt.pop %v1805
    %v1894 = vmul.f32 %v1893, %v1805
    %v1895 = vmul.f32 %v1894, %v1893
    %v1896 = vmul.f32 0.5, %v1895
    %v1897 = vsub.f32 1.5, %v1896
    %v1898 = vmul.f32 %v1893, %v1897
    %vm1899 = vweird.f32 %v1805
    %vm1900 = vweird.f32 %v1893
    %vm1901 = vmor %vm1899, %vm1900
    %v1902 = vsel %vm1901, %v1893, %v1898
    %v1903 = vrsqrt.pop %v1806
    %v1904 = vmul.f32 %v1903, %v1806
    %v1905 = vmul.f32 %v1904, %v1903
    %v1906 = vmul.f32 0.5, %v1905
    %v1907 = vsub.f32 1.5, %v1906
    %v1908 = vmul.f32 %v1903, %v1907
    %vm1909 = vweird.f32 %v1806
    %vm1910 = vweird.f32 %v1903
    %vm1911 = vmor %vm1909, %vm1910
    %v1912 = vsel %vm1911, %v1903, %v1908
    %v1913 = vrsqrt.pop %v1807
    %v1914 = vmul.f32 %v1913, %v1807
    %v1915 = vmul.f32 %v1914, %v1913
    %v1916 = vmul.f32 0.5, %v1915
    %v1917 = vsub.f32 1.5, %v1916
    %v1918 = vmul.f32 %v1913, %v1917
    %vm1919 = vweird.f32 %v1807
    %vm1920 = vweird.f32 %v1913
    %vm1921 = vmor %vm1919, %vm1920
    %v1922 = vsel %vm1921, %v1913, %v1918
    %v1923 = vrsqrt.pop %v1808
    %v1924 = vmul.f32 %v1923, %v1808
    %v1925 = vmul.f32 %v1924, %v1923
    %v1926 = vmul.f32 0.5, %v1925
    %v1927 = vsub.f32 1.5, %v1926
    %v1928 = vmul.f32 %v1923, %v1927
    %vm1929 = vweird.f32 %v1808
    %vm1930 = vweird.f32 %v1923
    %vm1931 = vmor %vm1929, %vm1930
    %v1932 = vsel %vm1931, %v1923, %v1928
    %v1933 = vrsqrt.pop %v1809
    %v1934 = vmul.f32 %v1933, %v1809
    %v1935 = vmul.f32 %v1934, %v1933
    %v1936 = vmul.f32 0.5, %v1935
    %v1937 = vsub.f32 1.5, %v1936
    %v1938 = vmul.f32 %v1933, %v1937
    %vm1939 = vweird.f32 %v1809
    %vm1940 = vweird.f32 %v1933
    %vm1941 = vmor %vm1939, %vm1940
    %v1942 = vsel %vm1941, %v1933, %v1938
    %v1943 = vrsqrt.pop %v1810
    %v1944 = vmul.f32 %v1943, %v1810
    %v1945 = vmul.f32 %v1944, %v1943
    %v1946 = vmul.f32 0.5, %v1945
    %v1947 = vsub.f32 1.5, %v1946
    %v1948 = vmul.f32 %v1943, %v1947
    %vm1949 = vweird.f32 %v1810
    %vm1950 = vweird.f32 %v1943
    %vm1951 = vmor %vm1949, %vm1950
    %v1952 = vsel %vm1951, %v1943, %v1948
    %v1953 = vrsqrt.pop %v1811
    %v1954 = vmul.f32 %v1953, %v1811
    %v1955 = vmul.f32 %v1954, %v1953
    %v1956 = vmul.f32 0.5, %v1955
    %v1957 = vsub.f32 1.5, %v1956
    %v1958 = vmul.f32 %v1953, %v1957
    %vm1959 = vweird.f32 %v1811
    %vm1960 = vweird.f32 %v1953
    %vm1961 = vmor %vm1959, %vm1960
    %v1962 = vsel %vm1961, %v1953, %v1958
    %v1963 = vrsqrt.pop %v1812
    %v1964 = vmul.f32 %v1963, %v1812
    %v1965 = vmul.f32 %v1964, %v1963
    %v1966 = vmul.f32 0.5, %v1965
    %v1967 = vsub.f32 1.5, %v1966
    %v1968 = vmul.f32 %v1963, %v1967
    %vm1969 = vweird.f32 %v1812
    %vm1970 = vweird.f32 %v1963
    %vm1971 = vmor %vm1969, %vm1970
    %v1972 = vsel %vm1971, %v1963, %v1968
    %v1973 = vmul.f32 %v1702, %v1822
    %v1974 = vmul.f32 %v1705, %v1832
    %v1975 = vmul.f32 %v1708, %v1842
    %v1976 = vmul.f32 %v1711, %v1852
    %v1977 = vmul.f32 %v1714, %v1862
    %v1978 = vmul.f32 %v1717, %v1872
    %v1979 = vmul.f32 %v1720, %v1882
    %v1980 = vmul.f32 %v1723, %v1892
    %v1981 = vmul.f32 %v1726, %v1902
    %v1982 = vmul.f32 %v1729, %v1912
    %v1983 = vmul.f32 %v1732, %v1922
    %v1984 = vmul.f32 %v1735, %v1932
    %v1985 = vmul.f32 %v1738, %v1942
    %v1986 = vmul.f32 %v1741, %v1952
    %v1987 = vmul.f32 %v1744, %v1962
    %v1988 = vmul.f32 %v1747, %v1972
    %vm1989 = vcmp.gt.f32.partialorder %v1973, 0.0
    %vm1990 = vcmp.gt.f32.partialorder %v1974, 0.0
    %vm1991 = vcmp.gt.f32.partialorder %v1975, 0.0
    %vm1992 = vcmp.gt.f32.partialorder %v1976, 0.0
    %vm1993 = vcmp.gt.f32.partialorder %v1977, 0.0
    %vm1994 = vcmp.gt.f32.partialorder %v1978, 0.0
    %vm1995 = vcmp.gt.f32.partialorder %v1979, 0.0
    %vm1996 = vcmp.gt.f32.partialorder %v1980, 0.0
    %vm1997 = vcmp.gt.f32.partialorder %v1981, 0.0
    %vm1998 = vcmp.gt.f32.partialorder %v1982, 0.0
    %vm1999 = vcmp.gt.f32.partialorder %v1983, 0.0
    %vm2000 = vcmp.gt.f32.partialorder %v1984, 0.0
    %vm2001 = vcmp.gt.f32.partialorder %v1985, 0.0
    %vm2002 = vcmp.gt.f32.partialorder %v1986, 0.0
    %vm2003 = vcmp.gt.f32.partialorder %v1987, 0.0
    %vm2004 = vcmp.gt.f32.partialorder %v1988, 0.0
    %v2005 = vmul.f32 %v1973, 0.01
    %v2006 = vmul.f32 %v1974, 0.01
    %v2007 = vmul.f32 %v1975, 0.01
    %v2008 = vmul.f32 %v1976, 0.01
    %v2009 = vmul.f32 %v1977, 0.01
    %v2010 = vmul.f32 %v1978, 0.01
    %v2011 = vmul.f32 %v1979, 0.01
    %v2012 = vmul.f32 %v1980, 0.01
    %v2013 = vmul.f32 %v1981, 0.01
    %v2014 = vmul.f32 %v1982, 0.01
    %v2015 = vmul.f32 %v1983, 0.01
    %v2016 = vmul.f32 %v1984, 0.01
    %v2017 = vmul.f32 %v1985, 0.01
    %v2018 = vmul.f32 %v1986, 0.01
    %v2019 = vmul.f32 %v1987, 0.01
    %v2020 = vmul.f32 %v1988, 0.01
    %v2021 = vsel %vm1989, %v1973, %v2005
    %v2022 = vsel %vm1990, %v1974, %v2006
    %v2023 = vsel %vm1991, %v1975, %v2007
    %v2024 = vsel %vm1992, %v1976, %v2008
    %v2025 = vsel %vm1993, %v1977, %v2009
    %v2026 = vsel %vm1994, %v1978, %v2010
    %v2027 = vsel %vm1995, %v1979, %v2011
    %v2028 = vsel %vm1996, %v1980, %v2012
    %v2029 = vsel %vm1997, %v1981, %v2013
    %v2030 = vsel %vm1998, %v1982, %v2014
    %v2031 = vsel %vm1999, %v1983, %v2015
    %v2032 = vsel %vm2000, %v1984, %v2016
    %v2033 = vsel %vm2001, %v1985, %v2017
    %v2034 = vsel %vm2002, %v1986, %v2018
    %v2035 = vsel %vm2003, %v1987, %v2019
    %v2036 = vsel %vm2004, %v1988, %v2020
    %v2038 = vperm.slane %v681, 0
    %v2040 = vadd.f32 %v782, %v2038
    %v2041 = vadd.f32 %v785, %v2038
    %v2042 = vadd.f32 %v788, %v2038
    %v2043 = vadd.f32 %v791, %v2038
    %v2044 = vadd.f32 %v794, %v2038
    %v2045 = vadd.f32 %v797, %v2038
    %v2046 = vadd.f32 %v800, %v2038
    %v2047 = vadd.f32 %v803, %v2038
    %v2048 = vadd.f32 %v806, %v2038
    %v2049 = vadd.f32 %v809, %v2038
    %v2050 = vadd.f32 %v812, %v2038
    %v2051 = vadd.f32 %v815, %v2038
    %v2052 = vadd.f32 %v818, %v2038
    %v2053 = vadd.f32 %v821, %v2038
    %v2054 = vadd.f32 %v824, %v2038
    %v2055 = vadd.f32 %v827, %v2038
    %vm2056 = vcmp.gt.f32.partialorder %v2040, 0.0
    %vm2057 = vcmp.gt.f32.partialorder %v2041, 0.0
    %vm2058 = vcmp.gt.f32.partialorder %v2042, 0.0
    %vm2059 = vcmp.gt.f32.partialorder %v2043, 0.0
    %vm2060 = vcmp.gt.f32.partialorder %v2044, 0.0
    %vm2061 = vcmp.gt.f32.partialorder %v2045, 0.0
    %vm2062 = vcmp.gt.f32.partialorder %v2046, 0.0
    %vm2063 = vcmp.gt.f32.partialorder %v2047, 0.0
    %vm2064 = vcmp.gt.f32.partialorder %v2048, 0.0
    %vm2065 = vcmp.gt.f32.partialorder %v2049, 0.0
    %vm2066 = vcmp.gt.f32.partialorder %v2050, 0.0
    %vm2067 = vcmp.gt.f32.partialorder %v2051, 0.0
    %vm2068 = vcmp.gt.f32.partialorder %v2052, 0.0
    %vm2069 = vcmp.gt.f32.partialorder %v2053, 0.0
    %vm2070 = vcmp.gt.f32.partialorder %v2054, 0.0
    %vm2071 = vcmp.gt.f32.partialorder %v2055, 0.0
    %v2072 = vmul.f32 %v2040, 0.01
    %v2073 = vmul.f32 %v2041, 0.01
    %v2074 = vmul.f32 %v2042, 0.01
    %v2075 = vmul.f32 %v2043, 0.01
    %v2076 = vmul.f32 %v2044, 0.01
    %v2077 = vmul.f32 %v2045, 0.01
    %v2078 = vmul.f32 %v2046, 0.01
    %v2079 = vmul.f32 %v2047, 0.01
    %v2080 = vmul.f32 %v2048, 0.01
    %v2081 = vmul.f32 %v2049, 0.01
    %v2082 = vmul.f32 %v2050, 0.01
    %v2083 = vmul.f32 %v2051, 0.01
    %v2084 = vmul.f32 %v2052, 0.01
    %v2085 = vmul.f32 %v2053, 0.01
    %v2086 = vmul.f32 %v2054, 0.01
    %v2087 = vmul.f32 %v2055, 0.01
    %v2088 = vsel %vm2056, %v2040, %v2072
    %v2089 = vsel %vm2057, %v2041, %v2073
    %v2090 = vsel %vm2058, %v2042, %v2074
    %v2091 = vsel %vm2059, %v2043, %v2075
    %v2092 = vsel %vm2060, %v2044, %v2076
    %v2093 = vsel %vm2061, %v2045, %v2077
    %v2094 = vsel %vm2062, %v2046, %v2078
    %v2095 = vsel %vm2063, %v2047, %v2079
    %v2096 = vsel %vm2064, %v2048, %v2080
    %v2097 = vsel %vm2065, %v2049, %v2081
    %v2098 = vsel %vm2066, %v2050, %v2082
    %v2099 = vsel %vm2067, %v2051, %v2083
    %v2100 = vsel %vm2068, %v2052, %v2084
    %v2101 = vsel %vm2069, %v2053, %v2085
    %v2102 = vsel %vm2070, %v2054, %v2086
    %v2103 = vsel %vm2071, %v2055, %v2087
    %v2104 = vadd.f32 %v2088, %v275
    %v2105 = vadd.f32 %v2089, %v276
    %v2106 = vadd.f32 %v2090, %v277
    %v2107 = vadd.f32 %v2091, %v278
    %v2108 = vadd.f32 %v2092, %v279
    %v2109 = vadd.f32 %v2093, %v280
    %v2110 = vadd.f32 %v2094, %v281
    %v2111 = vadd.f32 %v2095, %v282
    %v2112 = vadd.f32 %v2096, %v283
    %v2113 = vadd.f32 %v2097, %v284
    %v2114 = vadd.f32 %v2098, %v285
    %v2115 = vadd.f32 %v2099, %v286
    %v2116 = vadd.f32 %v2100, %v287
    %v2117 = vadd.f32 %v2101, %v288
    %v2118 = vadd.f32 %v2102, %v289
    %v2119 = vadd.f32 %v2103, %v290
    %v2121 = vperm.slane %v698, 0
    %2123 = vmatpush.msra.mxu0 %v697
    %2124 = vmatpush.msra.mxu0 %v696
    %2125 = vmatpush.msra.mxu0 %v695
    %2126 = vmatpush.msra.mxu0 %v694
    %2127 = vmatpush.msra.mxu0 %v693
    %2128 = vmatpush.msra.mxu0 %v692
    %2129 = vmatpush.msra.mxu0 %v691
    %2130 = vmatpush.msra.mxu0 %v690
    %2131 = vmatpush.msra.mxu0 %v689
    %2132 = vmatpush.msra.mxu0 %v688
    %2133 = vmatpush.msra.mxu0 %v687
    %2134 = vmatpush.msra.mxu0 %v686
    %2135 = vmatpush.msra.mxu0 %v685
    %2136 = vmatpush.msra.mxu0 %v684
    %2137 = vmatpush.msra.mxu0 %v683
    %2138 = vmatpush.msra.mxu0 %v682
    %2139 = vmatmul.f32.gmra.mxu0 %v2021
    %v2140 = vpop.f32.mrf.mxu0
    %v2141 = vadd.f32 %v2121, %v2140
    %2142 = vmatmul.f32.gmra.mxu0 %v2022
    %v2143 = vpop.f32.mrf.mxu0
    %v2144 = vadd.f32 %v2121, %v2143
    %2145 = vmatmul.f32.gmra.mxu0 %v2023
    %v2146 = vpop.f32.mrf.mxu0
    %v2147 = vadd.f32 %v2121, %v2146
    %2148 = vmatmul.f32.gmra.mxu0 %v2024
    %v2149 = vpop.f32.mrf.mxu0
    %v2150 = vadd.f32 %v2121, %v2149
    %2151 = vmatmul.f32.gmra.mxu0 %v2025
    %v2152 = vpop.f32.mrf.mxu0
    %v2153 = vadd.f32 %v2121, %v2152
    %2154 = vmatmul.f32.gmra.mxu0 %v2026
    %v2155 = vpop.f32.mrf.mxu0
    %v2156 = vadd.f32 %v2121, %v2155
    %2157 = vmatmul.f32.gmra.mxu0 %v2027
    %v2158 = vpop.f32.mrf.mxu0
    %v2159 = vadd.f32 %v2121, %v2158
    %2160 = vmatmul.f32.gmra.mxu0 %v2028
    %v2161 = vpop.f32.mrf.mxu0
    %v2162 = vadd.f32 %v2121, %v2161
    %2163 = vmatmul.f32.gmra.mxu0 %v2029
    %v2164 = vpop.f32.mrf.mxu0
    %v2165 = vadd.f32 %v2121, %v2164
    %2166 = vmatmul.f32.gmra.mxu0 %v2030
    %v2167 = vpop.f32.mrf.mxu0
    %v2168 = vadd.f32 %v2121, %v2167
    %2169 = vmatmul.f32.gmra.mxu0 %v2031
    %v2170 = vpop.f32.mrf.mxu0
    %v2171 = vadd.f32 %v2121, %v2170
    %2172 = vmatmul.f32.gmra.mxu0 %v2032
    %v2173 = vpop.f32.mrf.mxu0
    %v2174 = vadd.f32 %v2121, %v2173
    %2175 = vmatmul.f32.gmra.mxu0 %v2033
    %v2176 = vpop.f32.mrf.mxu0
    %v2177 = vadd.f32 %v2121, %v2176
    %2178 = vmatmul.f32.gmra.mxu0 %v2034
    %v2179 = vpop.f32.mrf.mxu0
    %v2180 = vadd.f32 %v2121, %v2179
    %2181 = vmatmul.f32.gmra.mxu0 %v2035
    %v2182 = vpop.f32.mrf.mxu0
    %v2183 = vadd.f32 %v2121, %v2182
    %2184 = vmatmul.f32.gmra.mxu0 %v2036
    %v2185 = vpop.f32.mrf.mxu0
    %v2186 = vadd.f32 %v2121, %v2185
    %2187 = vdwg.mxu0
    %v2188 = vadd.f32 %v2141, %v2104
    %v2189 = vadd.f32 %v2144, %v2105
    %v2190 = vadd.f32 %v2147, %v2106
    %v2191 = vadd.f32 %v2150, %v2107
    %v2192 = vadd.f32 %v2153, %v2108
    %v2193 = vadd.f32 %v2156, %v2109
    %v2194 = vadd.f32 %v2159, %v2110
    %v2195 = vadd.f32 %v2162, %v2111
    %v2196 = vadd.f32 %v2165, %v2112
    %v2197 = vadd.f32 %v2168, %v2113
    %v2198 = vadd.f32 %v2171, %v2114
    %v2199 = vadd.f32 %v2174, %v2115
    %v2200 = vadd.f32 %v2177, %v2116
    %v2201 = vadd.f32 %v2180, %v2117
    %v2202 = vadd.f32 %v2183, %v2118
    %v2203 = vadd.f32 %v2186, %v2119
    %vm2204 = vcmp.gt.f32.partialorder %v2188, 0.0
    %vm2205 = vcmp.gt.f32.partialorder %v2189, 0.0
    %vm2206 = vcmp.gt.f32.partialorder %v2190, 0.0
    %vm2207 = vcmp.gt.f32.partialorder %v2191, 0.0
    %vm2208 = vcmp.gt.f32.partialorder %v2192, 0.0
    %vm2209 = vcmp.gt.f32.partialorder %v2193, 0.0
    %vm2210 = vcmp.gt.f32.partialorder %v2194, 0.0
    %vm2211 = vcmp.gt.f32.partialorder %v2195, 0.0
    %vm2212 = vcmp.gt.f32.partialorder %v2196, 0.0
    %vm2213 = vcmp.gt.f32.partialorder %v2197, 0.0
    %vm2214 = vcmp.gt.f32.partialorder %v2198, 0.0
    %vm2215 = vcmp.gt.f32.partialorder %v2199, 0.0
    %vm2216 = vcmp.gt.f32.partialorder %v2200, 0.0
    %vm2217 = vcmp.gt.f32.partialorder %v2201, 0.0
    %vm2218 = vcmp.gt.f32.partialorder %v2202, 0.0
    %vm2219 = vcmp.gt.f32.partialorder %v2203, 0.0
    %v2220 = vmul.f32 %v2188, 0.01
    %v2221 = vmul.f32 %v2189, 0.01
    %v2222 = vmul.f32 %v2190, 0.01
    %v2223 = vmul.f32 %v2191, 0.01
    %v2224 = vmul.f32 %v2192, 0.01
    %v2225 = vmul.f32 %v2193, 0.01
    %v2226 = vmul.f32 %v2194, 0.01
    %v2227 = vmul.f32 %v2195, 0.01
    %v2228 = vmul.f32 %v2196, 0.01
    %v2229 = vmul.f32 %v2197, 0.01
    %v2230 = vmul.f32 %v2198, 0.01
    %v2231 = vmul.f32 %v2199, 0.01
    %v2232 = vmul.f32 %v2200, 0.01
    %v2233 = vmul.f32 %v2201, 0.01
    %v2234 = vmul.f32 %v2202, 0.01
    %v2235 = vmul.f32 %v2203, 0.01
    %v2236 = vsel %vm2204, %v2188, %v2220
    %v2237 = vsel %vm2205, %v2189, %v2221
    %v2238 = vsel %vm2206, %v2190, %v2222
    %v2239 = vsel %vm2207, %v2191, %v2223
    %v2240 = vsel %vm2208, %v2192, %v2224
    %v2241 = vsel %vm2209, %v2193, %v2225
    %v2242 = vsel %vm2210, %v2194, %v2226
    %v2243 = vsel %vm2211, %v2195, %v2227
    %v2244 = vsel %vm2212, %v2196, %v2228
    %v2245 = vsel %vm2213, %v2197, %v2229
    %v2246 = vsel %vm2214, %v2198, %v2230
    %v2247 = vsel %vm2215, %v2199, %v2231
    %v2248 = vsel %vm2216, %v2200, %v2232
    %v2249 = vsel %vm2217, %v2201, %v2233
    %v2250 = vsel %vm2218, %v2202, %v2234
    %v2251 = vsel %vm2219, %v2203, %v2235
    %2252 = vst [vmem:[#allocation20] sm:$0xff] %v2236
    %2253 = vst [vmem:[#allocation20 + $0x8] sm:$0xff] %v2237
    %2254 = vst [vmem:[#allocation20 + $0x10] sm:$0xff] %v2238
    %2255 = vst [vmem:[#allocation20 + $0x18] sm:$0xff] %v2239
    %2256 = vst [vmem:[#allocation20 + $0x20] sm:$0xff] %v2240
    %2257 = vst [vmem:[#allocation20 + $0x28] sm:$0xff] %v2241
    %2258 = vst [vmem:[#allocation20 + $0x30] sm:$0xff] %v2242
    %2259 = vst [vmem:[#allocation20 + $0x38] sm:$0xff] %v2243
    %2260 = vst [vmem:[#allocation20 + $0x40] sm:$0xff] %v2244
    %2261 = vst [vmem:[#allocation20 + $0x48] sm:$0xff] %v2245
    %2262 = vst [vmem:[#allocation20 + $0x50] sm:$0xff] %v2246
    %2263 = vst [vmem:[#allocation20 + $0x58] sm:$0xff] %v2247
    %2264 = vst [vmem:[#allocation20 + $0x60] sm:$0xff] %v2248
    %2265 = vst [vmem:[#allocation20 + $0x68] sm:$0xff] %v2249
    %2266 = vst [vmem:[#allocation20 + $0x70] sm:$0xff] %v2250
    %2267 = vst [vmem:[#allocation20 + $0x78] sm:$0xff] %v2251
    %v2268 = vld [vmem:[#allocation16] sm:$0xff]
    %v2269 = vld [vmem:[#allocation16 + $0x8] sm:$0xff]
    %v2270 = vld [vmem:[#allocation16 + $0x10] sm:$0xff]
    %v2271 = vld [vmem:[#allocation16 + $0x18] sm:$0xff]
    %v2272 = vld [vmem:[#allocation16 + $0x20] sm:$0xff]
    %v2273 = vld [vmem:[#allocation16 + $0x28] sm:$0xff]
    %v2274 = vld [vmem:[#allocation16 + $0x30] sm:$0xff]
    %v2275 = vld [vmem:[#allocation16 + $0x38] sm:$0xff]
    %v2276 = vld [vmem:[#allocation16 + $0x40] sm:$0xff]
    %v2277 = vld [vmem:[#allocation16 + $0x48] sm:$0xff]
    %v2278 = vld [vmem:[#allocation16 + $0x50] sm:$0xff]
    %v2279 = vld [vmem:[#allocation16 + $0x58] sm:$0xff]
    %v2280 = vld [vmem:[#allocation16 + $0x60] sm:$0xff]
    %v2281 = vld [vmem:[#allocation16 + $0x68] sm:$0xff]
    %v2282 = vld [vmem:[#allocation16 + $0x70] sm:$0xff]
    %v2283 = vld [vmem:[#allocation16 + $0x78] sm:$0xff]
    %v2284 = vld [vmem:[#allocation16 + $0x80] sm:$0xff]
    %v2285 = vld [vmem:[#allocation16 + $0x88] sm:$0xff]
    %v2286 = vld [vmem:[#allocation16 + $0x90] sm:$0xff]
    %v2287 = vld [vmem:[#allocation16 + $0x98] sm:$0xff]
    %v2288 = vld [vmem:[#allocation16 + $0xa0] sm:$0xff]
    %v2289 = vld [vmem:[#allocation16 + $0xa8] sm:$0xff]
    %v2290 = vld [vmem:[#allocation16 + $0xb0] sm:$0xff]
    %v2291 = vld [vmem:[#allocation16 + $0xb8] sm:$0xff]
    %v2292 = vld [vmem:[#allocation16 + $0xc0] sm:$0xff]
    %v2293 = vld [vmem:[#allocation16 + $0xc8] sm:$0xff]
    %v2294 = vld [vmem:[#allocation16 + $0xd0] sm:$0xff]
    %v2295 = vld [vmem:[#allocation16 + $0xd8] sm:$0xff]
    %v2296 = vld [vmem:[#allocation16 + $0xe0] sm:$0xff]
    %v2297 = vld [vmem:[#allocation16 + $0xe8] sm:$0xff]
    %v2298 = vld [vmem:[#allocation16 + $0xf0] sm:$0xff]
    %v2299 = vld [vmem:[#allocation16 + $0xf8] sm:$0xff]
    %v2300 = vld [vmem:[#allocation17] sm:$0x1]
    %v2301 = vld [vmem:[%s13] sm:$0x1]
    %v2302 = vld [vmem:[#allocation19] sm:$0xff]
    %v2303 = vld [vmem:[#allocation19 + $0x8] sm:$0xff]
    %v2304 = vld [vmem:[#allocation19 + $0x10] sm:$0xff]
    %v2305 = vld [vmem:[#allocation19 + $0x18] sm:$0xff]
    %v2306 = vld [vmem:[#allocation19 + $0x20] sm:$0xff]
    %v2307 = vld [vmem:[#allocation19 + $0x28] sm:$0xff]
    %v2308 = vld [vmem:[#allocation19 + $0x30] sm:$0xff]
    %v2309 = vld [vmem:[#allocation19 + $0x38] sm:$0xff]
    %v2310 = vld [vmem:[#allocation19 + $0x40] sm:$0xff]
    %v2311 = vld [vmem:[#allocation19 + $0x48] sm:$0xff]
    %v2312 = vld [vmem:[#allocation19 + $0x50] sm:$0xff]
    %v2313 = vld [vmem:[#allocation19 + $0x58] sm:$0xff]
    %v2314 = vld [vmem:[#allocation19 + $0x60] sm:$0xff]
    %v2315 = vld [vmem:[#allocation19 + $0x68] sm:$0xff]
    %v2316 = vld [vmem:[#allocation19 + $0x70] sm:$0xff]
    %v2317 = vld [vmem:[#allocation19 + $0x78] sm:$0xff]
    %v2318 = vld [vmem:[%s15] sm:$0x1]
    %2319 = vmatpush.msra.mxu0 %v2298
    %2320 = vmatpush.msra.mxu0 %v2296
    %2321 = vmatpush.msra.mxu0 %v2294
    %2322 = vmatpush.msra.mxu0 %v2292
    %2323 = vmatpush.msra.mxu0 %v2290
    %2324 = vmatpush.msra.mxu0 %v2288
    %2325 = vmatpush.msra.mxu0 %v2286
    %2326 = vmatpush.msra.mxu0 %v2284
    %2327 = vmatpush.msra.mxu0 %v2282
    %2328 = vmatpush.msra.mxu0 %v2280
    %2329 = vmatpush.msra.mxu0 %v2278
    %2330 = vmatpush.msra.mxu0 %v2276
    %2331 = vmatpush.msra.mxu0 %v2274
    %2332 = vmatpush.msra.mxu0 %v2272
    %2333 = vmatpush.msra.mxu0 %v2270
    %2334 = vmatpush.msra.mxu0 %v2268
    %2335 = vmatmul.f32.gmra.mxu0 %v2236
    %v2336 = vpop.f32.mrf.mxu0
    %v2337 = vadd.f32 0.0, %v2336
    %2338 = vmatmul.f32.gmra.mxu0 %v2237
    %v2339 = vpop.f32.mrf.mxu0
    %v2340 = vadd.f32 0.0, %v2339
    %2341 = vmatmul.f32.gmra.mxu0 %v2238
    %v2342 = vpop.f32.mrf.mxu0
    %v2343 = vadd.f32 0.0, %v2342
    %2344 = vmatmul.f32.gmra.mxu0 %v2239
    %v2345 = vpop.f32.mrf.mxu0
    %v2346 = vadd.f32 0.0, %v2345
    %2347 = vmatmul.f32.gmra.mxu0 %v2240
    %v2348 = vpop.f32.mrf.mxu0
    %v2349 = vadd.f32 0.0, %v2348
    %2350 = vmatmul.f32.gmra.mxu0 %v2241
    %v2351 = vpop.f32.mrf.mxu0
    %v2352 = vadd.f32 0.0, %v2351
    %2353 = vmatmul.f32.gmra.mxu0 %v2242
    %v2354 = vpop.f32.mrf.mxu0
    %v2355 = vadd.f32 0.0, %v2354
    %2356 = vmatmul.f32.gmra.mxu0 %v2243
    %v2357 = vpop.f32.mrf.mxu0
    %v2358 = vadd.f32 0.0, %v2357
    %2359 = vmatmul.f32.gmra.mxu0 %v2244
    %v2360 = vpop.f32.mrf.mxu0
    %v2361 = vadd.f32 0.0, %v2360
    %2362 = vmatmul.f32.gmra.mxu0 %v2245
    %v2363 = vpop.f32.mrf.mxu0
    %v2364 = vadd.f32 0.0, %v2363
    %2365 = vmatmul.f32.gmra.mxu0 %v2246
    %v2366 = vpop.f32.mrf.mxu0
    %v2367 = vadd.f32 0.0, %v2366
    %2368 = vmatmul.f32.gmra.mxu0 %v2247
    %v2369 = vpop.f32.mrf.mxu0
    %v2370 = vadd.f32 0.0, %v2369
    %2371 = vmatmul.f32.gmra.mxu0 %v2248
    %v2372 = vpop.f32.mrf.mxu0
    %v2373 = vadd.f32 0.0, %v2372
    %2374 = vmatmul.f32.gmra.mxu0 %v2249
    %v2375 = vpop.f32.mrf.mxu0
    %v2376 = vadd.f32 0.0, %v2375
    %2377 = vmatmul.f32.gmra.mxu0 %v2250
    %v2378 = vpop.f32.mrf.mxu0
    %v2379 = vadd.f32 0.0, %v2378
    %2380 = vmatmul.f32.gmra.mxu0 %v2251
    %v2381 = vpop.f32.mrf.mxu0
    %v2382 = vadd.f32 0.0, %v2381
    %2383 = vdwg.mxu0
    %2384 = vmatpush.msra.mxu0 %v2299
    %2385 = vmatpush.msra.mxu0 %v2297
    %2386 = vmatpush.msra.mxu0 %v2295
    %2387 = vmatpush.msra.mxu0 %v2293
    %2388 = vmatpush.msra.mxu0 %v2291
    %2389 = vmatpush.msra.mxu0 %v2289
    %2390 = vmatpush.msra.mxu0 %v2287
    %2391 = vmatpush.msra.mxu0 %v2285
    %2392 = vmatpush.msra.mxu0 %v2283
    %2393 = vmatpush.msra.mxu0 %v2281
    %2394 = vmatpush.msra.mxu0 %v2279
    %2395 = vmatpush.msra.mxu0 %v2277
    %2396 = vmatpush.msra.mxu0 %v2275
    %2397 = vmatpush.msra.mxu0 %v2273
    %2398 = vmatpush.msra.mxu0 %v2271
    %2399 = vmatpush.msra.mxu0 %v2269
    %2400 = vmatmul.f32.gmra.mxu0 %v2236
    %v2401 = vpop.f32.mrf.mxu0
    %v2402 = vadd.f32 0.0, %v2401
    %2403 = vmatmul.f32.gmra.mxu0 %v2237
    %v2404 = vpop.f32.mrf.mxu0
    %v2405 = vadd.f32 0.0, %v2404
    %2406 = vmatmul.f32.gmra.mxu0 %v2238
    %v2407 = vpop.f32.mrf.mxu0
    %v2408 = vadd.f32 0.0, %v2407
    %2409 = vmatmul.f32.gmra.mxu0 %v2239
    %v2410 = vpop.f32.mrf.mxu0
    %v2411 = vadd.f32 0.0, %v2410
    %2412 = vmatmul.f32.gmra.mxu0 %v2240
    %v2413 = vpop.f32.mrf.mxu0
    %v2414 = vadd.f32 0.0, %v2413
    %2415 = vmatmul.f32.gmra.mxu0 %v2241
    %v2416 = vpop.f32.mrf.mxu0
    %v2417 = vadd.f32 0.0, %v2416
    %2418 = vmatmul.f32.gmra.mxu0 %v2242
    %v2419 = vpop.f32.mrf.mxu0
    %v2420 = vadd.f32 0.0, %v2419
    %2421 = vmatmul.f32.gmra.mxu0 %v2243
    %v2422 = vpop.f32.mrf.mxu0
    %v2423 = vadd.f32 0.0, %v2422
    %2424 = vmatmul.f32.gmra.mxu0 %v2244
    %v2425 = vpop.f32.mrf.mxu0
    %v2426 = vadd.f32 0.0, %v2425
    %2427 = vmatmul.f32.gmra.mxu0 %v2245
    %v2428 = vpop.f32.mrf.mxu0
    %v2429 = vadd.f32 0.0, %v2428
    %2430 = vmatmul.f32.gmra.mxu0 %v2246
    %v2431 = vpop.f32.mrf.mxu0
    %v2432 = vadd.f32 0.0, %v2431
    %2433 = vmatmul.f32.gmra.mxu0 %v2247
    %v2434 = vpop.f32.mrf.mxu0
    %v2435 = vadd.f32 0.0, %v2434
    %2436 = vmatmul.f32.gmra.mxu0 %v2248
    %v2437 = vpop.f32.mrf.mxu0
    %v2438 = vadd.f32 0.0, %v2437
    %2439 = vmatmul.f32.gmra.mxu0 %v2249
    %v2440 = vpop.f32.mrf.mxu0
    %v2441 = vadd.f32 0.0, %v2440
    %2442 = vmatmul.f32.gmra.mxu0 %v2250
    %v2443 = vpop.f32.mrf.mxu0
    %v2444 = vadd.f32 0.0, %v2443
    %2445 = vmatmul.f32.gmra.mxu0 %v2251
    %v2446 = vpop.f32.mrf.mxu0
    %v2447 = vadd.f32 0.0, %v2446
    %2448 = vdwg.mxu0
    %vm2449 = vcmp.gt.f32.partialorder %v2337, 0.0
    %vm2450 = vcmp.gt.f32.partialorder %v2340, 0.0
    %vm2451 = vcmp.gt.f32.partialorder %v2343, 0.0
    %vm2452 = vcmp.gt.f32.partialorder %v2346, 0.0
    %vm2453 = vcmp.gt.f32.partialorder %v2349, 0.0
    %vm2454 = vcmp.gt.f32.partialorder %v2352, 0.0
    %vm2455 = vcmp.gt.f32.partialorder %v2355, 0.0
    %vm2456 = vcmp.gt.f32.partialorder %v2358, 0.0
    %vm2457 = vcmp.gt.f32.partialorder %v2361, 0.0
    %vm2458 = vcmp.gt.f32.partialorder %v2364, 0.0
    %vm2459 = vcmp.gt.f32.partialorder %v2367, 0.0
    %vm2460 = vcmp.gt.f32.partialorder %v2370, 0.0
    %vm2461 = vcmp.gt.f32.partialorder %v2373, 0.0
    %vm2462 = vcmp.gt.f32.partialorder %v2376, 0.0
    %vm2463 = vcmp.gt.f32.partialorder %v2379, 0.0
    %vm2464 = vcmp.gt.f32.partialorder %v2382, 0.0
    %v2465 = vmul.f32 %v2337, 0.01
    %v2466 = vmul.f32 %v2340, 0.01
    %v2467 = vmul.f32 %v2343, 0.01
    %v2468 = vmul.f32 %v2346, 0.01
    %v2469 = vmul.f32 %v2349, 0.01
    %v2470 = vmul.f32 %v2352, 0.01
    %v2471 = vmul.f32 %v2355, 0.01
    %v2472 = vmul.f32 %v2358, 0.01
    %v2473 = vmul.f32 %v2361, 0.01
    %v2474 = vmul.f32 %v2364, 0.01
    %v2475 = vmul.f32 %v2367, 0.01
    %v2476 = vmul.f32 %v2370, 0.01
    %v2477 = vmul.f32 %v2373, 0.01
    %v2478 = vmul.f32 %v2376, 0.01
    %v2479 = vmul.f32 %v2379, 0.01
    %v2480 = vmul.f32 %v2382, 0.01
    %v2481 = vsel %vm2449, %v2337, %v2465
    %v2482 = vsel %vm2450, %v2340, %v2466
    %v2483 = vsel %vm2451, %v2343, %v2467
    %v2484 = vsel %vm2452, %v2346, %v2468
    %v2485 = vsel %vm2453, %v2349, %v2469
    %v2486 = vsel %vm2454, %v2352, %v2470
    %v2487 = vsel %vm2455, %v2355, %v2471
    %v2488 = vsel %vm2456, %v2358, %v2472
    %v2489 = vsel %vm2457, %v2361, %v2473
    %v2490 = vsel %vm2458, %v2364, %v2474
    %v2491 = vsel %vm2459, %v2367, %v2475
    %v2492 = vsel %vm2460, %v2370, %v2476
    %v2493 = vsel %vm2461, %v2373, %v2477
    %v2494 = vsel %vm2462, %v2376, %v2478
    %v2495 = vsel %vm2463, %v2379, %v2479
    %v2496 = vsel %vm2464, %v2382, %v2480
    %2497 = vmatpush.xpose.msra.mxu0 %v2496
    %2498 = vmatpush.xpose.msra.mxu0 %v2495
    %2499 = vmatpush.xpose.msra.mxu0 %v2494
    %2500 = vmatpush.xpose.msra.mxu0 %v2493
    %2501 = vmatpush.xpose.msra.mxu0 %v2492
    %2502 = vmatpush.xpose.msra.mxu0 %v2491
    %2503 = vmatpush.xpose.msra.mxu0 %v2490
    %2504 = vmatpush.xpose.msra.mxu0 %v2489
    %2505 = vmatpush.xpose.msra.mxu0 %v2488
    %2506 = vmatpush.xpose.msra.mxu0 %v2487
    %2507 = vmatpush.xpose.msra.mxu0 %v2486
    %2508 = vmatpush.xpose.msra.mxu0 %v2485
    %2509 = vmatpush.xpose.msra.mxu0 %v2484
    %2510 = vmatpush.xpose.msra.mxu0 %v2483
    %2511 = vmatpush.xpose.msra.mxu0 %v2482
    %2512 = vmatpush.xpose.msra.mxu0 %v2481
    %2513 = vmatmul.f32.gmra.mxu0 %v2337
    %v2514 = vpop.f32.mrf.mxu0
    %v2515 = vadd.f32 0.0, %v2514
    %2516 = vmatmul.f32.gmra.mxu0 %v2340
    %v2517 = vpop.f32.mrf.mxu0
    %v2518 = vadd.f32 0.0, %v2517
    %2519 = vmatmul.f32.gmra.mxu0 %v2343
    %v2520 = vpop.f32.mrf.mxu0
    %v2521 = vadd.f32 0.0, %v2520
    %2522 = vmatmul.f32.gmra.mxu0 %v2346
    %v2523 = vpop.f32.mrf.mxu0
    %v2524 = vadd.f32 0.0, %v2523
    %2525 = vmatmul.f32.gmra.mxu0 %v2349
    %v2526 = vpop.f32.mrf.mxu0
    %v2527 = vadd.f32 0.0, %v2526
    %2528 = vmatmul.f32.gmra.mxu0 %v2352
    %v2529 = vpop.f32.mrf.mxu0
    %v2530 = vadd.f32 0.0, %v2529
    %2531 = vmatmul.f32.gmra.mxu0 %v2355
    %v2532 = vpop.f32.mrf.mxu0
    %v2533 = vadd.f32 0.0, %v2532
    %2534 = vmatmul.f32.gmra.mxu0 %v2358
    %v2535 = vpop.f32.mrf.mxu0
    %v2536 = vadd.f32 0.0, %v2535
    %2537 = vmatmul.f32.gmra.mxu0 %v2361
    %v2538 = vpop.f32.mrf.mxu0
    %v2539 = vadd.f32 0.0, %v2538
    %2540 = vmatmul.f32.gmra.mxu0 %v2364
    %v2541 = vpop.f32.mrf.mxu0
    %v2542 = vadd.f32 0.0, %v2541
    %2543 = vmatmul.f32.gmra.mxu0 %v2367
    %v2544 = vpop.f32.mrf.mxu0
    %v2545 = vadd.f32 0.0, %v2544
    %2546 = vmatmul.f32.gmra.mxu0 %v2370
    %v2547 = vpop.f32.mrf.mxu0
    %v2548 = vadd.f32 0.0, %v2547
    %2549 = vmatmul.f32.gmra.mxu0 %v2373
    %v2550 = vpop.f32.mrf.mxu0
    %v2551 = vadd.f32 0.0, %v2550
    %2552 = vmatmul.f32.gmra.mxu0 %v2376
    %v2553 = vpop.f32.mrf.mxu0
    %v2554 = vadd.f32 0.0, %v2553
    %2555 = vmatmul.f32.gmra.mxu0 %v2379
    %v2556 = vpop.f32.mrf.mxu0
    %v2557 = vadd.f32 0.0, %v2556
    %2558 = vmatmul.f32.gmra.mxu0 %v2382
    %v2559 = vpop.f32.mrf.mxu0
    %v2560 = vadd.f32 0.0, %v2559
    %2561 = vdwg.mxu0
    %v2562 = vmul.f32 %v943, %v2515
    %v2563 = vmul.f32 %v943, %v2518
    %v2564 = vmul.f32 %v943, %v2521
    %v2565 = vmul.f32 %v943, %v2524
    %v2566 = vmul.f32 %v943, %v2527
    %v2567 = vmul.f32 %v943, %v2530
    %v2568 = vmul.f32 %v943, %v2533
    %v2569 = vmul.f32 %v943, %v2536
    %v2570 = vmul.f32 %v943, %v2539
    %v2571 = vmul.f32 %v943, %v2542
    %v2572 = vmul.f32 %v943, %v2545
    %v2573 = vmul.f32 %v943, %v2548
    %v2574 = vmul.f32 %v943, %v2551
    %v2575 = vmul.f32 %v943, %v2554
    %v2576 = vmul.f32 %v943, %v2557
    %v2577 = vmul.f32 %v943, %v2560
    %v2578 = vxor.u32 %v2562, 2147483648
    %v2579 = vxor.u32 %v2563, 2147483648
    %v2580 = vxor.u32 %v2564, 2147483648
    %v2581 = vxor.u32 %v2565, 2147483648
    %v2582 = vxor.u32 %v2566, 2147483648
    %v2583 = vxor.u32 %v2567, 2147483648
    %v2584 = vxor.u32 %v2568, 2147483648
    %v2585 = vxor.u32 %v2569, 2147483648
    %v2586 = vxor.u32 %v2570, 2147483648
    %v2587 = vxor.u32 %v2571, 2147483648
    %v2588 = vxor.u32 %v2572, 2147483648
    %v2589 = vxor.u32 %v2573, 2147483648
    %v2590 = vxor.u32 %v2574, 2147483648
    %v2591 = vxor.u32 %v2575, 2147483648
    %v2592 = vxor.u32 %v2576, 2147483648
    %v2593 = vxor.u32 %v2577, 2147483648
    %v2594 = vmul.f32 %v2578, 1.442695
    %v2595 = vpow.pop %v2594
    %v2596 = vmul.f32 %v2579, 1.442695
    %v2597 = vpow.pop %v2596
    %v2598 = vmul.f32 %v2580, 1.442695
    %v2599 = vpow.pop %v2598
    %v2600 = vmul.f32 %v2581, 1.442695
    %v2601 = vpow.pop %v2600
    %v2602 = vmul.f32 %v2582, 1.442695
    %v2603 = vpow.pop %v2602
    %v2604 = vmul.f32 %v2583, 1.442695
    %v2605 = vpow.pop %v2604
    %v2606 = vmul.f32 %v2584, 1.442695
    %v2607 = vpow.pop %v2606
    %v2608 = vmul.f32 %v2585, 1.442695
    %v2609 = vpow.pop %v2608
    %v2610 = vmul.f32 %v2586, 1.442695
    %v2611 = vpow.pop %v2610
    %v2612 = vmul.f32 %v2587, 1.442695
    %v2613 = vpow.pop %v2612
    %v2614 = vmul.f32 %v2588, 1.442695
    %v2615 = vpow.pop %v2614
    %v2616 = vmul.f32 %v2589, 1.442695
    %v2617 = vpow.pop %v2616
    %v2618 = vmul.f32 %v2590, 1.442695
    %v2619 = vpow.pop %v2618
    %v2620 = vmul.f32 %v2591, 1.442695
    %v2621 = vpow.pop %v2620
    %v2622 = vmul.f32 %v2592, 1.442695
    %v2623 = vpow.pop %v2622
    %v2624 = vmul.f32 %v2593, 1.442695
    %v2625 = vpow.pop %v2624
    %v2626 = vadd.f32 %v2595, 1.0
    %v2627 = vadd.f32 %v2597, 1.0
    %v2628 = vadd.f32 %v2599, 1.0
    %v2629 = vadd.f32 %v2601, 1.0
    %v2630 = vadd.f32 %v2603, 1.0
    %v2631 = vadd.f32 %v2605, 1.0
    %v2632 = vadd.f32 %v2607, 1.0
    %v2633 = vadd.f32 %v2609, 1.0
    %v2634 = vadd.f32 %v2611, 1.0
    %v2635 = vadd.f32 %v2613, 1.0
    %v2636 = vadd.f32 %v2615, 1.0
    %v2637 = vadd.f32 %v2617, 1.0
    %v2638 = vadd.f32 %v2619, 1.0
    %v2639 = vadd.f32 %v2621, 1.0
    %v2640 = vadd.f32 %v2623, 1.0
    %v2641 = vadd.f32 %v2625, 1.0
    %v2642 = vrcp.pop %v2626
    %v2643 = vmul.f32 %v2626, %v2642
    %v2644 = vsub.f32 1.0, %v2643
    %v2645 = vmul.f32 %v2642, %v2644
    %v2646 = vadd.f32 %v2642, %v2645
    %vm2647 = vweird.f32 %v2626
    %vm2648 = vweird.f32 %v2642
    %vm2649 = vmor %vm2647, %vm2648
    %v2650 = vsel %vm2649, %v2642, %v2646
    %v2651 = vand.u32 2147483647, %v2626
    %vm2652 = vcmp.eq.f32.partialorder %v2651, 8.507059e+37
    %v2653 = vand.u32 %v2626, 2147483648
    %v2654 = vor.u32 1.1754944e-38, %v2653
    %v2655 = vsel %vm2652, %v2654, %v2650
    %v2656 = vmul.f32 1.0, %v2655
    %v2657 = vrcp.pop %v2627
    %v2658 = vmul.f32 %v2627, %v2657
    %v2659 = vsub.f32 1.0, %v2658
    %v2660 = vmul.f32 %v2657, %v2659
    %v2661 = vadd.f32 %v2657, %v2660
    %vm2662 = vweird.f32 %v2627
    %vm2663 = vweird.f32 %v2657
    %vm2664 = vmor %vm2662, %vm2663
    %v2665 = vsel %vm2664, %v2657, %v2661
    %v2666 = vand.u32 2147483647, %v2627
    %vm2667 = vcmp.eq.f32.partialorder %v2666, 8.507059e+37
    %v2668 = vand.u32 %v2627, 2147483648
    %v2669 = vor.u32 1.1754944e-38, %v2668
    %v2670 = vsel %vm2667, %v2669, %v2665
    %v2671 = vmul.f32 1.0, %v2670
    %v2672 = vrcp.pop %v2628
    %v2673 = vmul.f32 %v2628, %v2672
    %v2674 = vsub.f32 1.0, %v2673
    %v2675 = vmul.f32 %v2672, %v2674
    %v2676 = vadd.f32 %v2672, %v2675
    %vm2677 = vweird.f32 %v2628
    %vm2678 = vweird.f32 %v2672
    %vm2679 = vmor %vm2677, %vm2678
    %v2680 = vsel %vm2679, %v2672, %v2676
    %v2681 = vand.u32 2147483647, %v2628
    %vm2682 = vcmp.eq.f32.partialorder %v2681, 8.507059e+37
    %v2683 = vand.u32 %v2628, 2147483648
    %v2684 = vor.u32 1.1754944e-38, %v2683
    %v2685 = vsel %vm2682, %v2684, %v2680
    %v2686 = vmul.f32 1.0, %v2685
    %v2687 = vrcp.pop %v2629
    %v2688 = vmul.f32 %v2629, %v2687
    %v2689 = vsub.f32 1.0, %v2688
    %v2690 = vmul.f32 %v2687, %v2689
    %v2691 = vadd.f32 %v2687, %v2690
    %vm2692 = vweird.f32 %v2629
    %vm2693 = vweird.f32 %v2687
    %vm2694 = vmor %vm2692, %vm2693
    %v2695 = vsel %vm2694, %v2687, %v2691
    %v2696 = vand.u32 2147483647, %v2629
    %vm2697 = vcmp.eq.f32.partialorder %v2696, 8.507059e+37
    %v2698 = vand.u32 %v2629, 2147483648
    %v2699 = vor.u32 1.1754944e-38, %v2698
    %v2700 = vsel %vm2697, %v2699, %v2695
    %v2701 = vmul.f32 1.0, %v2700
    %v2702 = vrcp.pop %v2630
    %v2703 = vmul.f32 %v2630, %v2702
    %v2704 = vsub.f32 1.0, %v2703
    %v2705 = vmul.f32 %v2702, %v2704
    %v2706 = vadd.f32 %v2702, %v2705
    %vm2707 = vweird.f32 %v2630
    %vm2708 = vweird.f32 %v2702
    %vm2709 = vmor %vm2707, %vm2708
    %v2710 = vsel %vm2709, %v2702, %v2706
    %v2711 = vand.u32 2147483647, %v2630
    %vm2712 = vcmp.eq.f32.partialorder %v2711, 8.507059e+37
    %v2713 = vand.u32 %v2630, 2147483648
    %v2714 = vor.u32 1.1754944e-38, %v2713
    %v2715 = vsel %vm2712, %v2714, %v2710
    %v2716 = vmul.f32 1.0, %v2715
    %v2717 = vrcp.pop %v2631
    %v2718 = vmul.f32 %v2631, %v2717
    %v2719 = vsub.f32 1.0, %v2718
    %v2720 = vmul.f32 %v2717, %v2719
    %v2721 = vadd.f32 %v2717, %v2720
    %vm2722 = vweird.f32 %v2631
    %vm2723 = vweird.f32 %v2717
    %vm2724 = vmor %vm2722, %vm2723
    %v2725 = vsel %vm2724, %v2717, %v2721
    %v2726 = vand.u32 2147483647, %v2631
    %vm2727 = vcmp.eq.f32.partialorder %v2726, 8.507059e+37
    %v2728 = vand.u32 %v2631, 2147483648
    %v2729 = vor.u32 1.1754944e-38, %v2728
    %v2730 = vsel %vm2727, %v2729, %v2725
    %v2731 = vmul.f32 1.0, %v2730
    %v2732 = vrcp.pop %v2632
    %v2733 = vmul.f32 %v2632, %v2732
    %v2734 = vsub.f32 1.0, %v2733
    %v2735 = vmul.f32 %v2732, %v2734
    %v2736 = vadd.f32 %v2732, %v2735
    %vm2737 = vweird.f32 %v2632
    %vm2738 = vweird.f32 %v2732
    %vm2739 = vmor %vm2737, %vm2738
    %v2740 = vsel %vm2739, %v2732, %v2736
    %v2741 = vand.u32 2147483647, %v2632
    %vm2742 = vcmp.eq.f32.partialorder %v2741, 8.507059e+37
    %v2743 = vand.u32 %v2632, 2147483648
    %v2744 = vor.u32 1.1754944e-38, %v2743
    %v2745 = vsel %vm2742, %v2744, %v2740
    %v2746 = vmul.f32 1.0, %v2745
    %v2747 = vrcp.pop %v2633
    %v2748 = vmul.f32 %v2633, %v2747
    %v2749 = vsub.f32 1.0, %v2748
    %v2750 = vmul.f32 %v2747, %v2749
    %v2751 = vadd.f32 %v2747, %v2750
    %vm2752 = vweird.f32 %v2633
    %vm2753 = vweird.f32 %v2747
    %vm2754 = vmor %vm2752, %vm2753
    %v2755 = vsel %vm2754, %v2747, %v2751
    %v2756 = vand.u32 2147483647, %v2633
    %vm2757 = vcmp.eq.f32.partialorder %v2756, 8.507059e+37
    %v2758 = vand.u32 %v2633, 2147483648
    %v2759 = vor.u32 1.1754944e-38, %v2758
    %v2760 = vsel %vm2757, %v2759, %v2755
    %v2761 = vmul.f32 1.0, %v2760
    %v2762 = vrcp.pop %v2634
    %v2763 = vmul.f32 %v2634, %v2762
    %v2764 = vsub.f32 1.0, %v2763
    %v2765 = vmul.f32 %v2762, %v2764
    %v2766 = vadd.f32 %v2762, %v2765
    %vm2767 = vweird.f32 %v2634
    %vm2768 = vweird.f32 %v2762
    %vm2769 = vmor %vm2767, %vm2768
    %v2770 = vsel %vm2769, %v2762, %v2766
    %v2771 = vand.u32 2147483647, %v2634
    %vm2772 = vcmp.eq.f32.partialorder %v2771, 8.507059e+37
    %v2773 = vand.u32 %v2634, 2147483648
    %v2774 = vor.u32 1.1754944e-38, %v2773
    %v2775 = vsel %vm2772, %v2774, %v2770
    %v2776 = vmul.f32 1.0, %v2775
    %v2777 = vrcp.pop %v2635
    %v2778 = vmul.f32 %v2635, %v2777
    %v2779 = vsub.f32 1.0, %v2778
    %v2780 = vmul.f32 %v2777, %v2779
    %v2781 = vadd.f32 %v2777, %v2780
    %vm2782 = vweird.f32 %v2635
    %vm2783 = vweird.f32 %v2777
    %vm2784 = vmor %vm2782, %vm2783
    %v2785 = vsel %vm2784, %v2777, %v2781
    %v2786 = vand.u32 2147483647, %v2635
    %vm2787 = vcmp.eq.f32.partialorder %v2786, 8.507059e+37
    %v2788 = vand.u32 %v2635, 2147483648
    %v2789 = vor.u32 1.1754944e-38, %v2788
    %v2790 = vsel %vm2787, %v2789, %v2785
    %v2791 = vmul.f32 1.0, %v2790
    %v2792 = vrcp.pop %v2636
    %v2793 = vmul.f32 %v2636, %v2792
    %v2794 = vsub.f32 1.0, %v2793
    %v2795 = vmul.f32 %v2792, %v2794
    %v2796 = vadd.f32 %v2792, %v2795
    %vm2797 = vweird.f32 %v2636
    %vm2798 = vweird.f32 %v2792
    %vm2799 = vmor %vm2797, %vm2798
    %v2800 = vsel %vm2799, %v2792, %v2796
    %v2801 = vand.u32 2147483647, %v2636
    %vm2802 = vcmp.eq.f32.partialorder %v2801, 8.507059e+37
    %v2803 = vand.u32 %v2636, 2147483648
    %v2804 = vor.u32 1.1754944e-38, %v2803
    %v2805 = vsel %vm2802, %v2804, %v2800
    %v2806 = vmul.f32 1.0, %v2805
    %v2807 = vrcp.pop %v2637
    %v2808 = vmul.f32 %v2637, %v2807
    %v2809 = vsub.f32 1.0, %v2808
    %v2810 = vmul.f32 %v2807, %v2809
    %v2811 = vadd.f32 %v2807, %v2810
    %vm2812 = vweird.f32 %v2637
    %vm2813 = vweird.f32 %v2807
    %vm2814 = vmor %vm2812, %vm2813
    %v2815 = vsel %vm2814, %v2807, %v2811
    %v2816 = vand.u32 2147483647, %v2637
    %vm2817 = vcmp.eq.f32.partialorder %v2816, 8.507059e+37
    %v2818 = vand.u32 %v2637, 2147483648
    %v2819 = vor.u32 1.1754944e-38, %v2818
    %v2820 = vsel %vm2817, %v2819, %v2815
    %v2821 = vmul.f32 1.0, %v2820
    %v2822 = vrcp.pop %v2638
    %v2823 = vmul.f32 %v2638, %v2822
    %v2824 = vsub.f32 1.0, %v2823
    %v2825 = vmul.f32 %v2822, %v2824
    %v2826 = vadd.f32 %v2822, %v2825
    %vm2827 = vweird.f32 %v2638
    %vm2828 = vweird.f32 %v2822
    %vm2829 = vmor %vm2827, %vm2828
    %v2830 = vsel %vm2829, %v2822, %v2826
    %v2831 = vand.u32 2147483647, %v2638
    %vm2832 = vcmp.eq.f32.partialorder %v2831, 8.507059e+37
    %v2833 = vand.u32 %v2638, 2147483648
    %v2834 = vor.u32 1.1754944e-38, %v2833
    %v2835 = vsel %vm2832, %v2834, %v2830
    %v2836 = vmul.f32 1.0, %v2835
    %v2837 = vrcp.pop %v2639
    %v2838 = vmul.f32 %v2639, %v2837
    %v2839 = vsub.f32 1.0, %v2838
    %v2840 = vmul.f32 %v2837, %v2839
    %v2841 = vadd.f32 %v2837, %v2840
    %vm2842 = vweird.f32 %v2639
    %vm2843 = vweird.f32 %v2837
    %vm2844 = vmor %vm2842, %vm2843
    %v2845 = vsel %vm2844, %v2837, %v2841
    %v2846 = vand.u32 2147483647, %v2639
    %vm2847 = vcmp.eq.f32.partialorder %v2846, 8.507059e+37
    %v2848 = vand.u32 %v2639, 2147483648
    %v2849 = vor.u32 1.1754944e-38, %v2848
    %v2850 = vsel %vm2847, %v2849, %v2845
    %v2851 = vmul.f32 1.0, %v2850
    %v2852 = vrcp.pop %v2640
    %v2853 = vmul.f32 %v2640, %v2852
    %v2854 = vsub.f32 1.0, %v2853
    %v2855 = vmul.f32 %v2852, %v2854
    %v2856 = vadd.f32 %v2852, %v2855
    %vm2857 = vweird.f32 %v2640
    %vm2858 = vweird.f32 %v2852
    %vm2859 = vmor %vm2857, %vm2858
    %v2860 = vsel %vm2859, %v2852, %v2856
    %v2861 = vand.u32 2147483647, %v2640
    %vm2862 = vcmp.eq.f32.partialorder %v2861, 8.507059e+37
    %v2863 = vand.u32 %v2640, 2147483648
    %v2864 = vor.u32 1.1754944e-38, %v2863
    %v2865 = vsel %vm2862, %v2864, %v2860
    %v2866 = vmul.f32 1.0, %v2865
    %v2867 = vrcp.pop %v2641
    %v2868 = vmul.f32 %v2641, %v2867
    %v2869 = vsub.f32 1.0, %v2868
    %v2870 = vmul.f32 %v2867, %v2869
    %v2871 = vadd.f32 %v2867, %v2870
    %vm2872 = vweird.f32 %v2641
    %vm2873 = vweird.f32 %v2867
    %vm2874 = vmor %vm2872, %vm2873
    %v2875 = vsel %vm2874, %v2867, %v2871
    %v2876 = vand.u32 2147483647, %v2641
    %vm2877 = vcmp.eq.f32.partialorder %v2876, 8.507059e+37
    %v2878 = vand.u32 %v2641, 2147483648
    %v2879 = vor.u32 1.1754944e-38, %v2878
    %v2880 = vsel %vm2877, %v2879, %v2875
    %v2881 = vmul.f32 1.0, %v2880
    %v2882 = vmul.f32 %v2515, %v2656
    %v2883 = vmul.f32 %v2518, %v2671
    %v2884 = vmul.f32 %v2521, %v2686
    %v2885 = vmul.f32 %v2524, %v2701
    %v2886 = vmul.f32 %v2527, %v2716
    %v2887 = vmul.f32 %v2530, %v2731
    %v2888 = vmul.f32 %v2533, %v2746
    %v2889 = vmul.f32 %v2536, %v2761
    %v2890 = vmul.f32 %v2539, %v2776
    %v2891 = vmul.f32 %v2542, %v2791
    %v2892 = vmul.f32 %v2545, %v2806
    %v2893 = vmul.f32 %v2548, %v2821
    %v2894 = vmul.f32 %v2551, %v2836
    %v2895 = vmul.f32 %v2554, %v2851
    %v2896 = vmul.f32 %v2557, %v2866
    %v2897 = vmul.f32 %v2560, %v2881
    %v2898 = vsel %vm258, %v2882, -1e+30
    %v2899 = vsel %vm259, %v2883, -1e+30
    %v2900 = vsel %vm260, %v2884, -1e+30
    %v2901 = vsel %vm261, %v2885, -1e+30
    %v2902 = vsel %vm262, %v2886, -1e+30
    %v2903 = vsel %vm263, %v2887, -1e+30
    %v2904 = vsel %vm264, %v2888, -1e+30
    %v2905 = vsel %vm265, %v2889, -1e+30
    %v2906 = vsel %vm266, %v2890, -1e+30
    %v2907 = vsel %vm267, %v2891, -1e+30
    %v2908 = vsel %vm268, %v2892, -1e+30
    %v2909 = vsel %vm269, %v2893, -1e+30
    %v2910 = vsel %vm270, %v2894, -1e+30
    %v2911 = vsel %vm271, %v2895, -1e+30
    %v2912 = vsel %vm272, %v2896, -1e+30
    %v2913 = vsel %vm273, %v2897, -1e+30
    %2914 = vmax.xlane.f32.xlu0 %v2898
    %v2915 = vpop.xlane.xlu0 %2914
    %2916 = vmax.xlane.f32.xlu0 %v2899
    %v2917 = vpop.xlane.xlu0 %2916
    %2918 = vmax.xlane.f32.xlu0 %v2900
    %v2919 = vpop.xlane.xlu0 %2918
    %2920 = vmax.xlane.f32.xlu0 %v2901
    %v2921 = vpop.xlane.xlu0 %2920
    %2922 = vmax.xlane.f32.xlu0 %v2902
    %v2923 = vpop.xlane.xlu0 %2922
    %2924 = vmax.xlane.f32.xlu0 %v2903
    %v2925 = vpop.xlane.xlu0 %2924
    %2926 = vmax.xlane.f32.xlu0 %v2904
    %v2927 = vpop.xlane.xlu0 %2926
    %2928 = vmax.xlane.f32.xlu0 %v2905
    %v2929 = vpop.xlane.xlu0 %2928
    %2930 = vmax.xlane.f32.xlu0 %v2906
    %v2931 = vpop.xlane.xlu0 %2930
    %2932 = vmax.xlane.f32.xlu0 %v2907
    %v2933 = vpop.xlane.xlu0 %2932
    %2934 = vmax.xlane.f32.xlu0 %v2908
    %v2935 = vpop.xlane.xlu0 %2934
    %2936 = vmax.xlane.f32.xlu0 %v2909
    %v2937 = vpop.xlane.xlu0 %2936
    %2938 = vmax.xlane.f32.xlu0 %v2910
    %v2939 = vpop.xlane.xlu0 %2938
    %2940 = vmax.xlane.f32.xlu0 %v2911
    %v2941 = vpop.xlane.xlu0 %2940
    %2942 = vmax.xlane.f32.xlu0 %v2912
    %v2943 = vpop.xlane.xlu0 %2942
    %2944 = vmax.xlane.f32.xlu0 %v2913
    %v2945 = vpop.xlane.xlu0 %2944
    %v2946 = vsub.f32 %v2898, %v2915
    %v2947 = vsub.f32 %v2899, %v2917
    %v2948 = vsub.f32 %v2900, %v2919
    %v2949 = vsub.f32 %v2901, %v2921
    %v2950 = vsub.f32 %v2902, %v2923
    %v2951 = vsub.f32 %v2903, %v2925
    %v2952 = vsub.f32 %v2904, %v2927
    %v2953 = vsub.f32 %v2905, %v2929
    %v2954 = vsub.f32 %v2906, %v2931
    %v2955 = vsub.f32 %v2907, %v2933
    %v2956 = vsub.f32 %v2908, %v2935
    %v2957 = vsub.f32 %v2909, %v2937
    %v2958 = vsub.f32 %v2910, %v2939
    %v2959 = vsub.f32 %v2911, %v2941
    %v2960 = vsub.f32 %v2912, %v2943
    %v2961 = vsub.f32 %v2913, %v2945
    %v2962 = vmul.f32 %v2946, 1.442695
    %v2963 = vpow.pop %v2962
    %v2964 = vmul.f32 %v2947, 1.442695
    %v2965 = vpow.pop %v2964
    %v2966 = vmul.f32 %v2948, 1.442695
    %v2967 = vpow.pop %v2966
    %v2968 = vmul.f32 %v2949, 1.442695
    %v2969 = vpow.pop %v2968
    %v2970 = vmul.f32 %v2950, 1.442695
    %v2971 = vpow.pop %v2970
    %v2972 = vmul.f32 %v2951, 1.442695
    %v2973 = vpow.pop %v2972
    %v2974 = vmul.f32 %v2952, 1.442695
    %v2975 = vpow.pop %v2974
    %v2976 = vmul.f32 %v2953, 1.442695
    %v2977 = vpow.pop %v2976
    %v2978 = vmul.f32 %v2954, 1.442695
    %v2979 = vpow.pop %v2978
    %v2980 = vmul.f32 %v2955, 1.442695
    %v2981 = vpow.pop %v2980
    %v2982 = vmul.f32 %v2956, 1.442695
    %v2983 = vpow.pop %v2982
    %v2984 = vmul.f32 %v2957, 1.442695
    %v2985 = vpow.pop %v2984
    %v2986 = vmul.f32 %v2958, 1.442695
    %v2987 = vpow.pop %v2986
    %v2988 = vmul.f32 %v2959, 1.442695
    %v2989 = vpow.pop %v2988
    %v2990 = vmul.f32 %v2960, 1.442695
    %v2991 = vpow.pop %v2990
    %v2992 = vmul.f32 %v2961, 1.442695
    %v2993 = vpow.pop %v2992
    %v2994 = vmul.f32 %v2963, %v242
    %v2995 = vmul.f32 %v2965, %v243
    %v2996 = vmul.f32 %v2967, %v244
    %v2997 = vmul.f32 %v2969, %v245
    %v2998 = vmul.f32 %v2971, %v246
    %v2999 = vmul.f32 %v2973, %v247
    %v3000 = vmul.f32 %v2975, %v248
    %v3001 = vmul.f32 %v2977, %v249
    %v3002 = vmul.f32 %v2979, %v250
    %v3003 = vmul.f32 %v2981, %v251
    %v3004 = vmul.f32 %v2983, %v252
    %v3005 = vmul.f32 %v2985, %v253
    %v3006 = vmul.f32 %v2987, %v254
    %v3007 = vmul.f32 %v2989, %v255
    %v3008 = vmul.f32 %v2991, %v256
    %v3009 = vmul.f32 %v2993, %v257
    %3010 = vadd.xlane.f32.xlu0 %v2994
    %v3011 = vpop.xlane.xlu0 %3010
    %3012 = vadd.xlane.f32.xlu0 %v2995
    %v3013 = vpop.xlane.xlu0 %3012
    %3014 = vadd.xlane.f32.xlu0 %v2996
    %v3015 = vpop.xlane.xlu0 %3014
    %3016 = vadd.xlane.f32.xlu0 %v2997
    %v3017 = vpop.xlane.xlu0 %3016
    %3018 = vadd.xlane.f32.xlu0 %v2998
    %v3019 = vpop.xlane.xlu0 %3018
    %3020 = vadd.xlane.f32.xlu0 %v2999
    %v3021 = vpop.xlane.xlu0 %3020
    %3022 = vadd.xlane.f32.xlu0 %v3000
    %v3023 = vpop.xlane.xlu0 %3022
    %3024 = vadd.xlane.f32.xlu0 %v3001
    %v3025 = vpop.xlane.xlu0 %3024
    %3026 = vadd.xlane.f32.xlu0 %v3002
    %v3027 = vpop.xlane.xlu0 %3026
    %3028 = vadd.xlane.f32.xlu0 %v3003
    %v3029 = vpop.xlane.xlu0 %3028
    %3030 = vadd.xlane.f32.xlu0 %v3004
    %v3031 = vpop.xlane.xlu0 %3030
    %3032 = vadd.xlane.f32.xlu0 %v3005
    %v3033 = vpop.xlane.xlu0 %3032
    %3034 = vadd.xlane.f32.xlu0 %v3006
    %v3035 = vpop.xlane.xlu0 %3034
    %3036 = vadd.xlane.f32.xlu0 %v3007
    %v3037 = vpop.xlane.xlu0 %3036
    %3038 = vadd.xlane.f32.xlu0 %v3008
    %v3039 = vpop.xlane.xlu0 %3038
    %3040 = vadd.xlane.f32.xlu0 %v3009
    %v3041 = vpop.xlane.xlu0 %3040
    %v3042 = vmax.f32 %v3011, 1e-16
    %v3043 = vmax.f32 %v3013, 1e-16
    %v3044 = vmax.f32 %v3015, 1e-16
    %v3045 = vmax.f32 %v3017, 1e-16
    %v3046 = vmax.f32 %v3019, 1e-16
    %v3047 = vmax.f32 %v3021, 1e-16
    %v3048 = vmax.f32 %v3023, 1e-16
    %v3049 = vmax.f32 %v3025, 1e-16
    %v3050 = vmax.f32 %v3027, 1e-16
    %v3051 = vmax.f32 %v3029, 1e-16
    %v3052 = vmax.f32 %v3031, 1e-16
    %v3053 = vmax.f32 %v3033, 1e-16
    %v3054 = vmax.f32 %v3035, 1e-16
    %v3055 = vmax.f32 %v3037, 1e-16
    %v3056 = vmax.f32 %v3039, 1e-16
    %v3057 = vmax.f32 %v3041, 1e-16
    %v3058 = vrcp.pop %v3042
    %v3059 = vmul.f32 %v3042, %v3058
    %v3060 = vsub.f32 1.0, %v3059
    %v3061 = vmul.f32 %v3058, %v3060
    %v3062 = vadd.f32 %v3058, %v3061
    %vm3063 = vweird.f32 %v3042
    %vm3064 = vweird.f32 %v3058
    %vm3065 = vmor %vm3063, %vm3064
    %v3066 = vsel %vm3065, %v3058, %v3062
    %v3067 = vand.u32 2147483647, %v3042
    %vm3068 = vcmp.eq.f32.partialorder %v3067, 8.507059e+37
    %v3069 = vand.u32 %v3042, 2147483648
    %v3070 = vor.u32 1.1754944e-38, %v3069
    %v3071 = vsel %vm3068, %v3070, %v3066
    %v3072 = vrcp.pop %v3043
    %v3073 = vmul.f32 %v3043, %v3072
    %v3074 = vsub.f32 1.0, %v3073
    %v3075 = vmul.f32 %v3072, %v3074
    %v3076 = vadd.f32 %v3072, %v3075
    %vm3077 = vweird.f32 %v3043
    %vm3078 = vweird.f32 %v3072
    %vm3079 = vmor %vm3077, %vm3078
    %v3080 = vsel %vm3079, %v3072, %v3076
    %v3081 = vand.u32 2147483647, %v3043
    %vm3082 = vcmp.eq.f32.partialorder %v3081, 8.507059e+37
    %v3083 = vand.u32 %v3043, 2147483648
    %v3084 = vor.u32 1.1754944e-38, %v3083
    %v3085 = vsel %vm3082, %v3084, %v3080
    %v3086 = vrcp.pop %v3044
    %v3087 = vmul.f32 %v3044, %v3086
    %v3088 = vsub.f32 1.0, %v3087
    %v3089 = vmul.f32 %v3086, %v3088
    %v3090 = vadd.f32 %v3086, %v3089
    %vm3091 = vweird.f32 %v3044
    %vm3092 = vweird.f32 %v3086
    %vm3093 = vmor %vm3091, %vm3092
    %v3094 = vsel %vm3093, %v3086, %v3090
    %v3095 = vand.u32 2147483647, %v3044
    %vm3096 = vcmp.eq.f32.partialorder %v3095, 8.507059e+37
    %v3097 = vand.u32 %v3044, 2147483648
    %v3098 = vor.u32 1.1754944e-38, %v3097
    %v3099 = vsel %vm3096, %v3098, %v3094
    %v3100 = vrcp.pop %v3045
    %v3101 = vmul.f32 %v3045, %v3100
    %v3102 = vsub.f32 1.0, %v3101
    %v3103 = vmul.f32 %v3100, %v3102
    %v3104 = vadd.f32 %v3100, %v3103
    %vm3105 = vweird.f32 %v3045
    %vm3106 = vweird.f32 %v3100
    %vm3107 = vmor %vm3105, %vm3106
    %v3108 = vsel %vm3107, %v3100, %v3104
    %v3109 = vand.u32 2147483647, %v3045
    %vm3110 = vcmp.eq.f32.partialorder %v3109, 8.507059e+37
    %v3111 = vand.u32 %v3045, 2147483648
    %v3112 = vor.u32 1.1754944e-38, %v3111
    %v3113 = vsel %vm3110, %v3112, %v3108
    %v3114 = vrcp.pop %v3046
    %v3115 = vmul.f32 %v3046, %v3114
    %v3116 = vsub.f32 1.0, %v3115
    %v3117 = vmul.f32 %v3114, %v3116
    %v3118 = vadd.f32 %v3114, %v3117
    %vm3119 = vweird.f32 %v3046
    %vm3120 = vweird.f32 %v3114
    %vm3121 = vmor %vm3119, %vm3120
    %v3122 = vsel %vm3121, %v3114, %v3118
    %v3123 = vand.u32 2147483647, %v3046
    %vm3124 = vcmp.eq.f32.partialorder %v3123, 8.507059e+37
    %v3125 = vand.u32 %v3046, 2147483648
    %v3126 = vor.u32 1.1754944e-38, %v3125
    %v3127 = vsel %vm3124, %v3126, %v3122
    %v3128 = vrcp.pop %v3047
    %v3129 = vmul.f32 %v3047, %v3128
    %v3130 = vsub.f32 1.0, %v3129
    %v3131 = vmul.f32 %v3128, %v3130
    %v3132 = vadd.f32 %v3128, %v3131
    %vm3133 = vweird.f32 %v3047
    %vm3134 = vweird.f32 %v3128
    %vm3135 = vmor %vm3133, %vm3134
    %v3136 = vsel %vm3135, %v3128, %v3132
    %v3137 = vand.u32 2147483647, %v3047
    %vm3138 = vcmp.eq.f32.partialorder %v3137, 8.507059e+37
    %v3139 = vand.u32 %v3047, 2147483648
    %v3140 = vor.u32 1.1754944e-38, %v3139
    %v3141 = vsel %vm3138, %v3140, %v3136
    %v3142 = vrcp.pop %v3048
    %v3143 = vmul.f32 %v3048, %v3142
    %v3144 = vsub.f32 1.0, %v3143
    %v3145 = vmul.f32 %v3142, %v3144
    %v3146 = vadd.f32 %v3142, %v3145
    %vm3147 = vweird.f32 %v3048
    %vm3148 = vweird.f32 %v3142
    %vm3149 = vmor %vm3147, %vm3148
    %v3150 = vsel %vm3149, %v3142, %v3146
    %v3151 = vand.u32 2147483647, %v3048
    %vm3152 = vcmp.eq.f32.partialorder %v3151, 8.507059e+37
    %v3153 = vand.u32 %v3048, 2147483648
    %v3154 = vor.u32 1.1754944e-38, %v3153
    %v3155 = vsel %vm3152, %v3154, %v3150
    %v3156 = vrcp.pop %v3049
    %v3157 = vmul.f32 %v3049, %v3156
    %v3158 = vsub.f32 1.0, %v3157
    %v3159 = vmul.f32 %v3156, %v3158
    %v3160 = vadd.f32 %v3156, %v3159
    %vm3161 = vweird.f32 %v3049
    %vm3162 = vweird.f32 %v3156
    %vm3163 = vmor %vm3161, %vm3162
    %v3164 = vsel %vm3163, %v3156, %v3160
    %v3165 = vand.u32 2147483647, %v3049
    %vm3166 = vcmp.eq.f32.partialorder %v3165, 8.507059e+37
    %v3167 = vand.u32 %v3049, 2147483648
    %v3168 = vor.u32 1.1754944e-38, %v3167
    %v3169 = vsel %vm3166, %v3168, %v3164
    %v3170 = vrcp.pop %v3050
    %v3171 = vmul.f32 %v3050, %v3170
    %v3172 = vsub.f32 1.0, %v3171
    %v3173 = vmul.f32 %v3170, %v3172
    %v3174 = vadd.f32 %v3170, %v3173
    %vm3175 = vweird.f32 %v3050
    %vm3176 = vweird.f32 %v3170
    %vm3177 = vmor %vm3175, %vm3176
    %v3178 = vsel %vm3177, %v3170, %v3174
    %v3179 = vand.u32 2147483647, %v3050
    %vm3180 = vcmp.eq.f32.partialorder %v3179, 8.507059e+37
    %v3181 = vand.u32 %v3050, 2147483648
    %v3182 = vor.u32 1.1754944e-38, %v3181
    %v3183 = vsel %vm3180, %v3182, %v3178
    %v3184 = vrcp.pop %v3051
    %v3185 = vmul.f32 %v3051, %v3184
    %v3186 = vsub.f32 1.0, %v3185
    %v3187 = vmul.f32 %v3184, %v3186
    %v3188 = vadd.f32 %v3184, %v3187
    %vm3189 = vweird.f32 %v3051
    %vm3190 = vweird.f32 %v3184
    %vm3191 = vmor %vm3189, %vm3190
    %v3192 = vsel %vm3191, %v3184, %v3188
    %v3193 = vand.u32 2147483647, %v3051
    %vm3194 = vcmp.eq.f32.partialorder %v3193, 8.507059e+37
    %v3195 = vand.u32 %v3051, 2147483648
    %v3196 = vor.u32 1.1754944e-38, %v3195
    %v3197 = vsel %vm3194, %v3196, %v3192
    %v3198 = vrcp.pop %v3052
    %v3199 = vmul.f32 %v3052, %v3198
    %v3200 = vsub.f32 1.0, %v3199
    %v3201 = vmul.f32 %v3198, %v3200
    %v3202 = vadd.f32 %v3198, %v3201
    %vm3203 = vweird.f32 %v3052
    %vm3204 = vweird.f32 %v3198
    %vm3205 = vmor %vm3203, %vm3204
    %v3206 = vsel %vm3205, %v3198, %v3202
    %v3207 = vand.u32 2147483647, %v3052
    %vm3208 = vcmp.eq.f32.partialorder %v3207, 8.507059e+37
    %v3209 = vand.u32 %v3052, 2147483648
    %v3210 = vor.u32 1.1754944e-38, %v3209
    %v3211 = vsel %vm3208, %v3210, %v3206
    %v3212 = vrcp.pop %v3053
    %v3213 = vmul.f32 %v3053, %v3212
    %v3214 = vsub.f32 1.0, %v3213
    %v3215 = vmul.f32 %v3212, %v3214
    %v3216 = vadd.f32 %v3212, %v3215
    %vm3217 = vweird.f32 %v3053
    %vm3218 = vweird.f32 %v3212
    %vm3219 = vmor %vm3217, %vm3218
    %v3220 = vsel %vm3219, %v3212, %v3216
    %v3221 = vand.u32 2147483647, %v3053
    %vm3222 = vcmp.eq.f32.partialorder %v3221, 8.507059e+37
    %v3223 = vand.u32 %v3053, 2147483648
    %v3224 = vor.u32 1.1754944e-38, %v3223
    %v3225 = vsel %vm3222, %v3224, %v3220
    %v3226 = vrcp.pop %v3054
    %v3227 = vmul.f32 %v3054, %v3226
    %v3228 = vsub.f32 1.0, %v3227
    %v3229 = vmul.f32 %v3226, %v3228
    %v3230 = vadd.f32 %v3226, %v3229
    %vm3231 = vweird.f32 %v3054
    %vm3232 = vweird.f32 %v3226
    %vm3233 = vmor %vm3231, %vm3232
    %v3234 = vsel %vm3233, %v3226, %v3230
    %v3235 = vand.u32 2147483647, %v3054
    %vm3236 = vcmp.eq.f32.partialorder %v3235, 8.507059e+37
    %v3237 = vand.u32 %v3054, 2147483648
    %v3238 = vor.u32 1.1754944e-38, %v3237
    %v3239 = vsel %vm3236, %v3238, %v3234
    %v3240 = vrcp.pop %v3055
    %v3241 = vmul.f32 %v3055, %v3240
    %v3242 = vsub.f32 1.0, %v3241
    %v3243 = vmul.f32 %v3240, %v3242
    %v3244 = vadd.f32 %v3240, %v3243
    %vm3245 = vweird.f32 %v3055
    %vm3246 = vweird.f32 %v3240
    %vm3247 = vmor %vm3245, %vm3246
    %v3248 = vsel %vm3247, %v3240, %v3244
    %v3249 = vand.u32 2147483647, %v3055
    %vm3250 = vcmp.eq.f32.partialorder %v3249, 8.507059e+37
    %v3251 = vand.u32 %v3055, 2147483648
    %v3252 = vor.u32 1.1754944e-38, %v3251
    %v3253 = vsel %vm3250, %v3252, %v3248
    %v3254 = vrcp.pop %v3056
    %v3255 = vmul.f32 %v3056, %v3254
    %v3256 = vsub.f32 1.0, %v3255
    %v3257 = vmul.f32 %v3254, %v3256
    %v3258 = vadd.f32 %v3254, %v3257
    %vm3259 = vweird.f32 %v3056
    %vm3260 = vweird.f32 %v3254
    %vm3261 = vmor %vm3259, %vm3260
    %v3262 = vsel %vm3261, %v3254, %v3258
    %v3263 = vand.u32 2147483647, %v3056
    %vm3264 = vcmp.eq.f32.partialorder %v3263, 8.507059e+37
    %v3265 = vand.u32 %v3056, 2147483648
    %v3266 = vor.u32 1.1754944e-38, %v3265
    %v3267 = vsel %vm3264, %v3266, %v3262
    %v3268 = vrcp.pop %v3057
    %v3269 = vmul.f32 %v3057, %v3268
    %v3270 = vsub.f32 1.0, %v3269
    %v3271 = vmul.f32 %v3268, %v3270
    %v3272 = vadd.f32 %v3268, %v3271
    %vm3273 = vweird.f32 %v3057
    %vm3274 = vweird.f32 %v3268
    %vm3275 = vmor %vm3273, %vm3274
    %v3276 = vsel %vm3275, %v3268, %v3272
    %v3277 = vand.u32 2147483647, %v3057
    %vm3278 = vcmp.eq.f32.partialorder %v3277, 8.507059e+37
    %v3279 = vand.u32 %v3057, 2147483648
    %v3280 = vor.u32 1.1754944e-38, %v3279
    %v3281 = vsel %vm3278, %v3280, %v3276
    %v3282 = vmul.f32 %v2994, %v3071
    %v3283 = vmul.f32 %v2995, %v3085
    %v3284 = vmul.f32 %v2996, %v3099
    %v3285 = vmul.f32 %v2997, %v3113
    %v3286 = vmul.f32 %v2998, %v3127
    %v3287 = vmul.f32 %v2999, %v3141
    %v3288 = vmul.f32 %v3000, %v3155
    %v3289 = vmul.f32 %v3001, %v3169
    %v3290 = vmul.f32 %v3002, %v3183
    %v3291 = vmul.f32 %v3003, %v3197
    %v3292 = vmul.f32 %v3004, %v3211
    %v3293 = vmul.f32 %v3005, %v3225
    %v3294 = vmul.f32 %v3006, %v3239
    %v3295 = vmul.f32 %v3007, %v3253
    %v3296 = vmul.f32 %v3008, %v3267
    %v3297 = vmul.f32 %v3009, %v3281
    %v3299 = vperm.slane %v2300, 0
    %3301 = vmatpush.msra.mxu0 %v2382
    %3302 = vmatpush.msra.mxu0 %v2379
    %3303 = vmatpush.msra.mxu0 %v2376
    %3304 = vmatpush.msra.mxu0 %v2373
    %3305 = vmatpush.msra.mxu0 %v2370
    %3306 = vmatpush.msra.mxu0 %v2367
    %3307 = vmatpush.msra.mxu0 %v2364
    %3308 = vmatpush.msra.mxu0 %v2361
    %3309 = vmatpush.msra.mxu0 %v2358
    %3310 = vmatpush.msra.mxu0 %v2355
    %3311 = vmatpush.msra.mxu0 %v2352
    %3312 = vmatpush.msra.mxu0 %v2349
    %3313 = vmatpush.msra.mxu0 %v2346
    %3314 = vmatpush.msra.mxu0 %v2343
    %3315 = vmatpush.msra.mxu0 %v2340
    %3316 = vmatpush.msra.mxu0 %v2337
    %3317 = vmatmul.f32.gmra.mxu0 %v3282
    %v3318 = vpop.f32.mrf.mxu0
    %v3319 = vadd.f32 %v3299, %v3318
    %3320 = vmatmul.f32.gmra.mxu0 %v3283
    %v3321 = vpop.f32.mrf.mxu0
    %v3322 = vadd.f32 %v3299, %v3321
    %3323 = vmatmul.f32.gmra.mxu0 %v3284
    %v3324 = vpop.f32.mrf.mxu0
    %v3325 = vadd.f32 %v3299, %v3324
    %3326 = vmatmul.f32.gmra.mxu0 %v3285
    %v3327 = vpop.f32.mrf.mxu0
    %v3328 = vadd.f32 %v3299, %v3327
    %3329 = vmatmul.f32.gmra.mxu0 %v3286
    %v3330 = vpop.f32.mrf.mxu0
    %v3331 = vadd.f32 %v3299, %v3330
    %3332 = vmatmul.f32.gmra.mxu0 %v3287
    %v3333 = vpop.f32.mrf.mxu0
    %v3334 = vadd.f32 %v3299, %v3333
    %3335 = vmatmul.f32.gmra.mxu0 %v3288
    %v3336 = vpop.f32.mrf.mxu0
    %v3337 = vadd.f32 %v3299, %v3336
    %3338 = vmatmul.f32.gmra.mxu0 %v3289
    %v3339 = vpop.f32.mrf.mxu0
    %v3340 = vadd.f32 %v3299, %v3339
    %3341 = vmatmul.f32.gmra.mxu0 %v3290
    %v3342 = vpop.f32.mrf.mxu0
    %v3343 = vadd.f32 %v3299, %v3342
    %3344 = vmatmul.f32.gmra.mxu0 %v3291
    %v3345 = vpop.f32.mrf.mxu0
    %v3346 = vadd.f32 %v3299, %v3345
    %3347 = vmatmul.f32.gmra.mxu0 %v3292
    %v3348 = vpop.f32.mrf.mxu0
    %v3349 = vadd.f32 %v3299, %v3348
    %3350 = vmatmul.f32.gmra.mxu0 %v3293
    %v3351 = vpop.f32.mrf.mxu0
    %v3352 = vadd.f32 %v3299, %v3351
    %3353 = vmatmul.f32.gmra.mxu0 %v3294
    %v3354 = vpop.f32.mrf.mxu0
    %v3355 = vadd.f32 %v3299, %v3354
    %3356 = vmatmul.f32.gmra.mxu0 %v3295
    %v3357 = vpop.f32.mrf.mxu0
    %v3358 = vadd.f32 %v3299, %v3357
    %3359 = vmatmul.f32.gmra.mxu0 %v3296
    %v3360 = vpop.f32.mrf.mxu0
    %v3361 = vadd.f32 %v3299, %v3360
    %3362 = vmatmul.f32.gmra.mxu0 %v3297
    %v3363 = vpop.f32.mrf.mxu0
    %v3364 = vadd.f32 %v3299, %v3363
    %3365 = vdwg.mxu0
    %v3366 = vmul.f32 %v3319, %v3319
    %v3367 = vmul.f32 %v3322, %v3322
    %v3368 = vmul.f32 %v3325, %v3325
    %v3369 = vmul.f32 %v3328, %v3328
    %v3370 = vmul.f32 %v3331, %v3331
    %v3371 = vmul.f32 %v3334, %v3334
    %v3372 = vmul.f32 %v3337, %v3337
    %v3373 = vmul.f32 %v3340, %v3340
    %v3374 = vmul.f32 %v3343, %v3343
    %v3375 = vmul.f32 %v3346, %v3346
    %v3376 = vmul.f32 %v3349, %v3349
    %v3377 = vmul.f32 %v3352, %v3352
    %v3378 = vmul.f32 %v3355, %v3355
    %v3379 = vmul.f32 %v3358, %v3358
    %v3380 = vmul.f32 %v3361, %v3361
    %v3381 = vmul.f32 %v3364, %v3364
    %3382 = vadd.xlane.f32.xlu0 %v3366
    %v3383 = vpop.xlane.xlu0 %3382
    %3384 = vadd.xlane.f32.xlu0 %v3367
    %v3385 = vpop.xlane.xlu0 %3384
    %3386 = vadd.xlane.f32.xlu0 %v3368
    %v3387 = vpop.xlane.xlu0 %3386
    %3388 = vadd.xlane.f32.xlu0 %v3369
    %v3389 = vpop.xlane.xlu0 %3388
    %3390 = vadd.xlane.f32.xlu0 %v3370
    %v3391 = vpop.xlane.xlu0 %3390
    %3392 = vadd.xlane.f32.xlu0 %v3371
    %v3393 = vpop.xlane.xlu0 %3392
    %3394 = vadd.xlane.f32.xlu0 %v3372
    %v3395 = vpop.xlane.xlu0 %3394
    %3396 = vadd.xlane.f32.xlu0 %v3373
    %v3397 = vpop.xlane.xlu0 %3396
    %3398 = vadd.xlane.f32.xlu0 %v3374
    %v3399 = vpop.xlane.xlu0 %3398
    %3400 = vadd.xlane.f32.xlu0 %v3375
    %v3401 = vpop.xlane.xlu0 %3400
    %3402 = vadd.xlane.f32.xlu0 %v3376
    %v3403 = vpop.xlane.xlu0 %3402
    %3404 = vadd.xlane.f32.xlu0 %v3377
    %v3405 = vpop.xlane.xlu0 %3404
    %3406 = vadd.xlane.f32.xlu0 %v3378
    %v3407 = vpop.xlane.xlu0 %3406
    %3408 = vadd.xlane.f32.xlu0 %v3379
    %v3409 = vpop.xlane.xlu0 %3408
    %3410 = vadd.xlane.f32.xlu0 %v3380
    %v3411 = vpop.xlane.xlu0 %3410
    %3412 = vadd.xlane.f32.xlu0 %v3381
    %v3413 = vpop.xlane.xlu0 %3412
    %v3414 = vmax.f32 %v3383, 1e-24
    %v3415 = vmax.f32 %v3385, 1e-24
    %v3416 = vmax.f32 %v3387, 1e-24
    %v3417 = vmax.f32 %v3389, 1e-24
    %v3418 = vmax.f32 %v3391, 1e-24
    %v3419 = vmax.f32 %v3393, 1e-24
    %v3420 = vmax.f32 %v3395, 1e-24
    %v3421 = vmax.f32 %v3397, 1e-24
    %v3422 = vmax.f32 %v3399, 1e-24
    %v3423 = vmax.f32 %v3401, 1e-24
    %v3424 = vmax.f32 %v3403, 1e-24
    %v3425 = vmax.f32 %v3405, 1e-24
    %v3426 = vmax.f32 %v3407, 1e-24
    %v3427 = vmax.f32 %v3409, 1e-24
    %v3428 = vmax.f32 %v3411, 1e-24
    %v3429 = vmax.f32 %v3413, 1e-24
    %v3430 = vrsqrt.pop %v3414
    %v3431 = vmul.f32 %v3430, %v3414
    %v3432 = vmul.f32 %v3431, %v3430
    %v3433 = vmul.f32 0.5, %v3432
    %v3434 = vsub.f32 1.5, %v3433
    %v3435 = vmul.f32 %v3430, %v3434
    %vm3436 = vweird.f32 %v3414
    %vm3437 = vweird.f32 %v3430
    %vm3438 = vmor %vm3436, %vm3437
    %v3439 = vsel %vm3438, %v3430, %v3435
    %v3440 = vrsqrt.pop %v3415
    %v3441 = vmul.f32 %v3440, %v3415
    %v3442 = vmul.f32 %v3441, %v3440
    %v3443 = vmul.f32 0.5, %v3442
    %v3444 = vsub.f32 1.5, %v3443
    %v3445 = vmul.f32 %v3440, %v3444
    %vm3446 = vweird.f32 %v3415
    %vm3447 = vweird.f32 %v3440
    %vm3448 = vmor %vm3446, %vm3447
    %v3449 = vsel %vm3448, %v3440, %v3445
    %v3450 = vrsqrt.pop %v3416
    %v3451 = vmul.f32 %v3450, %v3416
    %v3452 = vmul.f32 %v3451, %v3450
    %v3453 = vmul.f32 0.5, %v3452
    %v3454 = vsub.f32 1.5, %v3453
    %v3455 = vmul.f32 %v3450, %v3454
    %vm3456 = vweird.f32 %v3416
    %vm3457 = vweird.f32 %v3450
    %vm3458 = vmor %vm3456, %vm3457
    %v3459 = vsel %vm3458, %v3450, %v3455
    %v3460 = vrsqrt.pop %v3417
    %v3461 = vmul.f32 %v3460, %v3417
    %v3462 = vmul.f32 %v3461, %v3460
    %v3463 = vmul.f32 0.5, %v3462
    %v3464 = vsub.f32 1.5, %v3463
    %v3465 = vmul.f32 %v3460, %v3464
    %vm3466 = vweird.f32 %v3417
    %vm3467 = vweird.f32 %v3460
    %vm3468 = vmor %vm3466, %vm3467
    %v3469 = vsel %vm3468, %v3460, %v3465
    %v3470 = vrsqrt.pop %v3418
    %v3471 = vmul.f32 %v3470, %v3418
    %v3472 = vmul.f32 %v3471, %v3470
    %v3473 = vmul.f32 0.5, %v3472
    %v3474 = vsub.f32 1.5, %v3473
    %v3475 = vmul.f32 %v3470, %v3474
    %vm3476 = vweird.f32 %v3418
    %vm3477 = vweird.f32 %v3470
    %vm3478 = vmor %vm3476, %vm3477
    %v3479 = vsel %vm3478, %v3470, %v3475
    %v3480 = vrsqrt.pop %v3419
    %v3481 = vmul.f32 %v3480, %v3419
    %v3482 = vmul.f32 %v3481, %v3480
    %v3483 = vmul.f32 0.5, %v3482
    %v3484 = vsub.f32 1.5, %v3483
    %v3485 = vmul.f32 %v3480, %v3484
    %vm3486 = vweird.f32 %v3419
    %vm3487 = vweird.f32 %v3480
    %vm3488 = vmor %vm3486, %vm3487
    %v3489 = vsel %vm3488, %v3480, %v3485
    %v3490 = vrsqrt.pop %v3420
    %v3491 = vmul.f32 %v3490, %v3420
    %v3492 = vmul.f32 %v3491, %v3490
    %v3493 = vmul.f32 0.5, %v3492
    %v3494 = vsub.f32 1.5, %v3493
    %v3495 = vmul.f32 %v3490, %v3494
    %vm3496 = vweird.f32 %v3420
    %vm3497 = vweird.f32 %v3490
    %vm3498 = vmor %vm3496, %vm3497
    %v3499 = vsel %vm3498, %v3490, %v3495
    %v3500 = vrsqrt.pop %v3421
    %v3501 = vmul.f32 %v3500, %v3421
    %v3502 = vmul.f32 %v3501, %v3500
    %v3503 = vmul.f32 0.5, %v3502
    %v3504 = vsub.f32 1.5, %v3503
    %v3505 = vmul.f32 %v3500, %v3504
    %vm3506 = vweird.f32 %v3421
    %vm3507 = vweird.f32 %v3500
    %vm3508 = vmor %vm3506, %vm3507
    %v3509 = vsel %vm3508, %v3500, %v3505
    %v3510 = vrsqrt.pop %v3422
    %v3511 = vmul.f32 %v3510, %v3422
    %v3512 = vmul.f32 %v3511, %v3510
    %v3513 = vmul.f32 0.5, %v3512
    %v3514 = vsub.f32 1.5, %v3513
    %v3515 = vmul.f32 %v3510, %v3514
    %vm3516 = vweird.f32 %v3422
    %vm3517 = vweird.f32 %v3510
    %vm3518 = vmor %vm3516, %vm3517
    %v3519 = vsel %vm3518, %v3510, %v3515
    %v3520 = vrsqrt.pop %v3423
    %v3521 = vmul.f32 %v3520, %v3423
    %v3522 = vmul.f32 %v3521, %v3520
    %v3523 = vmul.f32 0.5, %v3522
    %v3524 = vsub.f32 1.5, %v3523
    %v3525 = vmul.f32 %v3520, %v3524
    %vm3526 = vweird.f32 %v3423
    %vm3527 = vweird.f32 %v3520
    %vm3528 = vmor %vm3526, %vm3527
    %v3529 = vsel %vm3528, %v3520, %v3525
    %v3530 = vrsqrt.pop %v3424
    %v3531 = vmul.f32 %v3530, %v3424
    %v3532 = vmul.f32 %v3531, %v3530
    %v3533 = vmul.f32 0.5, %v3532
    %v3534 = vsub.f32 1.5, %v3533
    %v3535 = vmul.f32 %v3530, %v3534
    %vm3536 = vweird.f32 %v3424
    %vm3537 = vweird.f32 %v3530
    %vm3538 = vmor %vm3536, %vm3537
    %v3539 = vsel %vm3538, %v3530, %v3535
    %v3540 = vrsqrt.pop %v3425
    %v3541 = vmul.f32 %v3540, %v3425
    %v3542 = vmul.f32 %v3541, %v3540
    %v3543 = vmul.f32 0.5, %v3542
    %v3544 = vsub.f32 1.5, %v3543
    %v3545 = vmul.f32 %v3540, %v3544
    %vm3546 = vweird.f32 %v3425
    %vm3547 = vweird.f32 %v3540
    %vm3548 = vmor %vm3546, %vm3547
    %v3549 = vsel %vm3548, %v3540, %v3545
    %v3550 = vrsqrt.pop %v3426
    %v3551 = vmul.f32 %v3550, %v3426
    %v3552 = vmul.f32 %v3551, %v3550
    %v3553 = vmul.f32 0.5, %v3552
    %v3554 = vsub.f32 1.5, %v3553
    %v3555 = vmul.f32 %v3550, %v3554
    %vm3556 = vweird.f32 %v3426
    %vm3557 = vweird.f32 %v3550
    %vm3558 = vmor %vm3556, %vm3557
    %v3559 = vsel %vm3558, %v3550, %v3555
    %v3560 = vrsqrt.pop %v3427
    %v3561 = vmul.f32 %v3560, %v3427
    %v3562 = vmul.f32 %v3561, %v3560
    %v3563 = vmul.f32 0.5, %v3562
    %v3564 = vsub.f32 1.5, %v3563
    %v3565 = vmul.f32 %v3560, %v3564
    %vm3566 = vweird.f32 %v3427
    %vm3567 = vweird.f32 %v3560
    %vm3568 = vmor %vm3566, %vm3567
    %v3569 = vsel %vm3568, %v3560, %v3565
    %v3570 = vrsqrt.pop %v3428
    %v3571 = vmul.f32 %v3570, %v3428
    %v3572 = vmul.f32 %v3571, %v3570
    %v3573 = vmul.f32 0.5, %v3572
    %v3574 = vsub.f32 1.5, %v3573
    %v3575 = vmul.f32 %v3570, %v3574
    %vm3576 = vweird.f32 %v3428
    %vm3577 = vweird.f32 %v3570
    %vm3578 = vmor %vm3576, %vm3577
    %v3579 = vsel %vm3578, %v3570, %v3575
    %v3580 = vrsqrt.pop %v3429
    %v3581 = vmul.f32 %v3580, %v3429
    %v3582 = vmul.f32 %v3581, %v3580
    %v3583 = vmul.f32 0.5, %v3582
    %v3584 = vsub.f32 1.5, %v3583
    %v3585 = vmul.f32 %v3580, %v3584
    %vm3586 = vweird.f32 %v3429
    %vm3587 = vweird.f32 %v3580
    %vm3588 = vmor %vm3586, %vm3587
    %v3589 = vsel %vm3588, %v3580, %v3585
    %v3590 = vmul.f32 %v3319, %v3439
    %v3591 = vmul.f32 %v3322, %v3449
    %v3592 = vmul.f32 %v3325, %v3459
    %v3593 = vmul.f32 %v3328, %v3469
    %v3594 = vmul.f32 %v3331, %v3479
    %v3595 = vmul.f32 %v3334, %v3489
    %v3596 = vmul.f32 %v3337, %v3499
    %v3597 = vmul.f32 %v3340, %v3509
    %v3598 = vmul.f32 %v3343, %v3519
    %v3599 = vmul.f32 %v3346, %v3529
    %v3600 = vmul.f32 %v3349, %v3539
    %v3601 = vmul.f32 %v3352, %v3549
    %v3602 = vmul.f32 %v3355, %v3559
    %v3603 = vmul.f32 %v3358, %v3569
    %v3604 = vmul.f32 %v3361, %v3579
    %v3605 = vmul.f32 %v3364, %v3589
    %vm3606 = vcmp.gt.f32.partialorder %v3590, 0.0
    %vm3607 = vcmp.gt.f32.partialorder %v3591, 0.0
    %vm3608 = vcmp.gt.f32.partialorder %v3592, 0.0
    %vm3609 = vcmp.gt.f32.partialorder %v3593, 0.0
    %vm3610 = vcmp.gt.f32.partialorder %v3594, 0.0
    %vm3611 = vcmp.gt.f32.partialorder %v3595, 0.0
    %vm3612 = vcmp.gt.f32.partialorder %v3596, 0.0
    %vm3613 = vcmp.gt.f32.partialorder %v3597, 0.0
    %vm3614 = vcmp.gt.f32.partialorder %v3598, 0.0
    %vm3615 = vcmp.gt.f32.partialorder %v3599, 0.0
    %vm3616 = vcmp.gt.f32.partialorder %v3600, 0.0
    %vm3617 = vcmp.gt.f32.partialorder %v3601, 0.0
    %vm3618 = vcmp.gt.f32.partialorder %v3602, 0.0
    %vm3619 = vcmp.gt.f32.partialorder %v3603, 0.0
    %vm3620 = vcmp.gt.f32.partialorder %v3604, 0.0
    %vm3621 = vcmp.gt.f32.partialorder %v3605, 0.0
    %v3622 = vmul.f32 %v3590, 0.01
    %v3623 = vmul.f32 %v3591, 0.01
    %v3624 = vmul.f32 %v3592, 0.01
    %v3625 = vmul.f32 %v3593, 0.01
    %v3626 = vmul.f32 %v3594, 0.01
    %v3627 = vmul.f32 %v3595, 0.01
    %v3628 = vmul.f32 %v3596, 0.01
    %v3629 = vmul.f32 %v3597, 0.01
    %v3630 = vmul.f32 %v3598, 0.01
    %v3631 = vmul.f32 %v3599, 0.01
    %v3632 = vmul.f32 %v3600, 0.01
    %v3633 = vmul.f32 %v3601, 0.01
    %v3634 = vmul.f32 %v3602, 0.01
    %v3635 = vmul.f32 %v3603, 0.01
    %v3636 = vmul.f32 %v3604, 0.01
    %v3637 = vmul.f32 %v3605, 0.01
    %v3638 = vsel %vm3606, %v3590, %v3622
    %v3639 = vsel %vm3607, %v3591, %v3623
    %v3640 = vsel %vm3608, %v3592, %v3624
    %v3641 = vsel %vm3609, %v3593, %v3625
    %v3642 = vsel %vm3610, %v3594, %v3626
    %v3643 = vsel %vm3611, %v3595, %v3627
    %v3644 = vsel %vm3612, %v3596, %v3628
    %v3645 = vsel %vm3613, %v3597, %v3629
    %v3646 = vsel %vm3614, %v3598, %v3630
    %v3647 = vsel %vm3615, %v3599, %v3631
    %v3648 = vsel %vm3616, %v3600, %v3632
    %v3649 = vsel %vm3617, %v3601, %v3633
    %v3650 = vsel %vm3618, %v3602, %v3634
    %v3651 = vsel %vm3619, %v3603, %v3635
    %v3652 = vsel %vm3620, %v3604, %v3636
    %v3653 = vsel %vm3621, %v3605, %v3637
    %v3655 = vperm.slane %v2301, 0
    %v3657 = vadd.f32 %v2402, %v3655
    %v3658 = vadd.f32 %v2405, %v3655
    %v3659 = vadd.f32 %v2408, %v3655
    %v3660 = vadd.f32 %v2411, %v3655
    %v3661 = vadd.f32 %v2414, %v3655
    %v3662 = vadd.f32 %v2417, %v3655
    %v3663 = vadd.f32 %v2420, %v3655
    %v3664 = vadd.f32 %v2423, %v3655
    %v3665 = vadd.f32 %v2426, %v3655
    %v3666 = vadd.f32 %v2429, %v3655
    %v3667 = vadd.f32 %v2432, %v3655
    %v3668 = vadd.f32 %v2435, %v3655
    %v3669 = vadd.f32 %v2438, %v3655
    %v3670 = vadd.f32 %v2441, %v3655
    %v3671 = vadd.f32 %v2444, %v3655
    %v3672 = vadd.f32 %v2447, %v3655
    %vm3673 = vcmp.gt.f32.partialorder %v3657, 0.0
    %vm3674 = vcmp.gt.f32.partialorder %v3658, 0.0
    %vm3675 = vcmp.gt.f32.partialorder %v3659, 0.0
    %vm3676 = vcmp.gt.f32.partialorder %v3660, 0.0
    %vm3677 = vcmp.gt.f32.partialorder %v3661, 0.0
    %vm3678 = vcmp.gt.f32.partialorder %v3662, 0.0
    %vm3679 = vcmp.gt.f32.partialorder %v3663, 0.0
    %vm3680 = vcmp.gt.f32.partialorder %v3664, 0.0
    %vm3681 = vcmp.gt.f32.partialorder %v3665, 0.0
    %vm3682 = vcmp.gt.f32.partialorder %v3666, 0.0
    %vm3683 = vcmp.gt.f32.partialorder %v3667, 0.0
    %vm3684 = vcmp.gt.f32.partialorder %v3668, 0.0
    %vm3685 = vcmp.gt.f32.partialorder %v3669, 0.0
    %vm3686 = vcmp.gt.f32.partialorder %v3670, 0.0
    %vm3687 = vcmp.gt.f32.partialorder %v3671, 0.0
    %vm3688 = vcmp.gt.f32.partialorder %v3672, 0.0
    %v3689 = vmul.f32 %v3657, 0.01
    %v3690 = vmul.f32 %v3658, 0.01
    %v3691 = vmul.f32 %v3659, 0.01
    %v3692 = vmul.f32 %v3660, 0.01
    %v3693 = vmul.f32 %v3661, 0.01
    %v3694 = vmul.f32 %v3662, 0.01
    %v3695 = vmul.f32 %v3663, 0.01
    %v3696 = vmul.f32 %v3664, 0.01
    %v3697 = vmul.f32 %v3665, 0.01
    %v3698 = vmul.f32 %v3666, 0.01
    %v3699 = vmul.f32 %v3667, 0.01
    %v3700 = vmul.f32 %v3668, 0.01
    %v3701 = vmul.f32 %v3669, 0.01
    %v3702 = vmul.f32 %v3670, 0.01
    %v3703 = vmul.f32 %v3671, 0.01
    %v3704 = vmul.f32 %v3672, 0.01
    %v3705 = vsel %vm3673, %v3657, %v3689
    %v3706 = vsel %vm3674, %v3658, %v3690
    %v3707 = vsel %vm3675, %v3659, %v3691
    %v3708 = vsel %vm3676, %v3660, %v3692
    %v3709 = vsel %vm3677, %v3661, %v3693
    %v3710 = vsel %vm3678, %v3662, %v3694
    %v3711 = vsel %vm3679, %v3663, %v3695
    %v3712 = vsel %vm3680, %v3664, %v3696
    %v3713 = vsel %vm3681, %v3665, %v3697
    %v3714 = vsel %vm3682, %v3666, %v3698
    %v3715 = vsel %vm3683, %v3667, %v3699
    %v3716 = vsel %vm3684, %v3668, %v3700
    %v3717 = vsel %vm3685, %v3669, %v3701
    %v3718 = vsel %vm3686, %v3670, %v3702
    %v3719 = vsel %vm3687, %v3671, %v3703
    %v3720 = vsel %vm3688, %v3672, %v3704
    %v3721 = vadd.f32 %v3705, %v275
    %v3722 = vadd.f32 %v3706, %v276
    %v3723 = vadd.f32 %v3707, %v277
    %v3724 = vadd.f32 %v3708, %v278
    %v3725 = vadd.f32 %v3709, %v279
    %v3726 = vadd.f32 %v3710, %v280
    %v3727 = vadd.f32 %v3711, %v281
    %v3728 = vadd.f32 %v3712, %v282
    %v3729 = vadd.f32 %v3713, %v283
    %v3730 = vadd.f32 %v3714, %v284
    %v3731 = vadd.f32 %v3715, %v285
    %v3732 = vadd.f32 %v3716, %v286
    %v3733 = vadd.f32 %v3717, %v287
    %v3734 = vadd.f32 %v3718, %v288
    %v3735 = vadd.f32 %v3719, %v289
    %v3736 = vadd.f32 %v3720, %v290
    %v3738 = vperm.slane %v2318, 0
    %3740 = vmatpush.msra.mxu0 %v2317
    %3741 = vmatpush.msra.mxu0 %v2316
    %3742 = vmatpush.msra.mxu0 %v2315
    %3743 = vmatpush.msra.mxu0 %v2314
    %3744 = vmatpush.msra.mxu0 %v2313
    %3745 = vmatpush.msra.mxu0 %v2312
    %3746 = vmatpush.msra.mxu0 %v2311
    %3747 = vmatpush.msra.mxu0 %v2310
    %3748 = vmatpush.msra.mxu0 %v2309
    %3749 = vmatpush.msra.mxu0 %v2308
    %3750 = vmatpush.msra.mxu0 %v2307
    %3751 = vmatpush.msra.mxu0 %v2306
    %3752 = vmatpush.msra.mxu0 %v2305
    %3753 = vmatpush.msra.mxu0 %v2304
    %3754 = vmatpush.msra.mxu0 %v2303
    %3755 = vmatpush.msra.mxu0 %v2302
    %3756 = vmatmul.f32.gmra.mxu0 %v3638
    %v3757 = vpop.f32.mrf.mxu0
    %v3758 = vadd.f32 %v3738, %v3757
    %3759 = vmatmul.f32.gmra.mxu0 %v3639
    %v3760 = vpop.f32.mrf.mxu0
    %v3761 = vadd.f32 %v3738, %v3760
    %3762 = vmatmul.f32.gmra.mxu0 %v3640
    %v3763 = vpop.f32.mrf.mxu0
    %v3764 = vadd.f32 %v3738, %v3763
    %3765 = vmatmul.f32.gmra.mxu0 %v3641
    %v3766 = vpop.f32.mrf.mxu0
    %v3767 = vadd.f32 %v3738, %v3766
    %3768 = vmatmul.f32.gmra.mxu0 %v3642
    %v3769 = vpop.f32.mrf.mxu0
    %v3770 = vadd.f32 %v3738, %v3769
    %3771 = vmatmul.f32.gmra.mxu0 %v3643
    %v3772 = vpop.f32.mrf.mxu0
    %v3773 = vadd.f32 %v3738, %v3772
    %3774 = vmatmul.f32.gmra.mxu0 %v3644
    %v3775 = vpop.f32.mrf.mxu0
    %v3776 = vadd.f32 %v3738, %v3775
    %3777 = vmatmul.f32.gmra.mxu0 %v3645
    %v3778 = vpop.f32.mrf.mxu0
    %v3779 = vadd.f32 %v3738, %v3778
    %3780 = vmatmul.f32.gmra.mxu0 %v3646
    %v3781 = vpop.f32.mrf.mxu0
    %v3782 = vadd.f32 %v3738, %v3781
    %3783 = vmatmul.f32.gmra.mxu0 %v3647
    %v3784 = vpop.f32.mrf.mxu0
    %v3785 = vadd.f32 %v3738, %v3784
    %3786 = vmatmul.f32.gmra.mxu0 %v3648
    %v3787 = vpop.f32.mrf.mxu0
    %v3788 = vadd.f32 %v3738, %v3787
    %3789 = vmatmul.f32.gmra.mxu0 %v3649
    %v3790 = vpop.f32.mrf.mxu0
    %v3791 = vadd.f32 %v3738, %v3790
    %3792 = vmatmul.f32.gmra.mxu0 %v3650
    %v3793 = vpop.f32.mrf.mxu0
    %v3794 = vadd.f32 %v3738, %v3793
    %3795 = vmatmul.f32.gmra.mxu0 %v3651
    %v3796 = vpop.f32.mrf.mxu0
    %v3797 = vadd.f32 %v3738, %v3796
    %3798 = vmatmul.f32.gmra.mxu0 %v3652
    %v3799 = vpop.f32.mrf.mxu0
    %v3800 = vadd.f32 %v3738, %v3799
    %3801 = vmatmul.f32.gmra.mxu0 %v3653
    %v3802 = vpop.f32.mrf.mxu0
    %v3803 = vadd.f32 %v3738, %v3802
    %3804 = vdwg.mxu0
    %v3805 = vadd.f32 %v3758, %v3721
    %v3806 = vadd.f32 %v3761, %v3722
    %v3807 = vadd.f32 %v3764, %v3723
    %v3808 = vadd.f32 %v3767, %v3724
    %v3809 = vadd.f32 %v3770, %v3725
    %v3810 = vadd.f32 %v3773, %v3726
    %v3811 = vadd.f32 %v3776, %v3727
    %v3812 = vadd.f32 %v3779, %v3728
    %v3813 = vadd.f32 %v3782, %v3729
    %v3814 = vadd.f32 %v3785, %v3730
    %v3815 = vadd.f32 %v3788, %v3731
    %v3816 = vadd.f32 %v3791, %v3732
    %v3817 = vadd.f32 %v3794, %v3733
    %v3818 = vadd.f32 %v3797, %v3734
    %v3819 = vadd.f32 %v3800, %v3735
    %v3820 = vadd.f32 %v3803, %v3736
    %vm3821 = vcmp.gt.f32.partialorder %v3805, 0.0
    %vm3822 = vcmp.gt.f32.partialorder %v3806, 0.0
    %vm3823 = vcmp.gt.f32.partialorder %v3807, 0.0
    %vm3824 = vcmp.gt.f32.partialorder %v3808, 0.0
    %vm3825 = vcmp.gt.f32.partialorder %v3809, 0.0
    %vm3826 = vcmp.gt.f32.partialorder %v3810, 0.0
    %vm3827 = vcmp.gt.f32.partialorder %v3811, 0.0
    %vm3828 = vcmp.gt.f32.partialorder %v3812, 0.0
    %vm3829 = vcmp.gt.f32.partialorder %v3813, 0.0
    %vm3830 = vcmp.gt.f32.partialorder %v3814, 0.0
    %vm3831 = vcmp.gt.f32.partialorder %v3815, 0.0
    %vm3832 = vcmp.gt.f32.partialorder %v3816, 0.0
    %vm3833 = vcmp.gt.f32.partialorder %v3817, 0.0
    %vm3834 = vcmp.gt.f32.partialorder %v3818, 0.0
    %vm3835 = vcmp.gt.f32.partialorder %v3819, 0.0
    %vm3836 = vcmp.gt.f32.partialorder %v3820, 0.0
    %v3837 = vmul.f32 %v3805, 0.01
    %v3838 = vmul.f32 %v3806, 0.01
    %v3839 = vmul.f32 %v3807, 0.01
    %v3840 = vmul.f32 %v3808, 0.01
    %v3841 = vmul.f32 %v3809, 0.01
    %v3842 = vmul.f32 %v3810, 0.01
    %v3843 = vmul.f32 %v3811, 0.01
    %v3844 = vmul.f32 %v3812, 0.01
    %v3845 = vmul.f32 %v3813, 0.01
    %v3846 = vmul.f32 %v3814, 0.01
    %v3847 = vmul.f32 %v3815, 0.01
    %v3848 = vmul.f32 %v3816, 0.01
    %v3849 = vmul.f32 %v3817, 0.01
    %v3850 = vmul.f32 %v3818, 0.01
    %v3851 = vmul.f32 %v3819, 0.01
    %v3852 = vmul.f32 %v3820, 0.01
    %v3853 = vsel %vm3821, %v3805, %v3837
    %v3854 = vsel %vm3822, %v3806, %v3838
    %v3855 = vsel %vm3823, %v3807, %v3839
    %v3856 = vsel %vm3824, %v3808, %v3840
    %v3857 = vsel %vm3825, %v3809, %v3841
    %v3858 = vsel %vm3826, %v3810, %v3842
    %v3859 = vsel %vm3827, %v3811, %v3843
    %v3860 = vsel %vm3828, %v3812, %v3844
    %v3861 = vsel %vm3829, %v3813, %v3845
    %v3862 = vsel %vm3830, %v3814, %v3846
    %v3863 = vsel %vm3831, %v3815, %v3847
    %v3864 = vsel %vm3832, %v3816, %v3848
    %v3865 = vsel %vm3833, %v3817, %v3849
    %v3866 = vsel %vm3834, %v3818, %v3850
    %v3867 = vsel %vm3835, %v3819, %v3851
    %v3868 = vsel %vm3836, %v3820, %v3852
    %3869 = vst [vmem:[#allocation21] sm:$0xff] %v3853
    %3870 = vst [vmem:[#allocation21 + $0x8] sm:$0xff] %v3854
    %3871 = vst [vmem:[#allocation21 + $0x10] sm:$0xff] %v3855
    %3872 = vst [vmem:[#allocation21 + $0x18] sm:$0xff] %v3856
    %3873 = vst [vmem:[#allocation21 + $0x20] sm:$0xff] %v3857
    %3874 = vst [vmem:[#allocation21 + $0x28] sm:$0xff] %v3858
    %3875 = vst [vmem:[#allocation21 + $0x30] sm:$0xff] %v3859
    %3876 = vst [vmem:[#allocation21 + $0x38] sm:$0xff] %v3860
    %3877 = vst [vmem:[#allocation21 + $0x40] sm:$0xff] %v3861
    %3878 = vst [vmem:[#allocation21 + $0x48] sm:$0xff] %v3862
    %3879 = vst [vmem:[#allocation21 + $0x50] sm:$0xff] %v3863
    %3880 = vst [vmem:[#allocation21 + $0x58] sm:$0xff] %v3864
    %3881 = vst [vmem:[#allocation21 + $0x60] sm:$0xff] %v3865
    %3882 = vst [vmem:[#allocation21 + $0x68] sm:$0xff] %v3866
    %3883 = vst [vmem:[#allocation21 + $0x70] sm:$0xff] %v3867
    %3884 = vst [vmem:[#allocation21 + $0x78] sm:$0xff] %v3868
    // Predicated region
    $region110: #{gnn_forward.1} parent=1 // pred_check
      _
    $region111: #{gnn_forward.1} parent=1 // pred_check_branch
      %3886 = sbr.rel (0) target = $region113
    $region112: #{gnn_forward.1} parent=1 // pred_region
      %3888 = vsyncadd [#allocation4], 0
      %s3889 = sshll.u32 [#allocation20], 4
      %s3890 = int_to_ptr.vmem [resolvable:$true] %s3889
      %s3891 = sshll.u32 %s16, 4
      %s3892 = int_to_ptr.hbm [resolvable:$true] %s3891
      %3897 = dma.vmem_to_hbm [thread:$0]  %s3890, 2048, %s3892, [#allocation4], 128, 128, 8
    $region113: #{gnn_forward.1} parent=1 // pred_fallthru
      _
    // Predicated region
    $region114: #{gnn_forward.1} parent=1 // pred_check
      _
    $region115: #{gnn_forward.1} parent=1 // pred_check_branch
      %3899 = sbr.rel (0) target = $region117
    $region116: #{gnn_forward.1} parent=1 // pred_region
      %3901 = vsyncadd [#allocation22], 0
      %s3902 = sshll.u32 [#allocation21], 4
      %s3903 = int_to_ptr.vmem [resolvable:$true] %s3902
      %s3904 = sshll.u32 %s17, 4
      %s3905 = int_to_ptr.hbm [resolvable:$true] %s3904
      %3910 = dma.vmem_to_hbm [thread:$0]  %s3903, 2048, %s3905, [#allocation22], 128, 128, 8
    $region117: #{gnn_forward.1} parent=1 // pred_fallthru
      _
    // Predicated region
    $region118: #{gnn_forward.1} parent=1 // pred_check
      _
    $region119: #{gnn_forward.1} parent=1 // pred_check_branch
      %3912 = sbr.rel (0) target = $region121
    $region120: #{gnn_forward.1} parent=1 // pred_region
      %3914 = dma.done [#allocation4], 2048
    $region121: #{gnn_forward.1} parent=1 // pred_fallthru
      _
    // Predicated region
    $region122: #{gnn_forward.1} parent=1 // pred_check
      _
    $region123: #{gnn_forward.1} parent=1 // pred_check_branch
      %3916 = sbr.rel (0) target = $region125
    $region124: #{gnn_forward.1} parent=1 // pred_region
      %3918 = dma.done [#allocation22], 2048
    $region125: #{gnn_forward.1} parent=1 // pred_fallthru
      _
    %3919 = vsyncpa [#allocation3], 1
    %3920 = vsyncpa [#allocation6], 1
    %3921 = vsyncpa [#allocation9], 1
    %3922 = vsyncpa [#allocation12], 1
    %3923 = vsyncpa [#allocation15], 1
    %3924 = vsyncpa [#allocation18], 1
    %3925 = vsyncpa [#allocation4], 1
    %3926 = vsyncpa [#allocation22], 1

</llo_original>
